<compile_context>
chip_gen: v6e
topology: v6e:2x2x1
jax: 0.10.0
libtpu: 0.0.40
codegen_flags: <defaults>
</compile_context>

<pallas_src>
import numpy as np
import jax
import jax.numpy as jnp
from jax import lax
from jax.experimental import pallas as pl
from jax.experimental.pallas import tpu as pltpu

NB = 32            # samples per grid step (tunable per generation; 64 ok on v6e)
C1 = 20            # conv1 output channels
C2 = 50            # conv2 output channels
C2P = 64           # conv2 channels padded to a lane block
L1H = 256          # conv1 pool half-width: 12*20 = 240 used, padded to 256
L2H = 4 * C2P      # 256 : conv2 pool half-width (P_w * 64 + c2)
F1P = 512          # fc1 width padded (500 -> 512)
NOUTP = 128        # fc2 width padded (10 -> 128), lane-dense output


# ------------------------------- Pallas kernel -------------------------------

def _mnistnet2_fused_kernel(xh_ref, a1_ref, b1_ref, a2_ref, b2_ref,
                            wf1_ref, bf1_ref, wf2_ref, bf2_ref, o_ref):
    """Whole MNISTnet2 forward for one block of `nb` samples, entirely in VMEM.

    xh_ref : (2, 2, 6, nb, 140) bf16  image rows regrouped so that
             xh[s, qh, j, n, kh*28 + w] = x[n, 4*j + 2*s + qh + kh, w]
    a1_ref : (140, 512) bf16   conv1 banded weight, cols = qw*256 + pw*20 + c1
    b1_ref : (1, 256)  f32     conv1 bias tiled over pw
    a2_ref : (5, 256, 512) bf16 conv2 banded weight per kh2,
             rows = pw*20 + c1, cols = b*256 + P_w*64 + c2
    b2_ref : (1, 256)  f32     conv2 bias tiled over P_w
    wf1_ref: (1024, 512) bf16  fc1 weight, rows = P_h*256 + P_w*64 + c2
    bf1_ref: (1, 512)  f32
    wf2_ref: (512, 128) bf16   fc2 weight (padded)
    bf2_ref: (1, 128)  f32
    o_ref  : (nb, 128) f32
    """
    nb = o_ref.shape[0]
    kd = xh_ref.shape[-1]

    # ---- conv1 (one MXU dot per (s, qh)) + 2x2 max-pool + bias + ReLU -------
    # y1[s] rows = (j, n) with ph = 2*j + s ; lanes = pw*20 + c1 (240 used).
    y1 = []
    for s in range(2):
        pre = None
        for qh in range(2):
            lhs = xh_ref[s, qh, :, :, :].reshape(6 * nb, kd)
            z = jnp.dot(lhs, a1_ref[...], preferred_element_type=jnp.float32)
            pre = z if pre is None else jnp.maximum(pre, z)      # pool rows (qh)
        half = jnp.maximum(pre[:, :L1H], pre[:, L1H:])           # pool cols (qw)
        y1.append(jnp.maximum(half + b1_ref[...], 0.0).astype(jnp.bfloat16))

    # ---- conv2 (5 banded dots per pool-row parity a) + pool + bias + ReLU ---
    y2p = []
    for a in range(2):
        acc = jnp.zeros((4 * nb, 2 * L2H), jnp.float32)
        for kh2 in range(5):
            t = a + kh2                       # ph = 2*P_h + a + kh2
            lhs = y1[t % 2][(t // 2) * nb:(t // 2 + 4) * nb, :]  # rows (P_h, n)
            acc = acc + jnp.dot(lhs, a2_ref[kh2],
                                preferred_element_type=jnp.float32)
        y2p.append(acc)
    y2 = jnp.maximum(y2p[0], y2p[1])                             # pool rows (a)
    y2 = jnp.maximum(y2[:, :L2H], y2[:, L2H:])                   # pool cols (b)
    y2 = jnp.maximum(y2 + b2_ref[...], 0.0).astype(jnp.bfloat16)  # rows (P_h, n)

    # ---- flatten (rows (P_h, n) -> lanes) + fc1 (single K=1024 dot) + fc2 ---
    hin = jnp.concatenate([y2[p * nb:(p + 1) * nb, :] for p in range(4)], axis=1)
    h = jnp.dot(hin, wf1_ref[...], preferred_element_type=jnp.float32) + bf1_ref[...]
    h = jnp.maximum(h, 0.0).astype(jnp.bfloat16)
    out = jnp.dot(h, wf2_ref[...], preferred_element_type=jnp.float32) + bf2_ref[...]
    o_ref[...] = out.astype(o_ref.dtype)


# --------------------------- host-side weight prep ---------------------------

def _round_up(x, m):
    return (x + m - 1) // m * m


def _prep_params(params):
    """Build the banded / permuted / padded weight matrices the kernel uses."""
    (w1, b1, w2, b2, wf1, bf1, wf2, bf2) = params

    # conv1 banded weight: a1[kh*28 + w_in, qw*256 + pw*20 + c1]
    #   = w1[c1, 0, kh, w_in - (2*pw + qw)]   (zero outside the 5-tap band)
    w1r = jnp.transpose(w1[:, 0], (1, 2, 0))                    # (kh, kw, c1)
    w_in = np.arange(28)[:, None, None]
    qw = np.arange(2)[None, :, None]
    pw = np.arange(12)[None, None, :]
    kw = w_in - (2 * pw + qw)                                   # (28, 2, 12)
    valid = (kw >= 0) & (kw < 5)
    a1 = w1r[:, np.clip(kw, 0, 4), :]                           # (5, 28, 2, 12, C1)
    a1 = a1 * jnp.asarray(valid, a1.dtype)[None, :, :, :, None]
    a1 = a1.reshape(5, 28, 2, 12 * C1)
    a1 = jnp.pad(a1, ((0, 0), (0, 0), (0, 0), (0, L1H - 12 * C1)))
    a1 = a1.reshape(5 * 28, 2 * L1H).astype(jnp.bfloat16)       # (140, 512)
    b1p = jnp.pad(jnp.tile(b1, 12), (0, L1H - 12 * C1))[None, :].astype(jnp.float32)

    # conv2 banded weight: a2[kh2, pw*20 + c1, b*256 + P_w*64 + c2]
    #   = w2[c2, c1, kh2, pw - (2*P_w + b)]
    w2r = jnp.transpose(w2, (2, 3, 1, 0))                       # (kh, kw, c1, c2)
    pw2 = np.arange(12)[:, None, None]
    bq = np.arange(2)[None, :, None]
    Pw = np.arange(4)[None, None, :]
    kw2 = pw2 - (2 * Pw + bq)                                   # (12, 2, 4)
    valid2 = (kw2 >= 0) & (kw2 < 5)
    a2 = w2r[:, np.clip(kw2, 0, 4), :, :]                       # (5, 12, 2, 4, C1, C2)
    a2 = a2 * jnp.asarray(valid2, a2.dtype)[None, :, :, :, None, None]
    a2 = jnp.transpose(a2, (0, 1, 4, 2, 3, 5))                  # (5, pw, c1, b, P_w, c2)
    a2 = jnp.pad(a2, ((0, 0), (0, 0), (0, 0), (0, 0), (0, 0), (0, C2P - C2)))
    a2 = a2.reshape(5, 12 * C1, 2 * L2H)
    a2 = jnp.pad(a2, ((0, 0), (0, L1H - 12 * C1), (0, 0))).astype(jnp.bfloat16)
    b2p = jnp.tile(jnp.pad(b2, (0, C2P - C2)), 4)[None, :].astype(jnp.float32)

    # fc1: torch NCHW flatten index (c2*16 + P_h*4 + P_w) permuted to the kernel
    # lane order P_h*256 + P_w*64 + c2, padded to (1024, 512).
    wf1r = wf1.reshape(C2, 16, 500).transpose(1, 0, 2)          # (p, c2, f)
    wf1r = jnp.pad(wf1r, ((0, 0), (0, C2P - C2), (0, F1P - 500)))
    wf1p = wf1r.reshape(16 * C2P, F1P).astype(jnp.bfloat16)     # (1024, 512)
    bf1p = jnp.pad(bf1, (0, F1P - 500))[None, :].astype(jnp.float32)

    wf2p = jnp.pad(wf2, ((0, F1P - 500), (0, NOUTP - 10))).astype(jnp.bfloat16)
    bf2p = jnp.pad(bf2, (0, NOUTP - 10))[None, :].astype(jnp.float32)
    return a1, b1p, a2, b2p, wf1p, bf1p, wf2p, bf2p


# ------------------------------ forward wrapper ------------------------------

def mnistnet2_forward(x_nchw, params, block_b=NB):
    n = x_nchw.shape[0]
    # Sample-block size: tunable, but capped so small batches are not over-padded
    # and (when possible) the grid has >= 2 steps (both v7x TensorCores used).
    nb = min(block_b, _round_up(max((n + 1) // 2, 1), 8))
    n_pad = _round_up(n, nb)
    x = x_nchw[:, 0, :, :]                                      # (N, 28, 28)
    if n_pad != n:
        x = jnp.pad(x, ((0, n_pad - n), (0, 0), (0, 0)))

    # Row regrouping (tiny, ~4x the raw image) so every in-kernel slice is a
    # contiguous 8-aligned window: xh[s,qh,j,n,kh*28+w] = x[n, 4j+2s+qh+kh, w].
    s_ = np.arange(2)[:, None, None, None]
    qh_ = np.arange(2)[None, :, None, None]
    j_ = np.arange(6)[None, None, :, None]
    kh_ = np.arange(5)[None, None, None, :]
    ridx = 4 * j_ + 2 * s_ + qh_ + kh_                          # (2, 2, 6, 5) in 0..27
    xh = x[:, ridx, :]                                          # (n_pad, 2, 2, 6, 5, 28)
    xh = jnp.transpose(xh, (1, 2, 3, 0, 4, 5)).reshape(2, 2, 6, n_pad, 140)
    xh = xh.astype(jnp.bfloat16)

    a1, b1p, a2, b2p, wf1p, bf1p, wf2p, bf2p = _prep_params(params)

    out = pl.pallas_call(
        _mnistnet2_fused_kernel,
        out_shape=jax.ShapeDtypeStruct((n_pad, NOUTP), jnp.float32),
        grid=(n_pad // nb,),
        in_specs=[
            pl.BlockSpec((2, 2, 6, nb, 140), lambda i: (0, 0, 0, i, 0)),
            pl.BlockSpec(a1.shape, lambda i: (0, 0)),
            pl.BlockSpec(b1p.shape, lambda i: (0, 0)),
            pl.BlockSpec(a2.shape, lambda i: (0, 0, 0)),
            pl.BlockSpec(b2p.shape, lambda i: (0, 0)),
            pl.BlockSpec(wf1p.shape, lambda i: (0, 0)),
            pl.BlockSpec(bf1p.shape, lambda i: (0, 0)),
            pl.BlockSpec(wf2p.shape, lambda i: (0, 0)),
            pl.BlockSpec(bf2p.shape, lambda i: (0, 0)),
        ],
        out_specs=pl.BlockSpec((nb, NOUTP), lambda i: (i, 0)),
        compiler_params=pltpu.CompilerParams(
            dimension_semantics=("parallel",),
            # ~9 MB actually used at NB=32; headroom for NB=64 (v6e) while
            # still below v7x's 64 MiB physical VMEM.
            vmem_limit_bytes=48 * 1024 * 1024),
    )(xh, a1, b1p, a2, b2p, wf1p, bf1p, wf2p, bf2p)
    return out[:n, :10]


# ------------------------------ pure-JAX reference ---------------------------

def reference_forward(x_nchw, params):
    (w1, b1, w2, b2, wf1, bf1, wf2, bf2) = params
    dn = ("NCHW", "OIHW", "NCHW")
    hp = lax.Precision.HIGHEST
    y = lax.conv_general_dilated(x_nchw, w1, (1, 1), "VALID", dimension_numbers=dn, precision=hp)
    y = jnp.maximum(y + b1.reshape(1, -1, 1, 1), 0.0)
    y = lax.reduce_window(y, -jnp.inf, lax.max, (1, 1, 2, 2), (1, 1, 2, 2), "VALID")
    y = lax.conv_general_dilated(y, w2, (1, 1), "VALID", dimension_numbers=dn, precision=hp)
    y = jnp.maximum(y + b2.reshape(1, -1, 1, 1), 0.0)
    y = lax.reduce_window(y, -jnp.inf, lax.max, (1, 1, 2, 2), (1, 1, 2, 2), "VALID")
    y = y.reshape(y.shape[0], -1)
    y = jnp.maximum(jnp.dot(y, wf1, precision=hp) + bf1, 0.0)
    return jnp.dot(y, wf2, precision=hp) + bf2


# ---------------------------------- main --------------------------------------

if __name__ == "__main__":
    key = jax.random.PRNGKey(0)
    ks = jax.random.split(key, 9)

    # MNIST-shaped input (28x28 is required by the 4*4*50 flatten), small batch.
    x = jax.random.normal(ks[0], (2, 1, 28, 28), dtype=jnp.float32)

    def init(k, shape, fan_in):
        return jax.random.normal(k, shape, dtype=jnp.float32) / jnp.sqrt(float(fan_in))

    # PyTorch parameter shapes: Conv2d weight (Cout, Cin, KH, KW); Linear as (in, out).
    w1 = init(ks[1], (20, 1, 5, 5), 25)
    b1 = init(ks[2], (20,), 25)
    w2 = init(ks[3], (50, 20, 5, 5), 500)
    b2 = init(ks[4], (50,), 500)
    wf1 = init(ks[5], (800, 500), 800)
    bf1 = init(ks[6], (500,), 800)
    wf2 = init(ks[7], (500, 10), 500)
    bf2 = init(ks[8], (10,), 500)
    params = (w1, b1, w2, b2, wf1, bf1, wf2, bf2)

    fwd = jax.jit(mnistnet2_forward)
    out = jax.block_until_ready(fwd(x, params))
    ref = jax.block_until_ready(reference_forward(x, params))
    assert out.shape == (2, 10)
    # bf16 matmul operands (f32 accumulation) -> slightly looser tolerance than f32.
    assert bool(jnp.allclose(out, ref, atol=2e-2, rtol=2e-2)), (
        f"max abs diff {float(jnp.max(jnp.abs(out - ref)))}")
    print("KERNEL_OK")
</pallas_src>

<mosaic_0001>
module attributes {stable_mosaic.version = 11 : i64} {
  func.func @_mnistnet2_fused_kernel(%arg0: i32, %arg1: memref<2x2x6x8x140xbf16, #tpu.memory_space<vmem>>, %arg2: memref<140x512xbf16, #tpu.memory_space<vmem>>, %arg3: memref<1x256xf32, #tpu.memory_space<vmem>>, %arg4: memref<5x256x512xbf16, #tpu.memory_space<vmem>>, %arg5: memref<1x256xf32, #tpu.memory_space<vmem>>, %arg6: memref<1024x512xbf16, #tpu.memory_space<vmem>>, %arg7: memref<1x512xf32, #tpu.memory_space<vmem>>, %arg8: memref<512x128xbf16, #tpu.memory_space<vmem>>, %arg9: memref<1x128xf32, #tpu.memory_space<vmem>>, %arg10: memref<8x128xf32, #tpu.memory_space<vmem>>) attributes {dimension_semantics = [#tpu.dimension_semantics<parallel>], iteration_bounds = array<i64: 1>, scalar_prefetch = 0 : i64, scratch_operands = 0 : i64, tpu.core_type = #tpu.core_type<tc>, window_params = [{transform_indices = @transform_0, window_bounds = array<i64: 2, 2, 6, 8, 140>}, {pipeline_mode = #tpu.pipeline_mode<synchronous>, transform_indices = @transform_1, window_bounds = array<i64: 140, 512>}, {pipeline_mode = #tpu.pipeline_mode<synchronous>, transform_indices = @transform_2, window_bounds = array<i64: 1, 256>}, {pipeline_mode = #tpu.pipeline_mode<synchronous>, transform_indices = @transform_3, window_bounds = array<i64: 5, 256, 512>}, {pipeline_mode = #tpu.pipeline_mode<synchronous>, transform_indices = @transform_4, window_bounds = array<i64: 1, 256>}, {pipeline_mode = #tpu.pipeline_mode<synchronous>, transform_indices = @transform_5, window_bounds = array<i64: 1024, 512>}, {pipeline_mode = #tpu.pipeline_mode<synchronous>, transform_indices = @transform_6, window_bounds = array<i64: 1, 512>}, {pipeline_mode = #tpu.pipeline_mode<synchronous>, transform_indices = @transform_7, window_bounds = array<i64: 512, 128>}, {pipeline_mode = #tpu.pipeline_mode<synchronous>, transform_indices = @transform_8, window_bounds = array<i64: 1, 128>}, {transform_indices = @transform_9, window_bounds = array<i64: 8, 128>}]} {
    %c0 = arith.constant 0 : index
    %c0_0 = arith.constant 0 : index
    %c0_1 = arith.constant 0 : index
    %c0_2 = arith.constant 0 : index
    %c0_3 = arith.constant 0 : index
    %0 = vector.load %arg1[%c0, %c0_0, %c0_1, %c0_2, %c0_3] : memref<2x2x6x8x140xbf16, #tpu.memory_space<vmem>>, vector<1x1x6x8x140xbf16>
    %1 = vector.shape_cast %0 : vector<1x1x6x8x140xbf16> to vector<6x8x140xbf16>
    %2 = vector.shape_cast %1 : vector<6x8x140xbf16> to vector<48x140xbf16>
    %c0_4 = arith.constant 0 : index
    %c0_5 = arith.constant 0 : index
    %3 = vector.load %arg2[%c0_4, %c0_5] : memref<140x512xbf16, #tpu.memory_space<vmem>>, vector<140x512xbf16>
    %cst = arith.constant dense<0.000000e+00> : vector<48x512xf32>
    %4 = tpu.matmul %2, %3, %cst {dimension_numbers = #tpu.dot_dimension_numbers<[1], [0], [0], [1], [0, 0, 1, 1], [], []>} : vector<48x140xbf16>, vector<140x512xbf16>, vector<48x512xf32> -> vector<48x512xf32>
    %c0_6 = arith.constant 0 : index
    %c1 = arith.constant 1 : index
    %c0_7 = arith.constant 0 : index
    %c0_8 = arith.constant 0 : index
    %c0_9 = arith.constant 0 : index
    %5 = vector.load %arg1[%c0_6, %c1, %c0_7, %c0_8, %c0_9] : memref<2x2x6x8x140xbf16, #tpu.memory_space<vmem>>, vector<1x1x6x8x140xbf16>
    %6 = vector.shape_cast %5 : vector<1x1x6x8x140xbf16> to vector<6x8x140xbf16>
    %7 = vector.shape_cast %6 : vector<6x8x140xbf16> to vector<48x140xbf16>
    %c0_10 = arith.constant 0 : index
    %c0_11 = arith.constant 0 : index
    %8 = vector.load %arg2[%c0_10, %c0_11] : memref<140x512xbf16, #tpu.memory_space<vmem>>, vector<140x512xbf16>
    %cst_12 = arith.constant dense<0.000000e+00> : vector<48x512xf32>
    %9 = tpu.matmul %7, %8, %cst_12 {dimension_numbers = #tpu.dot_dimension_numbers<[1], [0], [0], [1], [0, 0, 1, 1], [], []>} : vector<48x140xbf16>, vector<140x512xbf16>, vector<48x512xf32> -> vector<48x512xf32>
    %10 = arith.maximumf %4, %9 : vector<48x512xf32>
    %11 = vector.extract_strided_slice %10 {offsets = [0, 0], sizes = [48, 256], strides = [1, 1]} : vector<48x512xf32> to vector<48x256xf32>
    %12 = vector.extract_strided_slice %10 {offsets = [0, 256], sizes = [48, 256], strides = [1, 1]} : vector<48x512xf32> to vector<48x256xf32>
    %13 = arith.maximumf %11, %12 : vector<48x256xf32>
    %c0_13 = arith.constant 0 : index
    %c0_14 = arith.constant 0 : index
    %14 = vector.load %arg3[%c0_13, %c0_14] : memref<1x256xf32, #tpu.memory_space<vmem>>, vector<1x256xf32>
    %15 = vector.broadcast %14 : vector<1x256xf32> to vector<48x256xf32>
    %16 = arith.addf %13, %15 : vector<48x256xf32>
    %cst_15 = arith.constant 0.000000e+00 : f32
    %17 = vector.broadcast %cst_15 : f32 to vector<48x256xf32>
    %18 = arith.maximumf %16, %17 : vector<48x256xf32>
    %19 = arith.truncf %18 : vector<48x256xf32> to vector<48x256xbf16>
    %c1_16 = arith.constant 1 : index
    %c0_17 = arith.constant 0 : index
    %c0_18 = arith.constant 0 : index
    %c0_19 = arith.constant 0 : index
    %c0_20 = arith.constant 0 : index
    %20 = vector.load %arg1[%c1_16, %c0_17, %c0_18, %c0_19, %c0_20] : memref<2x2x6x8x140xbf16, #tpu.memory_space<vmem>>, vector<1x1x6x8x140xbf16>
    %21 = vector.shape_cast %20 : vector<1x1x6x8x140xbf16> to vector<6x8x140xbf16>
    %22 = vector.shape_cast %21 : vector<6x8x140xbf16> to vector<48x140xbf16>
    %c0_21 = arith.constant 0 : index
    %c0_22 = arith.constant 0 : index
    %23 = vector.load %arg2[%c0_21, %c0_22] : memref<140x512xbf16, #tpu.memory_space<vmem>>, vector<140x512xbf16>
    %cst_23 = arith.constant dense<0.000000e+00> : vector<48x512xf32>
    %24 = tpu.matmul %22, %23, %cst_23 {dimension_numbers = #tpu.dot_dimension_numbers<[1], [0], [0], [1], [0, 0, 1, 1], [], []>} : vector<48x140xbf16>, vector<140x512xbf16>, vector<48x512xf32> -> vector<48x512xf32>
    %c1_24 = arith.constant 1 : index
    %c1_25 = arith.constant 1 : index
    %c0_26 = arith.constant 0 : index
    %c0_27 = arith.constant 0 : index
    %c0_28 = arith.constant 0 : index
    %25 = vector.load %arg1[%c1_24, %c1_25, %c0_26, %c0_27, %c0_28] : memref<2x2x6x8x140xbf16, #tpu.memory_space<vmem>>, vector<1x1x6x8x140xbf16>
    %26 = vector.shape_cast %25 : vector<1x1x6x8x140xbf16> to vector<6x8x140xbf16>
    %27 = vector.shape_cast %26 : vector<6x8x140xbf16> to vector<48x140xbf16>
    %c0_29 = arith.constant 0 : index
    %c0_30 = arith.constant 0 : index
    %28 = vector.load %arg2[%c0_29, %c0_30] : memref<140x512xbf16, #tpu.memory_space<vmem>>, vector<140x512xbf16>
    %cst_31 = arith.constant dense<0.000000e+00> : vector<48x512xf32>
    %29 = tpu.matmul %27, %28, %cst_31 {dimension_numbers = #tpu.dot_dimension_numbers<[1], [0], [0], [1], [0, 0, 1, 1], [], []>} : vector<48x140xbf16>, vector<140x512xbf16>, vector<48x512xf32> -> vector<48x512xf32>
    %30 = arith.maximumf %24, %29 : vector<48x512xf32>
    %31 = vector.extract_strided_slice %30 {offsets = [0, 0], sizes = [48, 256], strides = [1, 1]} : vector<48x512xf32> to vector<48x256xf32>
    %32 = vector.extract_strided_slice %30 {offsets = [0, 256], sizes = [48, 256], strides = [1, 1]} : vector<48x512xf32> to vector<48x256xf32>
    %33 = arith.maximumf %31, %32 : vector<48x256xf32>
    %c0_32 = arith.constant 0 : index
    %c0_33 = arith.constant 0 : index
    %34 = vector.load %arg3[%c0_32, %c0_33] : memref<1x256xf32, #tpu.memory_space<vmem>>, vector<1x256xf32>
    %35 = vector.broadcast %34 : vector<1x256xf32> to vector<48x256xf32>
    %36 = arith.addf %33, %35 : vector<48x256xf32>
    %cst_34 = arith.constant 0.000000e+00 : f32
    %37 = vector.broadcast %cst_34 : f32 to vector<48x256xf32>
    %38 = arith.maximumf %36, %37 : vector<48x256xf32>
    %39 = arith.truncf %38 : vector<48x256xf32> to vector<48x256xbf16>
    %cst_35 = arith.constant 0.000000e+00 : f32
    %40 = vector.broadcast %cst_35 : f32 to vector<32x512xf32>
    %41 = vector.extract_strided_slice %19 {offsets = [0, 0], sizes = [32, 256], strides = [1, 1]} : vector<48x256xbf16> to vector<32x256xbf16>
    %c0_36 = arith.constant 0 : index
    %c0_37 = arith.constant 0 : index
    %c0_38 = arith.constant 0 : index
    %42 = vector.load %arg4[%c0_36, %c0_37, %c0_38] : memref<5x256x512xbf16, #tpu.memory_space<vmem>>, vector<1x256x512xbf16>
    %43 = vector.shape_cast %42 : vector<1x256x512xbf16> to vector<256x512xbf16>
    %cst_39 = arith.constant dense<0.000000e+00> : vector<32x512xf32>
    %44 = tpu.matmul %41, %43, %cst_39 {dimension_numbers = #tpu.dot_dimension_numbers<[1], [0], [0], [1], [0, 0, 1, 1], [], []>} : vector<32x256xbf16>, vector<256x512xbf16>, vector<32x512xf32> -> vector<32x512xf32>
    %45 = arith.addf %40, %44 : vector<32x512xf32>
    %46 = vector.extract_strided_slice %39 {offsets = [0, 0], sizes = [32, 256], strides = [1, 1]} : vector<48x256xbf16> to vector<32x256xbf16>
    %c1_40 = arith.constant 1 : index
    %c0_41 = arith.constant 0 : index
    %c0_42 = arith.constant 0 : index
    %47 = vector.load %arg4[%c1_40, %c0_41, %c0_42] : memref<5x256x512xbf16, #tpu.memory_space<vmem>>, vector<1x256x512xbf16>
    %48 = vector.shape_cast %47 : vector<1x256x512xbf16> to vector<256x512xbf16>
    %cst_43 = arith.constant dense<0.000000e+00> : vector<32x512xf32>
    %49 = tpu.matmul %46, %48, %cst_43 {dimension_numbers = #tpu.dot_dimension_numbers<[1], [0], [0], [1], [0, 0, 1, 1], [], []>} : vector<32x256xbf16>, vector<256x512xbf16>, vector<32x512xf32> -> vector<32x512xf32>
    %50 = arith.addf %45, %49 : vector<32x512xf32>
    %51 = vector.extract_strided_slice %19 {offsets = [8, 0], sizes = [32, 256], strides = [1, 1]} : vector<48x256xbf16> to vector<32x256xbf16>
    %c2 = arith.constant 2 : index
    %c0_44 = arith.constant 0 : index
    %c0_45 = arith.constant 0 : index
    %52 = vector.load %arg4[%c2, %c0_44, %c0_45] : memref<5x256x512xbf16, #tpu.memory_space<vmem>>, vector<1x256x512xbf16>
    %53 = vector.shape_cast %52 : vector<1x256x512xbf16> to vector<256x512xbf16>
    %cst_46 = arith.constant dense<0.000000e+00> : vector<32x512xf32>
    %54 = tpu.matmul %51, %53, %cst_46 {dimension_numbers = #tpu.dot_dimension_numbers<[1], [0], [0], [1], [0, 0, 1, 1], [], []>} : vector<32x256xbf16>, vector<256x512xbf16>, vector<32x512xf32> -> vector<32x512xf32>
    %55 = arith.addf %50, %54 : vector<32x512xf32>
    %56 = vector.extract_strided_slice %39 {offsets = [8, 0], sizes = [32, 256], strides = [1, 1]} : vector<48x256xbf16> to vector<32x256xbf16>
    %c3 = arith.constant 3 : index
    %c0_47 = arith.constant 0 : index
    %c0_48 = arith.constant 0 : index
    %57 = vector.load %arg4[%c3, %c0_47, %c0_48] : memref<5x256x512xbf16, #tpu.memory_space<vmem>>, vector<1x256x512xbf16>
    %58 = vector.shape_cast %57 : vector<1x256x512xbf16> to vector<256x512xbf16>
    %cst_49 = arith.constant dense<0.000000e+00> : vector<32x512xf32>
    %59 = tpu.matmul %56, %58, %cst_49 {dimension_numbers = #tpu.dot_dimension_numbers<[1], [0], [0], [1], [0, 0, 1, 1], [], []>} : vector<32x256xbf16>, vector<256x512xbf16>, vector<32x512xf32> -> vector<32x512xf32>
    %60 = arith.addf %55, %59 : vector<32x512xf32>
    %61 = vector.extract_strided_slice %19 {offsets = [16, 0], sizes = [32, 256], strides = [1, 1]} : vector<48x256xbf16> to vector<32x256xbf16>
    %c4 = arith.constant 4 : index
    %c0_50 = arith.constant 0 : index
    %c0_51 = arith.constant 0 : index
    %62 = vector.load %arg4[%c4, %c0_50, %c0_51] : memref<5x256x512xbf16, #tpu.memory_space<vmem>>, vector<1x256x512xbf16>
    %63 = vector.shape_cast %62 : vector<1x256x512xbf16> to vector<256x512xbf16>
    %cst_52 = arith.constant dense<0.000000e+00> : vector<32x512xf32>
    %64 = tpu.matmul %61, %63, %cst_52 {dimension_numbers = #tpu.dot_dimension_numbers<[1], [0], [0], [1], [0, 0, 1, 1], [], []>} : vector<32x256xbf16>, vector<256x512xbf16>, vector<32x512xf32> -> vector<32x512xf32>
    %65 = arith.addf %60, %64 : vector<32x512xf32>
    %cst_53 = arith.constant 0.000000e+00 : f32
    %66 = vector.broadcast %cst_53 : f32 to vector<32x512xf32>
    %67 = vector.extract_strided_slice %39 {offsets = [0, 0], sizes = [32, 256], strides = [1, 1]} : vector<48x256xbf16> to vector<32x256xbf16>
    %c0_54 = arith.constant 0 : index
    %c0_55 = arith.constant 0 : index
    %c0_56 = arith.constant 0 : index
    %68 = vector.load %arg4[%c0_54, %c0_55, %c0_56] : memref<5x256x512xbf16, #tpu.memory_space<vmem>>, vector<1x256x512xbf16>
    %69 = vector.shape_cast %68 : vector<1x256x512xbf16> to vector<256x512xbf16>
    %cst_57 = arith.constant dense<0.000000e+00> : vector<32x512xf32>
    %70 = tpu.matmul %67, %69, %cst_57 {dimension_numbers = #tpu.dot_dimension_numbers<[1], [0], [0], [1], [0, 0, 1, 1], [], []>} : vector<32x256xbf16>, vector<256x512xbf16>, vector<32x512xf32> -> vector<32x512xf32>
    %71 = arith.addf %66, %70 : vector<32x512xf32>
    %72 = vector.extract_strided_slice %19 {offsets = [8, 0], sizes = [32, 256], strides = [1, 1]} : vector<48x256xbf16> to vector<32x256xbf16>
    %c1_58 = arith.constant 1 : index
    %c0_59 = arith.constant 0 : index
    %c0_60 = arith.constant 0 : index
    %73 = vector.load %arg4[%c1_58, %c0_59, %c0_60] : memref<5x256x512xbf16, #tpu.memory_space<vmem>>, vector<1x256x512xbf16>
    %74 = vector.shape_cast %73 : vector<1x256x512xbf16> to vector<256x512xbf16>
    %cst_61 = arith.constant dense<0.000000e+00> : vector<32x512xf32>
    %75 = tpu.matmul %72, %74, %cst_61 {dimension_numbers = #tpu.dot_dimension_numbers<[1], [0], [0], [1], [0, 0, 1, 1], [], []>} : vector<32x256xbf16>, vector<256x512xbf16>, vector<32x512xf32> -> vector<32x512xf32>
    %76 = arith.addf %71, %75 : vector<32x512xf32>
    %77 = vector.extract_strided_slice %39 {offsets = [8, 0], sizes = [32, 256], strides = [1, 1]} : vector<48x256xbf16> to vector<32x256xbf16>
    %c2_62 = arith.constant 2 : index
    %c0_63 = arith.constant 0 : index
    %c0_64 = arith.constant 0 : index
    %78 = vector.load %arg4[%c2_62, %c0_63, %c0_64] : memref<5x256x512xbf16, #tpu.memory_space<vmem>>, vector<1x256x512xbf16>
    %79 = vector.shape_cast %78 : vector<1x256x512xbf16> to vector<256x512xbf16>
    %cst_65 = arith.constant dense<0.000000e+00> : vector<32x512xf32>
    %80 = tpu.matmul %77, %79, %cst_65 {dimension_numbers = #tpu.dot_dimension_numbers<[1], [0], [0], [1], [0, 0, 1, 1], [], []>} : vector<32x256xbf16>, vector<256x512xbf16>, vector<32x512xf32> -> vector<32x512xf32>
    %81 = arith.addf %76, %80 : vector<32x512xf32>
    %82 = vector.extract_strided_slice %19 {offsets = [16, 0], sizes = [32, 256], strides = [1, 1]} : vector<48x256xbf16> to vector<32x256xbf16>
    %c3_66 = arith.constant 3 : index
    %c0_67 = arith.constant 0 : index
    %c0_68 = arith.constant 0 : index
    %83 = vector.load %arg4[%c3_66, %c0_67, %c0_68] : memref<5x256x512xbf16, #tpu.memory_space<vmem>>, vector<1x256x512xbf16>
    %84 = vector.shape_cast %83 : vector<1x256x512xbf16> to vector<256x512xbf16>
    %cst_69 = arith.constant dense<0.000000e+00> : vector<32x512xf32>
    %85 = tpu.matmul %82, %84, %cst_69 {dimension_numbers = #tpu.dot_dimension_numbers<[1], [0], [0], [1], [0, 0, 1, 1], [], []>} : vector<32x256xbf16>, vector<256x512xbf16>, vector<32x512xf32> -> vector<32x512xf32>
    %86 = arith.addf %81, %85 : vector<32x512xf32>
    %87 = vector.extract_strided_slice %39 {offsets = [16, 0], sizes = [32, 256], strides = [1, 1]} : vector<48x256xbf16> to vector<32x256xbf16>
    %c4_70 = arith.constant 4 : index
    %c0_71 = arith.constant 0 : index
    %c0_72 = arith.constant 0 : index
    %88 = vector.load %arg4[%c4_70, %c0_71, %c0_72] : memref<5x256x512xbf16, #tpu.memory_space<vmem>>, vector<1x256x512xbf16>
    %89 = vector.shape_cast %88 : vector<1x256x512xbf16> to vector<256x512xbf16>
    %cst_73 = arith.constant dense<0.000000e+00> : vector<32x512xf32>
    %90 = tpu.matmul %87, %89, %cst_73 {dimension_numbers = #tpu.dot_dimension_numbers<[1], [0], [0], [1], [0, 0, 1, 1], [], []>} : vector<32x256xbf16>, vector<256x512xbf16>, vector<32x512xf32> -> vector<32x512xf32>
    %91 = arith.addf %86, %90 : vector<32x512xf32>
    %92 = arith.maximumf %65, %91 : vector<32x512xf32>
    %93 = vector.extract_strided_slice %92 {offsets = [0, 0], sizes = [32, 256], strides = [1, 1]} : vector<32x512xf32> to vector<32x256xf32>
    %94 = vector.extract_strided_slice %92 {offsets = [0, 256], sizes = [32, 256], strides = [1, 1]} : vector<32x512xf32> to vector<32x256xf32>
    %95 = arith.maximumf %93, %94 : vector<32x256xf32>
    %c0_74 = arith.constant 0 : index
    %c0_75 = arith.constant 0 : index
    %96 = vector.load %arg5[%c0_74, %c0_75] : memref<1x256xf32, #tpu.memory_space<vmem>>, vector<1x256xf32>
    %97 = vector.broadcast %96 : vector<1x256xf32> to vector<32x256xf32>
    %98 = arith.addf %95, %97 : vector<32x256xf32>
    %cst_76 = arith.constant 0.000000e+00 : f32
    %99 = vector.broadcast %cst_76 : f32 to vector<32x256xf32>
    %100 = arith.maximumf %98, %99 : vector<32x256xf32>
    %101 = arith.truncf %100 : vector<32x256xf32> to vector<32x256xbf16>
    %102 = vector.extract_strided_slice %101 {offsets = [0, 0], sizes = [8, 256], strides = [1, 1]} : vector<32x256xbf16> to vector<8x256xbf16>
    %103 = vector.extract_strided_slice %101 {offsets = [8, 0], sizes = [8, 256], strides = [1, 1]} : vector<32x256xbf16> to vector<8x256xbf16>
    %104 = vector.extract_strided_slice %101 {offsets = [16, 0], sizes = [8, 256], strides = [1, 1]} : vector<32x256xbf16> to vector<8x256xbf16>
    %105 = vector.extract_strided_slice %101 {offsets = [24, 0], sizes = [8, 256], strides = [1, 1]} : vector<32x256xbf16> to vector<8x256xbf16>
    %106 = tpu.concatenate %102, %103, %104, %105 in 1 : vector<8x256xbf16>, vector<8x256xbf16>, vector<8x256xbf16>, vector<8x256xbf16> -> vector<8x1024xbf16>
    %c0_77 = arith.constant 0 : index
    %c0_78 = arith.constant 0 : index
    %107 = vector.load %arg6[%c0_77, %c0_78] : memref<1024x512xbf16, #tpu.memory_space<vmem>>, vector<1024x512xbf16>
    %cst_79 = arith.constant dense<0.000000e+00> : vector<8x512xf32>
    %108 = tpu.matmul %106, %107, %cst_79 {dimension_numbers = #tpu.dot_dimension_numbers<[1], [0], [0], [1], [0, 0, 1, 1], [], []>} : vector<8x1024xbf16>, vector<1024x512xbf16>, vector<8x512xf32> -> vector<8x512xf32>
    %c0_80 = arith.constant 0 : index
    %c0_81 = arith.constant 0 : index
    %109 = vector.load %arg7[%c0_80, %c0_81] : memref<1x512xf32, #tpu.memory_space<vmem>>, vector<1x512xf32>
    %110 = vector.broadcast %109 : vector<1x512xf32> to vector<8x512xf32>
    %111 = arith.addf %108, %110 : vector<8x512xf32>
    %cst_82 = arith.constant 0.000000e+00 : f32
    %112 = vector.broadcast %cst_82 : f32 to vector<8x512xf32>
    %113 = arith.maximumf %111, %112 : vector<8x512xf32>
    %114 = arith.truncf %113 : vector<8x512xf32> to vector<8x512xbf16>
    %c0_83 = arith.constant 0 : index
    %c0_84 = arith.constant 0 : index
    %115 = vector.load %arg8[%c0_83, %c0_84] : memref<512x128xbf16, #tpu.memory_space<vmem>>, vector<512x128xbf16>
    %cst_85 = arith.constant dense<0.000000e+00> : vector<8x128xf32>
    %116 = tpu.matmul %114, %115, %cst_85 {dimension_numbers = #tpu.dot_dimension_numbers<[1], [0], [0], [1], [0, 0, 1, 1], [], []>} : vector<8x512xbf16>, vector<512x128xbf16>, vector<8x128xf32> -> vector<8x128xf32>
    %c0_86 = arith.constant 0 : index
    %c0_87 = arith.constant 0 : index
    %117 = vector.load %arg9[%c0_86, %c0_87] : memref<1x128xf32, #tpu.memory_space<vmem>>, vector<1x128xf32>
    %118 = vector.broadcast %117 : vector<1x128xf32> to vector<8x128xf32>
    %119 = arith.addf %116, %118 : vector<8x128xf32>
    %c0_88 = arith.constant 0 : index
    %c0_89 = arith.constant 0 : index
    %120 = vector.load %arg10[%c0_88, %c0_89] : memref<8x128xf32, #tpu.memory_space<vmem>>, vector<8x128xf32>
    tpu.vector_store %arg10[%c0_88, %c0_89], %119 {strides = array<i32>} : memref<8x128xf32, #tpu.memory_space<vmem>>, vector<8x128xf32>,
    return
  }
  func.func @transform_0(%arg0: i32) -> (i32, i32, i32, i32, i32) {
    %c0_i32 = arith.constant 0 : i32
    %c0_i32_0 = arith.constant 0 : i32
    %c0_i32_1 = arith.constant 0 : i32
    %c0_i32_2 = arith.constant 0 : i32
    %c0_i32_3 = arith.constant 0 : i32
    return %c0_i32, %c0_i32_0, %c0_i32_1, %arg0, %c0_i32_2 : i32, i32, i32, i32, i32
  }
  func.func @transform_1(%arg0: i32) -> (i32, i32) {
    %c0_i32 = arith.constant 0 : i32
    %c0_i32_0 = arith.constant 0 : i32
    %c0_i32_1 = arith.constant 0 : i32
    return %c0_i32, %c0_i32_0 : i32, i32
  }
  func.func @transform_2(%arg0: i32) -> (i32, i32) {
    %c0_i32 = arith.constant 0 : i32
    %c0_i32_0 = arith.constant 0 : i32
    %c0_i32_1 = arith.constant 0 : i32
    return %c0_i32, %c0_i32_0 : i32, i32
  }
  func.func @transform_3(%arg0: i32) -> (i32, i32, i32) {
    %c0_i32 = arith.constant 0 : i32
    %c0_i32_0 = arith.constant 0 : i32
    %c0_i32_1 = arith.constant 0 : i32
    %c0_i32_2 = arith.constant 0 : i32
    return %c0_i32, %c0_i32_0, %c0_i32_1 : i32, i32, i32
  }
  func.func @transform_4(%arg0: i32) -> (i32, i32) {
    %c0_i32 = arith.constant 0 : i32
    %c0_i32_0 = arith.constant 0 : i32
    %c0_i32_1 = arith.constant 0 : i32
    return %c0_i32, %c0_i32_0 : i32, i32
  }
  func.func @transform_5(%arg0: i32) -> (i32, i32) {
    %c0_i32 = arith.constant 0 : i32
    %c0_i32_0 = arith.constant 0 : i32
    %c0_i32_1 = arith.constant 0 : i32
    return %c0_i32, %c0_i32_0 : i32, i32
  }
  func.func @transform_6(%arg0: i32) -> (i32, i32) {
    %c0_i32 = arith.constant 0 : i32
    %c0_i32_0 = arith.constant 0 : i32
    %c0_i32_1 = arith.constant 0 : i32
    return %c0_i32, %c0_i32_0 : i32, i32
  }
  func.func @transform_7(%arg0: i32) -> (i32, i32) {
    %c0_i32 = arith.constant 0 : i32
    %c0_i32_0 = arith.constant 0 : i32
    %c0_i32_1 = arith.constant 0 : i32
    return %c0_i32, %c0_i32_0 : i32, i32
  }
  func.func @transform_8(%arg0: i32) -> (i32, i32) {
    %c0_i32 = arith.constant 0 : i32
    %c0_i32_0 = arith.constant 0 : i32
    %c0_i32_1 = arith.constant 0 : i32
    return %c0_i32, %c0_i32_0 : i32, i32
  }
  func.func @transform_9(%arg0: i32) -> (i32, i32) {
    %c0_i32 = arith.constant 0 : i32
    %c0_i32_0 = arith.constant 0 : i32
    return %arg0, %c0_i32 : i32, i32
  }
}

</mosaic_0001>

<llo_original>
// kernel: tile.13
$region0: #{tile.13}
  #allocation0 [shape = 's32[1]{0}', space=sflag, size = 0x4, scoped, tag = 'scoped memory for tile.13']
  %s0 = inlined_call_operand.vmem [shape: f32[20], index: 0, kind: input, shape index: {}]
  %s1 = inlined_call_operand.vmem [shape: f32[12,20], index: 1, kind: output, shape index: {}]
  // Predicated region
  $region2: #{tile.13} parent=0 // pred_check
    _
  $region3: #{tile.13} parent=0 // pred_check_branch
    %3 = sbr.rel (0) target = $region5
  $region4: #{tile.13} parent=0 // pred_region
    _
  $region5: #{tile.13} parent=0 // pred_fallthru
    _
  %v4 = vld [vmem:[%s0] ss:$0 sm:$0xff]
  %5 = vst [vmem:[%s1] sm:$0xff] %v4
  %s6 = scalar_lea.vmem %s1, 8
  %7 = vst [vmem:[%s6] sm:$0xff] %v4

// kernel: tile.14
$region0: #{tile.14}
  %s0 = inlined_call_operand.vmem [shape: f32[12,20], index: 0, kind: input, shape index: {}]
  %s1 = inlined_call_operand.vmem [shape: f32[240], index: 1, kind: output, shape index: {}]
  $region1: #{tile.14} parent=0
    #allocation0 [shape = 'u8[4096]{0}', space=vmem, size = 0x1000, scoped, tag = 'scoped mem for output reshape']
    %v2 = vld [vmem:[%s0] sm:$0x1]
    %vm3 = vcmask 162816
    %4 = vst.msk [vmem:[#allocation0] sm:$0x1] %vm3, %v2
    %s5 = scalar_lea.vmem %s0, 6
    %v6 = vld [vmem:[%s5] sm:$0x1]
    %s7 = scalar_lea.vmem %s0, 6
    %v8 = vld [vmem:[%s7] sm:$0x1]
    %vm9 = vcmask 64512
    %v10 = vsel %vm9, %v8, %v6
    %11 = vrot.lane.b32.xlu0 %v10, 120
    %v12 = vpop.permute.xlu0 %11
    %vm13 = vcmask 97280
    %s14 = scalar_lea.vmem [#allocation0], 1
    %15 = vst.msk [vmem:[%s14] sm:$0x1] %vm13, %v12
    %vm16 = vcmask 1048512
    %17 = vst.msk [vmem:[#allocation0] sm:$0x1] %vm16, %v12
    %s18 = scalar_lea.vmem %s0, 5
    %v19 = vld [vmem:[%s18] sm:$0x1]
    %20 = vrot.lane.b32.xlu0 %v19, 100
    %v21 = vpop.permute.xlu0 %20
    %vm22 = vcmask 982816
    %23 = vst.msk [vmem:[#allocation0] sm:$0x1] %vm22, %v21
    %s24 = scalar_lea.vmem %s0, 11
    %v25 = vld [vmem:[%s24] sm:$0x1]
    %26 = vrot.lane.b32.xlu0 %v25, 92
    %v27 = vpop.permute.xlu0 %26
    %vm28 = vcmask 917216
    %s29 = scalar_lea.vmem [#allocation0], 1
    %30 = vst.msk [vmem:[%s29] sm:$0x1] %vm28, %v27
    %s31 = scalar_lea.vmem %s0, 4
    %v32 = vld [vmem:[%s31] sm:$0x1]
    %33 = vrot.lane.b32.xlu0 %v32, 80
    %v34 = vpop.permute.xlu0 %33
    %vm35 = vcmask 818816
    %36 = vst.msk [vmem:[#allocation0] sm:$0x1] %vm35, %v34
    %s37 = scalar_lea.vmem %s0, 10
    %v38 = vld [vmem:[%s37] sm:$0x1]
    %39 = vrot.lane.b32.xlu0 %v38, 72
    %v40 = vpop.permute.xlu0 %39
    %vm41 = vcmask 753216
    %s42 = scalar_lea.vmem [#allocation0], 1
    %43 = vst.msk [vmem:[%s42] sm:$0x1] %vm41, %v40
    %s44 = scalar_lea.vmem %s0, 3
    %v45 = vld [vmem:[%s44] sm:$0x1]
    %46 = vrot.lane.b32.xlu0 %v45, 60
    %v47 = vpop.permute.xlu0 %46
    %vm48 = vcmask 654816
    %49 = vst.msk [vmem:[#allocation0] sm:$0x1] %vm48, %v47
    %s50 = scalar_lea.vmem %s0, 9
    %v51 = vld [vmem:[%s50] sm:$0x1]
    %52 = vrot.lane.b32.xlu0 %v51, 52
    %v53 = vpop.permute.xlu0 %52
    %vm54 = vcmask 589216
    %s55 = scalar_lea.vmem [#allocation0], 1
    %56 = vst.msk [vmem:[%s55] sm:$0x1] %vm54, %v53
    %s57 = scalar_lea.vmem %s0, 2
    %v58 = vld [vmem:[%s57] sm:$0x1]
    %59 = vrot.lane.b32.xlu0 %v58, 40
    %v60 = vpop.permute.xlu0 %59
    %vm61 = vcmask 490816
    %62 = vst.msk [vmem:[#allocation0] sm:$0x1] %vm61, %v60
    %s63 = scalar_lea.vmem %s0, 8
    %v64 = vld [vmem:[%s63] sm:$0x1]
    %65 = vrot.lane.b32.xlu0 %v64, 32
    %v66 = vpop.permute.xlu0 %65
    %vm67 = vcmask 425216
    %s68 = scalar_lea.vmem [#allocation0], 1
    %69 = vst.msk [vmem:[%s68] sm:$0x1] %vm67, %v66
    %s70 = scalar_lea.vmem %s0, 1
    %v71 = vld [vmem:[%s70] sm:$0x1]
    %72 = vrot.lane.b32.xlu0 %v71, 20
    %v73 = vpop.permute.xlu0 %72
    %vm74 = vcmask 326816
    %75 = vst.msk [vmem:[#allocation0] sm:$0x1] %vm74, %v73
    %s76 = scalar_lea.vmem %s0, 7
    %v77 = vld [vmem:[%s76] sm:$0x1]
    %78 = vrot.lane.b32.xlu0 %v77, 12
    %v79 = vpop.permute.xlu0 %78
    %vm80 = vcmask 261216
    %s81 = scalar_lea.vmem [#allocation0], 1
    %82 = vst.msk [vmem:[%s81] sm:$0x1] %vm80, %v79
    %s84 = sshll.u32 1, 2
    %s85 = ssub.s32 %s84, 1
    %v87 = vld [vmem:[#allocation0] sm:%s85]
    %s88 = sshll.u32 1, 2
    %s89 = ssub.s32 %s88, 1
    %90 = vst [vmem:[%s1] sm:%s89] %v87

// kernel: tile.19
$region0: #{tile.19}
  %s0 = inlined_call_operand.vmem [shape: f32[4,64], index: 0, kind: input, shape index: {}]
  %s1 = inlined_call_operand.vmem [shape: f32[1,256], index: 1, kind: output, shape index: {}]
  $region1: #{tile.19} parent=0
    #allocation0 [shape = 'u8[8192]{0}', space=vmem, size = 0x2000, scoped, tag = 'scoped mem for output reshape']
    #allocation1 [shape = 'u8[4096]{0}', space=vmem, size = 0x1000, scoped, tag = 'scoped mem for input reshape']
    %s3 = sshll.u32 1, 4
    %s4 = ssub.s32 %s3, 1
    %v5 = vld [vmem:[%s0] sm:%s4]
    %6 = vst [vmem:[#allocation1] sm:%s4] %v5
    %s7 = smov 3
    %v8 = vld [vmem:[#allocation1] ss:$2 sm:%s7]
    %vm9 = vcmask 523264
    %10 = vst.msk [vmem:[#allocation0] ss:$8 sm:$0x3] %vm9, %v8
    %s11 = scalar_lea.vmem [#allocation1], 1
    %s12 = smov 3
    %v13 = vld [vmem:[%s11] ss:$2 sm:%s12]
    %14 = vrot.lane.b32.xlu0 %v13, 64
    %v15 = vpop.permute.xlu0 %14
    %vm16 = vcmask 1048064
    %17 = vst.msk [vmem:[#allocation0] ss:$8 sm:$0x3] %vm16, %v15
    %s19 = sshll.u32 1, 1
    %s20 = ssub.s32 %s19, 1
    %v22 = vld [vmem:[#allocation0] sm:%s20]
    %s23 = sshll.u32 1, 1
    %s24 = ssub.s32 %s23, 1
    %25 = vst [vmem:[%s1] sm:%s24] %v22
    %s26 = scalar_lea.vmem [#allocation0], 8
    %v27 = vld [vmem:[%s26] sm:%s20]
    %s28 = sshll.u32 1, 1
    %s29 = ssub.s32 %s28, 1
    %s30 = scalar_lea.vmem %s1, 1
    %31 = vst [vmem:[%s30] sm:%s29] %v27

// kernel: tile.18
$region0: #{tile.18}
  #allocation0 [shape = 's32[1]{0}', space=sflag, size = 0x4, scoped, tag = 'scoped memory for tile.18']
  %s0 = inlined_call_operand.vmem [shape: f32[64], index: 0, kind: input, shape index: {}]
  %s1 = inlined_call_operand.vmem [shape: f32[4,64], index: 1, kind: output, shape index: {}]
  // Predicated region
  $region2: #{tile.18} parent=0 // pred_check
    _
  $region3: #{tile.18} parent=0 // pred_check_branch
    %3 = sbr.rel (0) target = $region5
  $region4: #{tile.18} parent=0 // pred_region
    _
  $region5: #{tile.18} parent=0 // pred_fallthru
    _
  %v4 = vld [vmem:[%s0] ss:$0 sm:$0xff]
  %5 = vst [vmem:[%s1] sm:$0xf] %v4

// kernel: mnistnet2_forward.1
$region0: #{mnistnet2_forward.1}
  #allocation0 [shape = 'u32[]', space=smem, size = 0x4, offset = 0x4, fixed_abs, tag = 'smem constant byte address 0x4 - core index']
  #allocation1 [shape = 'u32[144,128]{1,0:T(1,128)}', space=vmem, size = 0x12000, scoped, tag = 'internal scratch']
  %s0 = inlined_call_operand.vmem [shape: bf16[2,2,6,8,140], index: 0, kind: input, shape index: {}]
  %s1 = inlined_call_operand.vmem [shape: bf16[140,512], index: 1, kind: input, shape index: {}]
  %s2 = inlined_call_operand.vmem [shape: f32[1,256], index: 2, kind: input, shape index: {}]
  %s3 = inlined_call_operand.vmem [shape: bf16[5,256,512], index: 3, kind: input, shape index: {}]
  %s4 = inlined_call_operand.vmem [shape: f32[1,256], index: 4, kind: input, shape index: {}]
  %s5 = inlined_call_operand.vmem [shape: bf16[1024,512], index: 5, kind: input, shape index: {}]
  %s6 = inlined_call_operand.vmem [shape: f32[1,512], index: 6, kind: input, shape index: {}]
  %s7 = inlined_call_operand.vmem [shape: bf16[512,128], index: 7, kind: input, shape index: {}]
  %s8 = inlined_call_operand.vmem [shape: f32[1,128], index: 8, kind: input, shape index: {}]
  %s9 = inlined_call_operand.vmem [shape: f32[8,128], index: 9, kind: output, shape index: {}]
  %s10 = sld [smem:[#allocation0]]
  $region46: #{mnistnet2_forward.1} parent=0
    _
  %s12 = ssub.s32 1, %s10
  %s13 = scalar_select 0, %s12, %s10
  // Predicated region
  $region2: #{mnistnet2_forward.1} parent=0 // pred_check
    _
  $region3: #{mnistnet2_forward.1} parent=0 // pred_check_branch
    %15 = sbr.rel (0) target = $region5
  $region4: #{mnistnet2_forward.1} parent=0 // pred_region
    _
  $region5: #{mnistnet2_forward.1} parent=0 // pred_fallthru
    _
  // Predicated region
  $region6: #{mnistnet2_forward.1} parent=0 // pred_check
    _
  $region7: #{mnistnet2_forward.1} parent=0 // pred_check_branch
    %17 = sbr.rel (0) target = $region9
  $region8: #{mnistnet2_forward.1} parent=0 // pred_region
    _
  $region9: #{mnistnet2_forward.1} parent=0 // pred_fallthru
    _
  // Predicated region
  $region10: #{mnistnet2_forward.1} parent=0 // pred_check
    _
  $region11: #{mnistnet2_forward.1} parent=0 // pred_check_branch
    %19 = sbr.rel (0) target = $region13
  $region12: #{mnistnet2_forward.1} parent=0 // pred_region
    _
  $region13: #{mnistnet2_forward.1} parent=0 // pred_fallthru
    _
  // Predicated region
  $region14: #{mnistnet2_forward.1} parent=0 // pred_check
    _
  $region15: #{mnistnet2_forward.1} parent=0 // pred_check_branch
    %21 = sbr.rel (0) target = $region17
  $region16: #{mnistnet2_forward.1} parent=0 // pred_region
    _
  $region17: #{mnistnet2_forward.1} parent=0 // pred_fallthru
    _
  // Predicated region
  $region18: #{mnistnet2_forward.1} parent=0 // pred_check
    _
  $region19: #{mnistnet2_forward.1} parent=0 // pred_check_branch
    %23 = sbr.rel (0) target = $region21
  $region20: #{mnistnet2_forward.1} parent=0 // pred_region
    _
  $region21: #{mnistnet2_forward.1} parent=0 // pred_fallthru
    _
  // Predicated region
  $region22: #{mnistnet2_forward.1} parent=0 // pred_check
    _
  $region23: #{mnistnet2_forward.1} parent=0 // pred_check_branch
    %25 = sbr.rel (0) target = $region25
  $region24: #{mnistnet2_forward.1} parent=0 // pred_region
    _
  $region25: #{mnistnet2_forward.1} parent=0 // pred_fallthru
    _
  // Predicated region
  $region26: #{mnistnet2_forward.1} parent=0 // pred_check
    _
  $region27: #{mnistnet2_forward.1} parent=0 // pred_check_branch
    %27 = sbr.rel (0) target = $region29
  $region28: #{mnistnet2_forward.1} parent=0 // pred_region
    _
  $region29: #{mnistnet2_forward.1} parent=0 // pred_fallthru
    _
  // Predicated region
  $region30: #{mnistnet2_forward.1} parent=0 // pred_check
    _
  $region31: #{mnistnet2_forward.1} parent=0 // pred_check_branch
    %29 = sbr.rel (0) target = $region33
  $region32: #{mnistnet2_forward.1} parent=0 // pred_region
    _
  $region33: #{mnistnet2_forward.1} parent=0 // pred_fallthru
    _
  // Predicated region
  $region34: #{mnistnet2_forward.1} parent=0 // pred_check
    _
  $region35: #{mnistnet2_forward.1} parent=0 // pred_check_branch
    %31 = sbr.rel (0) target = $region37
  $region36: #{mnistnet2_forward.1} parent=0 // pred_region
    _
  $region37: #{mnistnet2_forward.1} parent=0 // pred_fallthru
    _
  %v33 = vld [vmem:[%s0] sm:$0xff]
  %v34 = vld [vmem:[%s0 + $0x8] sm:$0xff]
  %v35 = vld [vmem:[%s0 + $0x10] sm:$0xff]
  %v36 = vld [vmem:[%s0 + $0x18] sm:$0xff]
  %v37 = vld [vmem:[%s0 + $0x20] sm:$0xff]
  %v38 = vld [vmem:[%s0 + $0x28] sm:$0xff]
  %v39 = vld [vmem:[%s1] sm:$0xff]
  %v40 = vld [vmem:[%s1 + $0x8] sm:$0xff]
  %v41 = vld [vmem:[%s1 + $0x10] sm:$0xff]
  %v42 = vld [vmem:[%s1 + $0x18] sm:$0xff]
  %v43 = vld [vmem:[%s1 + $0x20] sm:$0xff]
  %v44 = vld [vmem:[%s1 + $0x28] sm:$0xff]
  %v45 = vld [vmem:[%s1 + $0x30] sm:$0xff]
  %v46 = vld [vmem:[%s1 + $0x38] sm:$0xff]
  %v47 = vld [vmem:[%s1 + $0x40] sm:$0xff]
  %v48 = vld [vmem:[%s1 + $0x48] sm:$0xff]
  %v49 = vld [vmem:[%s1 + $0x50] sm:$0xff]
  %v50 = vld [vmem:[%s1 + $0x58] sm:$0xff]
  %v51 = vld [vmem:[%s1 + $0x60] sm:$0xff]
  %v52 = vld [vmem:[%s1 + $0x68] sm:$0xff]
  %v53 = vld [vmem:[%s1 + $0x70] sm:$0xff]
  %v54 = vld [vmem:[%s1 + $0x78] sm:$0xff]
  %v55 = vld [vmem:[%s1 + $0x80] sm:$0xff]
  %v56 = vld [vmem:[%s1 + $0x88] sm:$0xff]
  %v57 = vld [vmem:[%s1 + $0x90] sm:$0xff]
  %v58 = vld [vmem:[%s1 + $0x98] sm:$0xff]
  %v59 = vld [vmem:[%s1 + $0xa0] sm:$0xff]
  %v60 = vld [vmem:[%s1 + $0xa8] sm:$0xff]
  %v61 = vld [vmem:[%s1 + $0xb0] sm:$0xff]
  %v62 = vld [vmem:[%s1 + $0xb8] sm:$0xff]
  %v63 = vld [vmem:[%s1 + $0xc0] sm:$0xff]
  %v64 = vld [vmem:[%s1 + $0xc8] sm:$0xff]
  %v65 = vld [vmem:[%s1 + $0xd0] sm:$0xff]
  %v66 = vld [vmem:[%s1 + $0xd8] sm:$0xff]
  %v67 = vld [vmem:[%s1 + $0xe0] sm:$0xff]
  %v68 = vld [vmem:[%s1 + $0xe8] sm:$0xff]
  %v69 = vld [vmem:[%s1 + $0xf0] sm:$0xff]
  %v70 = vld [vmem:[%s1 + $0xf8] sm:$0xff]
  %v71 = vld [vmem:[%s1 + $0x100] sm:$0xff]
  %v72 = vld [vmem:[%s1 + $0x108] sm:$0xff]
  %v73 = vld [vmem:[%s1 + $0x110] sm:$0x33]
  %v74 = vld [vmem:[%s1 + $0x118] sm:$0x33]
  %v81 = vunpack.c.l.b16 %v33
  %v82 = vunpack.c.h.b16 %v33
  %v83 = vunpack.c.l.b16 %v34
  %v84 = vunpack.c.h.b16 %v34
  %v85 = vunpack.c.l.b16 %v35
  %v86 = vunpack.c.h.b16 %v35
  %v87 = vunpack.c.l.b16 %v36
  %v88 = vunpack.c.h.b16 %v36
  %v89 = vunpack.c.l.b16 %v37
  %v90 = vunpack.c.h.b16 %v37
  %v91 = vunpack.c.l.b16 %v38
  %v92 = vunpack.c.h.b16 %v38
  %v93 = vpack.c.b16 %v83, %v81
  %v94 = vpack.c.b16 %v84, %v82
  %v95 = vpack.c.b16 %v87, %v85
  %v96 = vpack.c.b16 %v88, %v86
  %v97 = vpack.c.b16 %v91, %v89
  %v98 = vpack.c.b16 %v92, %v90
  %v138 = vunpack.c.l.b16 %v39
  %v139 = vunpack.c.h.b16 %v39
  %v140 = vunpack.c.l.b16 %v40
  %v141 = vunpack.c.h.b16 %v40
  %v142 = vunpack.c.l.b16 %v41
  %v143 = vunpack.c.h.b16 %v41
  %v144 = vunpack.c.l.b16 %v42
  %v145 = vunpack.c.h.b16 %v42
  %v146 = vunpack.c.l.b16 %v43
  %v147 = vunpack.c.h.b16 %v43
  %v148 = vunpack.c.l.b16 %v44
  %v149 = vunpack.c.h.b16 %v44
  %v150 = vunpack.c.l.b16 %v45
  %v151 = vunpack.c.h.b16 %v45
  %v152 = vunpack.c.l.b16 %v46
  %v153 = vunpack.c.h.b16 %v46
  %v154 = vunpack.c.l.b16 %v47
  %v155 = vunpack.c.h.b16 %v47
  %v156 = vunpack.c.l.b16 %v48
  %v157 = vunpack.c.h.b16 %v48
  %v158 = vunpack.c.l.b16 %v49
  %v159 = vunpack.c.h.b16 %v49
  %v160 = vunpack.c.l.b16 %v50
  %v161 = vunpack.c.h.b16 %v50
  %v162 = vunpack.c.l.b16 %v51
  %v163 = vunpack.c.h.b16 %v51
  %v164 = vunpack.c.l.b16 %v52
  %v165 = vunpack.c.h.b16 %v52
  %v166 = vunpack.c.l.b16 %v53
  %v167 = vunpack.c.h.b16 %v53
  %v168 = vunpack.c.l.b16 %v54
  %v169 = vunpack.c.h.b16 %v54
  %v170 = vunpack.c.l.b16 %v55
  %v171 = vunpack.c.h.b16 %v55
  %v172 = vunpack.c.l.b16 %v56
  %v173 = vunpack.c.h.b16 %v56
  %v174 = vunpack.c.l.b16 %v57
  %v175 = vunpack.c.h.b16 %v57
  %v176 = vunpack.c.l.b16 %v58
  %v177 = vunpack.c.h.b16 %v58
  %v178 = vunpack.c.l.b16 %v59
  %v179 = vunpack.c.h.b16 %v59
  %v180 = vunpack.c.l.b16 %v60
  %v181 = vunpack.c.h.b16 %v60
  %v182 = vunpack.c.l.b16 %v61
  %v183 = vunpack.c.h.b16 %v61
  %v184 = vunpack.c.l.b16 %v62
  %v185 = vunpack.c.h.b16 %v62
  %v186 = vunpack.c.l.b16 %v63
  %v187 = vunpack.c.h.b16 %v63
  %v188 = vunpack.c.l.b16 %v64
  %v189 = vunpack.c.h.b16 %v64
  %v190 = vunpack.c.l.b16 %v65
  %v191 = vunpack.c.h.b16 %v65
  %v192 = vunpack.c.l.b16 %v66
  %v193 = vunpack.c.h.b16 %v66
  %v194 = vunpack.c.l.b16 %v67
  %v195 = vunpack.c.h.b16 %v67
  %v196 = vunpack.c.l.b16 %v68
  %v197 = vunpack.c.h.b16 %v68
  %v198 = vunpack.c.l.b16 %v69
  %v199 = vunpack.c.h.b16 %v69
  %v200 = vunpack.c.l.b16 %v70
  %v201 = vunpack.c.h.b16 %v70
  %v202 = vunpack.c.l.b16 %v71
  %v203 = vunpack.c.h.b16 %v71
  %v204 = vunpack.c.l.b16 %v72
  %v205 = vunpack.c.h.b16 %v72
  %v206 = vunpack.c.l.b16 %v73
  %v207 = vunpack.c.h.b16 %v73
  %v208 = vunpack.c.l.b16 %v74
  %v209 = vunpack.c.h.b16 %v74
  %v210 = vpack.c.b16 %v142, %v138
  %v211 = vpack.c.b16 %v143, %v139
  %v212 = vpack.c.b16 %v144, %v140
  %v213 = vpack.c.b16 %v145, %v141
  %v214 = vpack.c.b16 %v150, %v146
  %v215 = vpack.c.b16 %v151, %v147
  %v216 = vpack.c.b16 %v152, %v148
  %v217 = vpack.c.b16 %v153, %v149
  %v218 = vpack.c.b16 %v158, %v154
  %v219 = vpack.c.b16 %v159, %v155
  %v220 = vpack.c.b16 %v160, %v156
  %v221 = vpack.c.b16 %v161, %v157
  %v222 = vpack.c.b16 %v166, %v162
  %v223 = vpack.c.b16 %v167, %v163
  %v224 = vpack.c.b16 %v168, %v164
  %v225 = vpack.c.b16 %v169, %v165
  %v226 = vpack.c.b16 %v174, %v170
  %v227 = vpack.c.b16 %v175, %v171
  %v228 = vpack.c.b16 %v176, %v172
  %v229 = vpack.c.b16 %v177, %v173
  %v230 = vpack.c.b16 %v182, %v178
  %v231 = vpack.c.b16 %v183, %v179
  %v232 = vpack.c.b16 %v184, %v180
  %v233 = vpack.c.b16 %v185, %v181
  %v234 = vpack.c.b16 %v190, %v186
  %v235 = vpack.c.b16 %v191, %v187
  %v236 = vpack.c.b16 %v192, %v188
  %v237 = vpack.c.b16 %v193, %v189
  %v238 = vpack.c.b16 %v198, %v194
  %v239 = vpack.c.b16 %v199, %v195
  %v240 = vpack.c.b16 %v200, %v196
  %v241 = vpack.c.b16 %v201, %v197
  %v242 = vpack.c.b16 %v206, %v202
  %v243 = vpack.c.b16 %v207, %v203
  %v244 = vpack.c.b16 %v208, %v204
  %v245 = vpack.c.b16 %v209, %v205
  %vm278 = vcmask 97280
  %v280 = vsel %vm278, %v94, 0
  %v283 = vsel %vm278, %v96, 0
  %v286 = vsel %vm278, %v98, 0
  %vm288 = vcmask 1045504
  %v290 = vsel %vm288, %v242, 0
  %v293 = vsel %vm288, %v243, 0
  %v296 = vsel %vm288, %v244, 0
  %v299 = vsel %vm288, %v245, 0
  %301 = vmatprep.subr.bf16.mxu0 %v239
  %302 = vmatpush1.bf16.msra.mxu0 %v238
  %303 = vmatprep.subr.bf16.mxu0 %v235
  %304 = vmatpush1.bf16.msra.mxu0 %v234
  %305 = vmatprep.subr.bf16.mxu0 %v231
  %306 = vmatpush1.bf16.msra.mxu0 %v230
  %307 = vmatprep.subr.bf16.mxu0 %v227
  %308 = vmatpush1.bf16.msra.mxu0 %v226
  %309 = vmatprep.subr.bf16.mxu0 %v223
  %310 = vmatpush1.bf16.msra.mxu0 %v222
  %311 = vmatprep.subr.bf16.mxu0 %v219
  %312 = vmatpush1.bf16.msra.mxu0 %v218
  %313 = vmatprep.subr.bf16.mxu0 %v215
  %314 = vmatpush1.bf16.msra.mxu0 %v214
  %315 = vmatprep.subr.bf16.mxu0 %v211
  %316 = vmatpush1.bf16.msra.mxu0 %v210
  %317 = vmatprep.subr.bf16.mxu0 0
  %318 = vmatpush2.bf16.msra.mxu0 0
  %319 = vmatprep.subr.bf16.mxu0 0
  %320 = vmatpush2.bf16.msra.mxu0 0
  %321 = vmatprep.subr.bf16.mxu0 0
  %322 = vmatpush2.bf16.msra.mxu0 0
  %323 = vmatprep.subr.bf16.mxu0 0
  %324 = vmatpush2.bf16.msra.mxu0 0
  %325 = vmatprep.subr.bf16.mxu0 0
  %326 = vmatpush2.bf16.msra.mxu0 0
  %327 = vmatprep.subr.bf16.mxu0 0
  %328 = vmatpush2.bf16.msra.mxu0 0
  %329 = vmatprep.subr.bf16.mxu0 0
  %330 = vmatpush2.bf16.msra.mxu0 0
  %331 = vmatprep.subr.bf16.mxu0 %v293
  %332 = vmatpush2.bf16.msra.mxu0 %v290
  %333 = vmatprep.mubr.bf16.mxu0 %v280
  %334 = vmatmul.mubr.bf16.gmra.mxu0 %v93
  %v335 = vpop.f32.mrf.mxu0
  %v336 = vadd.f32 0.0, %v335
  %v337 = vpop.f32.mrf.mxu0
  %v338 = vadd.f32 0.0, %v337
  %v339 = vpop.f32.mrf.mxu0
  %v340 = vadd.f32 0.0, %v339
  %v341 = vpop.f32.mrf.mxu0
  %v342 = vadd.f32 0.0, %v341
  %343 = vmatprep.mubr.bf16.mxu0 %v283
  %344 = vmatmul.mubr.bf16.gmra.mxu0 %v95
  %v345 = vpop.f32.mrf.mxu0
  %v346 = vadd.f32 0.0, %v345
  %v347 = vpop.f32.mrf.mxu0
  %v348 = vadd.f32 0.0, %v347
  %v349 = vpop.f32.mrf.mxu0
  %v350 = vadd.f32 0.0, %v349
  %v351 = vpop.f32.mrf.mxu0
  %v352 = vadd.f32 0.0, %v351
  %353 = vmatprep.mubr.bf16.mxu0 %v286
  %354 = vmatmul.mubr.bf16.gmra.mxu0 %v97
  %v355 = vpop.f32.mrf.mxu0
  %v356 = vadd.f32 0.0, %v355
  %v357 = vpop.f32.mrf.mxu0
  %v358 = vadd.f32 0.0, %v357
  %v359 = vpop.f32.mrf.mxu0
  %v360 = vadd.f32 0.0, %v359
  %v361 = vpop.f32.mrf.mxu0
  %v362 = vadd.f32 0.0, %v361
  %363 = vdwg.mxu0
  %364 = vmatprep.subr.bf16.mxu0 %v241
  %365 = vmatpush1.bf16.msra.mxu0 %v240
  %366 = vmatprep.subr.bf16.mxu0 %v237
  %367 = vmatpush1.bf16.msra.mxu0 %v236
  %368 = vmatprep.subr.bf16.mxu0 %v233
  %369 = vmatpush1.bf16.msra.mxu0 %v232
  %370 = vmatprep.subr.bf16.mxu0 %v229
  %371 = vmatpush1.bf16.msra.mxu0 %v228
  %372 = vmatprep.subr.bf16.mxu0 %v225
  %373 = vmatpush1.bf16.msra.mxu0 %v224
  %374 = vmatprep.subr.bf16.mxu0 %v221
  %375 = vmatpush1.bf16.msra.mxu0 %v220
  %376 = vmatprep.subr.bf16.mxu0 %v217
  %377 = vmatpush1.bf16.msra.mxu0 %v216
  %378 = vmatprep.subr.bf16.mxu0 %v213
  %379 = vmatpush1.bf16.msra.mxu0 %v212
  %380 = vmatprep.subr.bf16.mxu0 0
  %381 = vmatpush2.bf16.msra.mxu0 0
  %382 = vmatprep.subr.bf16.mxu0 0
  %383 = vmatpush2.bf16.msra.mxu0 0
  %384 = vmatprep.subr.bf16.mxu0 0
  %385 = vmatpush2.bf16.msra.mxu0 0
  %386 = vmatprep.subr.bf16.mxu0 0
  %387 = vmatpush2.bf16.msra.mxu0 0
  %388 = vmatprep.subr.bf16.mxu0 0
  %389 = vmatpush2.bf16.msra.mxu0 0
  %390 = vmatprep.subr.bf16.mxu0 0
  %391 = vmatpush2.bf16.msra.mxu0 0
  %392 = vmatprep.subr.bf16.mxu0 0
  %393 = vmatpush2.bf16.msra.mxu0 0
  %394 = vmatprep.subr.bf16.mxu0 %v299
  %395 = vmatpush2.bf16.msra.mxu0 %v296
  %396 = vmatprep.mubr.bf16.mxu0 %v280
  %397 = vmatmul.mubr.bf16.gmra.mxu0 %v93
  %v398 = vpop.f32.mrf.mxu0
  %v399 = vadd.f32 0.0, %v398
  %v400 = vpop.f32.mrf.mxu0
  %v401 = vadd.f32 0.0, %v400
  %v402 = vpop.f32.mrf.mxu0
  %v403 = vadd.f32 0.0, %v402
  %v404 = vpop.f32.mrf.mxu0
  %v405 = vadd.f32 0.0, %v404
  %406 = vmatprep.mubr.bf16.mxu0 %v283
  %407 = vmatmul.mubr.bf16.gmra.mxu0 %v95
  %v408 = vpop.f32.mrf.mxu0
  %v409 = vadd.f32 0.0, %v408
  %v410 = vpop.f32.mrf.mxu0
  %v411 = vadd.f32 0.0, %v410
  %v412 = vpop.f32.mrf.mxu0
  %v413 = vadd.f32 0.0, %v412
  %v414 = vpop.f32.mrf.mxu0
  %v415 = vadd.f32 0.0, %v414
  %416 = vmatprep.mubr.bf16.mxu0 %v286
  %417 = vmatmul.mubr.bf16.gmra.mxu0 %v97
  %v418 = vpop.f32.mrf.mxu0
  %v419 = vadd.f32 0.0, %v418
  %v420 = vpop.f32.mrf.mxu0
  %v421 = vadd.f32 0.0, %v420
  %v422 = vpop.f32.mrf.mxu0
  %v423 = vadd.f32 0.0, %v422
  %v424 = vpop.f32.mrf.mxu0
  %v425 = vadd.f32 0.0, %v424
  %426 = vdwg.mxu0
  %s427 = scalar_lea.vmem %s0, 48
  %v428 = vld [vmem:[%s427] sm:$0xff]
  %v429 = vld [vmem:[%s427 + $0x8] sm:$0xff]
  %v430 = vld [vmem:[%s427 + $0x10] sm:$0xff]
  %v431 = vld [vmem:[%s427 + $0x18] sm:$0xff]
  %v432 = vld [vmem:[%s427 + $0x20] sm:$0xff]
  %v433 = vld [vmem:[%s427 + $0x28] sm:$0xff]
  %v440 = vunpack.c.l.b16 %v428
  %v441 = vunpack.c.h.b16 %v428
  %v442 = vunpack.c.l.b16 %v429
  %v443 = vunpack.c.h.b16 %v429
  %v444 = vunpack.c.l.b16 %v430
  %v445 = vunpack.c.h.b16 %v430
  %v446 = vunpack.c.l.b16 %v431
  %v447 = vunpack.c.h.b16 %v431
  %v448 = vunpack.c.l.b16 %v432
  %v449 = vunpack.c.h.b16 %v432
  %v450 = vunpack.c.l.b16 %v433
  %v451 = vunpack.c.h.b16 %v433
  %v452 = vpack.c.b16 %v442, %v440
  %v453 = vpack.c.b16 %v443, %v441
  %v454 = vpack.c.b16 %v446, %v444
  %v455 = vpack.c.b16 %v447, %v445
  %v456 = vpack.c.b16 %v450, %v448
  %v457 = vpack.c.b16 %v451, %v449
  %v462 = vsel %vm278, %v453, 0
  %v465 = vsel %vm278, %v455, 0
  %v468 = vsel %vm278, %v457, 0
  %470 = vmatprep.subr.bf16.mxu0 %v239
  %471 = vmatpush1.bf16.msra.mxu0 %v238
  %472 = vmatprep.subr.bf16.mxu0 %v235
  %473 = vmatpush1.bf16.msra.mxu0 %v234
  %474 = vmatprep.subr.bf16.mxu0 %v231
  %475 = vmatpush1.bf16.msra.mxu0 %v230
  %476 = vmatprep.subr.bf16.mxu0 %v227
  %477 = vmatpush1.bf16.msra.mxu0 %v226
  %478 = vmatprep.subr.bf16.mxu0 %v223
  %479 = vmatpush1.bf16.msra.mxu0 %v222
  %480 = vmatprep.subr.bf16.mxu0 %v219
  %481 = vmatpush1.bf16.msra.mxu0 %v218
  %482 = vmatprep.subr.bf16.mxu0 %v215
  %483 = vmatpush1.bf16.msra.mxu0 %v214
  %484 = vmatprep.subr.bf16.mxu0 %v211
  %485 = vmatpush1.bf16.msra.mxu0 %v210
  %486 = vmatprep.subr.bf16.mxu0 0
  %487 = vmatpush2.bf16.msra.mxu0 0
  %488 = vmatprep.subr.bf16.mxu0 0
  %489 = vmatpush2.bf16.msra.mxu0 0
  %490 = vmatprep.subr.bf16.mxu0 0
  %491 = vmatpush2.bf16.msra.mxu0 0
  %492 = vmatprep.subr.bf16.mxu0 0
  %493 = vmatpush2.bf16.msra.mxu0 0
  %494 = vmatprep.subr.bf16.mxu0 0
  %495 = vmatpush2.bf16.msra.mxu0 0
  %496 = vmatprep.subr.bf16.mxu0 0
  %497 = vmatpush2.bf16.msra.mxu0 0
  %498 = vmatprep.subr.bf16.mxu0 0
  %499 = vmatpush2.bf16.msra.mxu0 0
  %500 = vmatprep.subr.bf16.mxu0 %v293
  %501 = vmatpush2.bf16.msra.mxu0 %v290
  %502 = vmatprep.mubr.bf16.mxu0 %v462
  %503 = vmatmul.mubr.bf16.gmra.mxu0 %v452
  %v504 = vpop.f32.mrf.mxu0
  %v505 = vadd.f32 0.0, %v504
  %v506 = vpop.f32.mrf.mxu0
  %v507 = vadd.f32 0.0, %v506
  %v508 = vpop.f32.mrf.mxu0
  %v509 = vadd.f32 0.0, %v508
  %v510 = vpop.f32.mrf.mxu0
  %v511 = vadd.f32 0.0, %v510
  %512 = vmatprep.mubr.bf16.mxu0 %v465
  %513 = vmatmul.mubr.bf16.gmra.mxu0 %v454
  %v514 = vpop.f32.mrf.mxu0
  %v515 = vadd.f32 0.0, %v514
  %v516 = vpop.f32.mrf.mxu0
  %v517 = vadd.f32 0.0, %v516
  %v518 = vpop.f32.mrf.mxu0
  %v519 = vadd.f32 0.0, %v518
  %v520 = vpop.f32.mrf.mxu0
  %v521 = vadd.f32 0.0, %v520
  %522 = vmatprep.mubr.bf16.mxu0 %v468
  %523 = vmatmul.mubr.bf16.gmra.mxu0 %v456
  %v524 = vpop.f32.mrf.mxu0
  %v525 = vadd.f32 0.0, %v524
  %v526 = vpop.f32.mrf.mxu0
  %v527 = vadd.f32 0.0, %v526
  %v528 = vpop.f32.mrf.mxu0
  %v529 = vadd.f32 0.0, %v528
  %v530 = vpop.f32.mrf.mxu0
  %v531 = vadd.f32 0.0, %v530
  %532 = vdwg.mxu0
  %533 = vmatprep.subr.bf16.mxu0 %v241
  %534 = vmatpush1.bf16.msra.mxu0 %v240
  %535 = vmatprep.subr.bf16.mxu0 %v237
  %536 = vmatpush1.bf16.msra.mxu0 %v236
  %537 = vmatprep.subr.bf16.mxu0 %v233
  %538 = vmatpush1.bf16.msra.mxu0 %v232
  %539 = vmatprep.subr.bf16.mxu0 %v229
  %540 = vmatpush1.bf16.msra.mxu0 %v228
  %541 = vmatprep.subr.bf16.mxu0 %v225
  %542 = vmatpush1.bf16.msra.mxu0 %v224
  %543 = vmatprep.subr.bf16.mxu0 %v221
  %544 = vmatpush1.bf16.msra.mxu0 %v220
  %545 = vmatprep.subr.bf16.mxu0 %v217
  %546 = vmatpush1.bf16.msra.mxu0 %v216
  %547 = vmatprep.subr.bf16.mxu0 %v213
  %548 = vmatpush1.bf16.msra.mxu0 %v212
  %549 = vmatprep.subr.bf16.mxu0 0
  %550 = vmatpush2.bf16.msra.mxu0 0
  %551 = vmatprep.subr.bf16.mxu0 0
  %552 = vmatpush2.bf16.msra.mxu0 0
  %553 = vmatprep.subr.bf16.mxu0 0
  %554 = vmatpush2.bf16.msra.mxu0 0
  %555 = vmatprep.subr.bf16.mxu0 0
  %556 = vmatpush2.bf16.msra.mxu0 0
  %557 = vmatprep.subr.bf16.mxu0 0
  %558 = vmatpush2.bf16.msra.mxu0 0
  %559 = vmatprep.subr.bf16.mxu0 0
  %560 = vmatpush2.bf16.msra.mxu0 0
  %561 = vmatprep.subr.bf16.mxu0 0
  %562 = vmatpush2.bf16.msra.mxu0 0
  %563 = vmatprep.subr.bf16.mxu0 %v299
  %564 = vmatpush2.bf16.msra.mxu0 %v296
  %565 = vmatprep.mubr.bf16.mxu0 %v462
  %566 = vmatmul.mubr.bf16.gmra.mxu0 %v452
  %v567 = vpop.f32.mrf.mxu0
  %v568 = vadd.f32 0.0, %v567
  %v569 = vpop.f32.mrf.mxu0
  %v570 = vadd.f32 0.0, %v569
  %v571 = vpop.f32.mrf.mxu0
  %v572 = vadd.f32 0.0, %v571
  %v573 = vpop.f32.mrf.mxu0
  %v574 = vadd.f32 0.0, %v573
  %575 = vmatprep.mubr.bf16.mxu0 %v465
  %576 = vmatmul.mubr.bf16.gmra.mxu0 %v454
  %v577 = vpop.f32.mrf.mxu0
  %v578 = vadd.f32 0.0, %v577
  %v579 = vpop.f32.mrf.mxu0
  %v580 = vadd.f32 0.0, %v579
  %v581 = vpop.f32.mrf.mxu0
  %v582 = vadd.f32 0.0, %v581
  %v583 = vpop.f32.mrf.mxu0
  %v584 = vadd.f32 0.0, %v583
  %585 = vmatprep.mubr.bf16.mxu0 %v468
  %586 = vmatmul.mubr.bf16.gmra.mxu0 %v456
  %v587 = vpop.f32.mrf.mxu0
  %v588 = vadd.f32 0.0, %v587
  %v589 = vpop.f32.mrf.mxu0
  %v590 = vadd.f32 0.0, %v589
  %v591 = vpop.f32.mrf.mxu0
  %v592 = vadd.f32 0.0, %v591
  %v593 = vpop.f32.mrf.mxu0
  %v594 = vadd.f32 0.0, %v593
  %595 = vdwg.mxu0
  %v596 = vmax.f32 %v336, %v505
  %v597 = vmax.f32 %v338, %v507
  %v598 = vmax.f32 %v399, %v568
  %v599 = vmax.f32 %v401, %v570
  %v600 = vmax.f32 %v340, %v509
  %v601 = vmax.f32 %v342, %v511
  %v602 = vmax.f32 %v403, %v572
  %v603 = vmax.f32 %v405, %v574
  %v604 = vmax.f32 %v346, %v515
  %v605 = vmax.f32 %v348, %v517
  %v606 = vmax.f32 %v409, %v578
  %v607 = vmax.f32 %v411, %v580
  %v608 = vmax.f32 %v350, %v519
  %v609 = vmax.f32 %v352, %v521
  %v610 = vmax.f32 %v413, %v582
  %v611 = vmax.f32 %v415, %v584
  %v612 = vmax.f32 %v356, %v525
  %v613 = vmax.f32 %v358, %v527
  %v614 = vmax.f32 %v419, %v588
  %v615 = vmax.f32 %v421, %v590
  %v616 = vmax.f32 %v360, %v529
  %v617 = vmax.f32 %v362, %v531
  %v618 = vmax.f32 %v423, %v592
  %v619 = vmax.f32 %v425, %v594
  %v620 = vmax.f32 %v596, %v598
  %v621 = vmax.f32 %v597, %v599
  %v622 = vmax.f32 %v600, %v602
  %v623 = vmax.f32 %v601, %v603
  %v624 = vmax.f32 %v604, %v606
  %v625 = vmax.f32 %v605, %v607
  %v626 = vmax.f32 %v608, %v610
  %v627 = vmax.f32 %v609, %v611
  %v628 = vmax.f32 %v612, %v614
  %v629 = vmax.f32 %v613, %v615
  %v630 = vmax.f32 %v616, %v618
  %v631 = vmax.f32 %v617, %v619
  %v632 = vld [vmem:[%s2] sm:$0x3]
  %v634 = vlaneseq
  %v635 = vshrl.u32 %v634, 7
  %v636 = vsub.s32 0, %v635
  %v637 = vrot.slane %v632, %v636
  %v638 = vlaneseq
  %v639 = vshrl.u32 %v638, 7
  %v640 = vsub.s32 1, %v639
  %v641 = vrot.slane %v632, %v640
  %v644 = vadd.f32 %v620, %v637
  %v645 = vadd.f32 %v621, %v641
  %v646 = vadd.f32 %v622, %v637
  %v647 = vadd.f32 %v623, %v641
  %v648 = vadd.f32 %v624, %v637
  %v649 = vadd.f32 %v625, %v641
  %v650 = vadd.f32 %v626, %v637
  %v651 = vadd.f32 %v627, %v641
  %v652 = vadd.f32 %v628, %v637
  %v653 = vadd.f32 %v629, %v641
  %v654 = vadd.f32 %v630, %v637
  %v655 = vadd.f32 %v631, %v641
  %v656 = vmax.f32 %v644, 0.0
  %v657 = vmax.f32 %v645, 0.0
  %v658 = vmax.f32 %v646, 0.0
  %v659 = vmax.f32 %v647, 0.0
  %v660 = vmax.f32 %v648, 0.0
  %v661 = vmax.f32 %v649, 0.0
  %v662 = vmax.f32 %v650, 0.0
  %v663 = vmax.f32 %v651, 0.0
  %v664 = vmax.f32 %v652, 0.0
  %v665 = vmax.f32 %v653, 0.0
  %v666 = vmax.f32 %v654, 0.0
  %v667 = vmax.f32 %v655, 0.0
  %v668 = vpack.c.bf16 %v658, %v656
  %v669 = vpack.c.bf16 %v659, %v657
  %v670 = vpack.c.bf16 %v662, %v660
  %v671 = vpack.c.bf16 %v663, %v661
  %v672 = vpack.c.bf16 %v666, %v664
  %v673 = vpack.c.bf16 %v667, %v665
  %s674 = scalar_lea.vmem %s0, 96
  %v675 = vld [vmem:[%s674] sm:$0xff]
  %v676 = vld [vmem:[%s674 + $0x8] sm:$0xff]
  %v677 = vld [vmem:[%s674 + $0x10] sm:$0xff]
  %v678 = vld [vmem:[%s674 + $0x18] sm:$0xff]
  %v679 = vld [vmem:[%s674 + $0x20] sm:$0xff]
  %v680 = vld [vmem:[%s674 + $0x28] sm:$0xff]
  %v687 = vunpack.c.l.b16 %v675
  %v688 = vunpack.c.h.b16 %v675
  %v689 = vunpack.c.l.b16 %v676
  %v690 = vunpack.c.h.b16 %v676
  %v691 = vunpack.c.l.b16 %v677
  %v692 = vunpack.c.h.b16 %v677
  %v693 = vunpack.c.l.b16 %v678
  %v694 = vunpack.c.h.b16 %v678
  %v695 = vunpack.c.l.b16 %v679
  %v696 = vunpack.c.h.b16 %v679
  %v697 = vunpack.c.l.b16 %v680
  %v698 = vunpack.c.h.b16 %v680
  %v699 = vpack.c.b16 %v689, %v687
  %v700 = vpack.c.b16 %v690, %v688
  %v701 = vpack.c.b16 %v693, %v691
  %v702 = vpack.c.b16 %v694, %v692
  %v703 = vpack.c.b16 %v697, %v695
  %v704 = vpack.c.b16 %v698, %v696
  %v709 = vsel %vm278, %v700, 0
  %v712 = vsel %vm278, %v702, 0
  %v715 = vsel %vm278, %v704, 0
  %717 = vmatprep.subr.bf16.mxu0 %v239
  %718 = vmatpush1.bf16.msra.mxu0 %v238
  %719 = vmatprep.subr.bf16.mxu0 %v235
  %720 = vmatpush1.bf16.msra.mxu0 %v234
  %721 = vmatprep.subr.bf16.mxu0 %v231
  %722 = vmatpush1.bf16.msra.mxu0 %v230
  %723 = vmatprep.subr.bf16.mxu0 %v227
  %724 = vmatpush1.bf16.msra.mxu0 %v226
  %725 = vmatprep.subr.bf16.mxu0 %v223
  %726 = vmatpush1.bf16.msra.mxu0 %v222
  %727 = vmatprep.subr.bf16.mxu0 %v219
  %728 = vmatpush1.bf16.msra.mxu0 %v218
  %729 = vmatprep.subr.bf16.mxu0 %v215
  %730 = vmatpush1.bf16.msra.mxu0 %v214
  %731 = vmatprep.subr.bf16.mxu0 %v211
  %732 = vmatpush1.bf16.msra.mxu0 %v210
  %733 = vmatprep.subr.bf16.mxu0 0
  %734 = vmatpush2.bf16.msra.mxu0 0
  %735 = vmatprep.subr.bf16.mxu0 0
  %736 = vmatpush2.bf16.msra.mxu0 0
  %737 = vmatprep.subr.bf16.mxu0 0
  %738 = vmatpush2.bf16.msra.mxu0 0
  %739 = vmatprep.subr.bf16.mxu0 0
  %740 = vmatpush2.bf16.msra.mxu0 0
  %741 = vmatprep.subr.bf16.mxu0 0
  %742 = vmatpush2.bf16.msra.mxu0 0
  %743 = vmatprep.subr.bf16.mxu0 0
  %744 = vmatpush2.bf16.msra.mxu0 0
  %745 = vmatprep.subr.bf16.mxu0 0
  %746 = vmatpush2.bf16.msra.mxu0 0
  %747 = vmatprep.subr.bf16.mxu0 %v293
  %748 = vmatpush2.bf16.msra.mxu0 %v290
  %749 = vmatprep.mubr.bf16.mxu0 %v709
  %750 = vmatmul.mubr.bf16.gmra.mxu0 %v699
  %v751 = vpop.f32.mrf.mxu0
  %v752 = vadd.f32 0.0, %v751
  %v753 = vpop.f32.mrf.mxu0
  %v754 = vadd.f32 0.0, %v753
  %v755 = vpop.f32.mrf.mxu0
  %v756 = vadd.f32 0.0, %v755
  %v757 = vpop.f32.mrf.mxu0
  %v758 = vadd.f32 0.0, %v757
  %759 = vmatprep.mubr.bf16.mxu0 %v712
  %760 = vmatmul.mubr.bf16.gmra.mxu0 %v701
  %v761 = vpop.f32.mrf.mxu0
  %v762 = vadd.f32 0.0, %v761
  %v763 = vpop.f32.mrf.mxu0
  %v764 = vadd.f32 0.0, %v763
  %v765 = vpop.f32.mrf.mxu0
  %v766 = vadd.f32 0.0, %v765
  %v767 = vpop.f32.mrf.mxu0
  %v768 = vadd.f32 0.0, %v767
  %769 = vmatprep.mubr.bf16.mxu0 %v715
  %770 = vmatmul.mubr.bf16.gmra.mxu0 %v703
  %v771 = vpop.f32.mrf.mxu0
  %v772 = vadd.f32 0.0, %v771
  %v773 = vpop.f32.mrf.mxu0
  %v774 = vadd.f32 0.0, %v773
  %v775 = vpop.f32.mrf.mxu0
  %v776 = vadd.f32 0.0, %v775
  %v777 = vpop.f32.mrf.mxu0
  %v778 = vadd.f32 0.0, %v777
  %779 = vdwg.mxu0
  %780 = vmatprep.subr.bf16.mxu0 %v241
  %781 = vmatpush1.bf16.msra.mxu0 %v240
  %782 = vmatprep.subr.bf16.mxu0 %v237
  %783 = vmatpush1.bf16.msra.mxu0 %v236
  %784 = vmatprep.subr.bf16.mxu0 %v233
  %785 = vmatpush1.bf16.msra.mxu0 %v232
  %786 = vmatprep.subr.bf16.mxu0 %v229
  %787 = vmatpush1.bf16.msra.mxu0 %v228
  %788 = vmatprep.subr.bf16.mxu0 %v225
  %789 = vmatpush1.bf16.msra.mxu0 %v224
  %790 = vmatprep.subr.bf16.mxu0 %v221
  %791 = vmatpush1.bf16.msra.mxu0 %v220
  %792 = vmatprep.subr.bf16.mxu0 %v217
  %793 = vmatpush1.bf16.msra.mxu0 %v216
  %794 = vmatprep.subr.bf16.mxu0 %v213
  %795 = vmatpush1.bf16.msra.mxu0 %v212
  %796 = vmatprep.subr.bf16.mxu0 0
  %797 = vmatpush2.bf16.msra.mxu0 0
  %798 = vmatprep.subr.bf16.mxu0 0
  %799 = vmatpush2.bf16.msra.mxu0 0
  %800 = vmatprep.subr.bf16.mxu0 0
  %801 = vmatpush2.bf16.msra.mxu0 0
  %802 = vmatprep.subr.bf16.mxu0 0
  %803 = vmatpush2.bf16.msra.mxu0 0
  %804 = vmatprep.subr.bf16.mxu0 0
  %805 = vmatpush2.bf16.msra.mxu0 0
  %806 = vmatprep.subr.bf16.mxu0 0
  %807 = vmatpush2.bf16.msra.mxu0 0
  %808 = vmatprep.subr.bf16.mxu0 0
  %809 = vmatpush2.bf16.msra.mxu0 0
  %810 = vmatprep.subr.bf16.mxu0 %v299
  %811 = vmatpush2.bf16.msra.mxu0 %v296
  %812 = vmatprep.mubr.bf16.mxu0 %v709
  %813 = vmatmul.mubr.bf16.gmra.mxu0 %v699
  %v814 = vpop.f32.mrf.mxu0
  %v815 = vadd.f32 0.0, %v814
  %v816 = vpop.f32.mrf.mxu0
  %v817 = vadd.f32 0.0, %v816
  %v818 = vpop.f32.mrf.mxu0
  %v819 = vadd.f32 0.0, %v818
  %v820 = vpop.f32.mrf.mxu0
  %v821 = vadd.f32 0.0, %v820
  %822 = vmatprep.mubr.bf16.mxu0 %v712
  %823 = vmatmul.mubr.bf16.gmra.mxu0 %v701
  %v824 = vpop.f32.mrf.mxu0
  %v825 = vadd.f32 0.0, %v824
  %v826 = vpop.f32.mrf.mxu0
  %v827 = vadd.f32 0.0, %v826
  %v828 = vpop.f32.mrf.mxu0
  %v829 = vadd.f32 0.0, %v828
  %v830 = vpop.f32.mrf.mxu0
  %v831 = vadd.f32 0.0, %v830
  %832 = vmatprep.mubr.bf16.mxu0 %v715
  %833 = vmatmul.mubr.bf16.gmra.mxu0 %v703
  %v834 = vpop.f32.mrf.mxu0
  %v835 = vadd.f32 0.0, %v834
  %v836 = vpop.f32.mrf.mxu0
  %v837 = vadd.f32 0.0, %v836
  %v838 = vpop.f32.mrf.mxu0
  %v839 = vadd.f32 0.0, %v838
  %v840 = vpop.f32.mrf.mxu0
  %v841 = vadd.f32 0.0, %v840
  %842 = vdwg.mxu0
  %s843 = scalar_lea.vmem %s0, 144
  %v844 = vld [vmem:[%s843] sm:$0xff]
  %v845 = vld [vmem:[%s843 + $0x8] sm:$0xff]
  %v846 = vld [vmem:[%s843 + $0x10] sm:$0xff]
  %v847 = vld [vmem:[%s843 + $0x18] sm:$0xff]
  %v848 = vld [vmem:[%s843 + $0x20] sm:$0xff]
  %v849 = vld [vmem:[%s843 + $0x28] sm:$0xff]
  %v856 = vunpack.c.l.b16 %v844
  %v857 = vunpack.c.h.b16 %v844
  %v858 = vunpack.c.l.b16 %v845
  %v859 = vunpack.c.h.b16 %v845
  %v860 = vunpack.c.l.b16 %v846
  %v861 = vunpack.c.h.b16 %v846
  %v862 = vunpack.c.l.b16 %v847
  %v863 = vunpack.c.h.b16 %v847
  %v864 = vunpack.c.l.b16 %v848
  %v865 = vunpack.c.h.b16 %v848
  %v866 = vunpack.c.l.b16 %v849
  %v867 = vunpack.c.h.b16 %v849
  %v868 = vpack.c.b16 %v858, %v856
  %v869 = vpack.c.b16 %v859, %v857
  %v870 = vpack.c.b16 %v862, %v860
  %v871 = vpack.c.b16 %v863, %v861
  %v872 = vpack.c.b16 %v866, %v864
  %v873 = vpack.c.b16 %v867, %v865
  %v878 = vsel %vm278, %v869, 0
  %v881 = vsel %vm278, %v871, 0
  %v884 = vsel %vm278, %v873, 0
  %886 = vmatprep.subr.bf16.mxu0 %v239
  %887 = vmatpush1.bf16.msra.mxu0 %v238
  %888 = vmatprep.subr.bf16.mxu0 %v235
  %889 = vmatpush1.bf16.msra.mxu0 %v234
  %890 = vmatprep.subr.bf16.mxu0 %v231
  %891 = vmatpush1.bf16.msra.mxu0 %v230
  %892 = vmatprep.subr.bf16.mxu0 %v227
  %893 = vmatpush1.bf16.msra.mxu0 %v226
  %894 = vmatprep.subr.bf16.mxu0 %v223
  %895 = vmatpush1.bf16.msra.mxu0 %v222
  %896 = vmatprep.subr.bf16.mxu0 %v219
  %897 = vmatpush1.bf16.msra.mxu0 %v218
  %898 = vmatprep.subr.bf16.mxu0 %v215
  %899 = vmatpush1.bf16.msra.mxu0 %v214
  %900 = vmatprep.subr.bf16.mxu0 %v211
  %901 = vmatpush1.bf16.msra.mxu0 %v210
  %902 = vmatprep.subr.bf16.mxu0 0
  %903 = vmatpush2.bf16.msra.mxu0 0
  %904 = vmatprep.subr.bf16.mxu0 0
  %905 = vmatpush2.bf16.msra.mxu0 0
  %906 = vmatprep.subr.bf16.mxu0 0
  %907 = vmatpush2.bf16.msra.mxu0 0
  %908 = vmatprep.subr.bf16.mxu0 0
  %909 = vmatpush2.bf16.msra.mxu0 0
  %910 = vmatprep.subr.bf16.mxu0 0
  %911 = vmatpush2.bf16.msra.mxu0 0
  %912 = vmatprep.subr.bf16.mxu0 0
  %913 = vmatpush2.bf16.msra.mxu0 0
  %914 = vmatprep.subr.bf16.mxu0 0
  %915 = vmatpush2.bf16.msra.mxu0 0
  %916 = vmatprep.subr.bf16.mxu0 %v293
  %917 = vmatpush2.bf16.msra.mxu0 %v290
  %918 = vmatprep.mubr.bf16.mxu0 %v878
  %919 = vmatmul.mubr.bf16.gmra.mxu0 %v868
  %v920 = vpop.f32.mrf.mxu0
  %v921 = vadd.f32 0.0, %v920
  %v922 = vpop.f32.mrf.mxu0
  %v923 = vadd.f32 0.0, %v922
  %v924 = vpop.f32.mrf.mxu0
  %v925 = vadd.f32 0.0, %v924
  %v926 = vpop.f32.mrf.mxu0
  %v927 = vadd.f32 0.0, %v926
  %928 = vmatprep.mubr.bf16.mxu0 %v881
  %929 = vmatmul.mubr.bf16.gmra.mxu0 %v870
  %v930 = vpop.f32.mrf.mxu0
  %v931 = vadd.f32 0.0, %v930
  %v932 = vpop.f32.mrf.mxu0
  %v933 = vadd.f32 0.0, %v932
  %v934 = vpop.f32.mrf.mxu0
  %v935 = vadd.f32 0.0, %v934
  %v936 = vpop.f32.mrf.mxu0
  %v937 = vadd.f32 0.0, %v936
  %938 = vmatprep.mubr.bf16.mxu0 %v884
  %939 = vmatmul.mubr.bf16.gmra.mxu0 %v872
  %v940 = vpop.f32.mrf.mxu0
  %v941 = vadd.f32 0.0, %v940
  %v942 = vpop.f32.mrf.mxu0
  %v943 = vadd.f32 0.0, %v942
  %v944 = vpop.f32.mrf.mxu0
  %v945 = vadd.f32 0.0, %v944
  %v946 = vpop.f32.mrf.mxu0
  %v947 = vadd.f32 0.0, %v946
  %948 = vdwg.mxu0
  %949 = vmatprep.subr.bf16.mxu0 %v241
  %950 = vmatpush1.bf16.msra.mxu0 %v240
  %951 = vmatprep.subr.bf16.mxu0 %v237
  %952 = vmatpush1.bf16.msra.mxu0 %v236
  %953 = vmatprep.subr.bf16.mxu0 %v233
  %954 = vmatpush1.bf16.msra.mxu0 %v232
  %955 = vmatprep.subr.bf16.mxu0 %v229
  %956 = vmatpush1.bf16.msra.mxu0 %v228
  %957 = vmatprep.subr.bf16.mxu0 %v225
  %958 = vmatpush1.bf16.msra.mxu0 %v224
  %959 = vmatprep.subr.bf16.mxu0 %v221
  %960 = vmatpush1.bf16.msra.mxu0 %v220
  %961 = vmatprep.subr.bf16.mxu0 %v217
  %962 = vmatpush1.bf16.msra.mxu0 %v216
  %963 = vmatprep.subr.bf16.mxu0 %v213
  %964 = vmatpush1.bf16.msra.mxu0 %v212
  %965 = vmatprep.subr.bf16.mxu0 0
  %966 = vmatpush2.bf16.msra.mxu0 0
  %967 = vmatprep.subr.bf16.mxu0 0
  %968 = vmatpush2.bf16.msra.mxu0 0
  %969 = vmatprep.subr.bf16.mxu0 0
  %970 = vmatpush2.bf16.msra.mxu0 0
  %971 = vmatprep.subr.bf16.mxu0 0
  %972 = vmatpush2.bf16.msra.mxu0 0
  %973 = vmatprep.subr.bf16.mxu0 0
  %974 = vmatpush2.bf16.msra.mxu0 0
  %975 = vmatprep.subr.bf16.mxu0 0
  %976 = vmatpush2.bf16.msra.mxu0 0
  %977 = vmatprep.subr.bf16.mxu0 0
  %978 = vmatpush2.bf16.msra.mxu0 0
  %979 = vmatprep.subr.bf16.mxu0 %v299
  %980 = vmatpush2.bf16.msra.mxu0 %v296
  %981 = vmatprep.mubr.bf16.mxu0 %v878
  %982 = vmatmul.mubr.bf16.gmra.mxu0 %v868
  %v983 = vpop.f32.mrf.mxu0
  %v984 = vadd.f32 0.0, %v983
  %v985 = vpop.f32.mrf.mxu0
  %v986 = vadd.f32 0.0, %v985
  %v987 = vpop.f32.mrf.mxu0
  %v988 = vadd.f32 0.0, %v987
  %v989 = vpop.f32.mrf.mxu0
  %v990 = vadd.f32 0.0, %v989
  %991 = vmatprep.mubr.bf16.mxu0 %v881
  %992 = vmatmul.mubr.bf16.gmra.mxu0 %v870
  %v993 = vpop.f32.mrf.mxu0
  %v994 = vadd.f32 0.0, %v993
  %v995 = vpop.f32.mrf.mxu0
  %v996 = vadd.f32 0.0, %v995
  %v997 = vpop.f32.mrf.mxu0
  %v998 = vadd.f32 0.0, %v997
  %v999 = vpop.f32.mrf.mxu0
  %v1000 = vadd.f32 0.0, %v999
  %1001 = vmatprep.mubr.bf16.mxu0 %v884
  %1002 = vmatmul.mubr.bf16.gmra.mxu0 %v872
  %v1003 = vpop.f32.mrf.mxu0
  %v1004 = vadd.f32 0.0, %v1003
  %v1005 = vpop.f32.mrf.mxu0
  %v1006 = vadd.f32 0.0, %v1005
  %v1007 = vpop.f32.mrf.mxu0
  %v1008 = vadd.f32 0.0, %v1007
  %v1009 = vpop.f32.mrf.mxu0
  %v1010 = vadd.f32 0.0, %v1009
  %1011 = vdwg.mxu0
  %v1012 = vmax.f32 %v752, %v921
  %v1013 = vmax.f32 %v754, %v923
  %v1014 = vmax.f32 %v815, %v984
  %v1015 = vmax.f32 %v817, %v986
  %v1016 = vmax.f32 %v756, %v925
  %v1017 = vmax.f32 %v758, %v927
  %v1018 = vmax.f32 %v819, %v988
  %v1019 = vmax.f32 %v821, %v990
  %v1020 = vmax.f32 %v762, %v931
  %v1021 = vmax.f32 %v764, %v933
  %v1022 = vmax.f32 %v825, %v994
  %v1023 = vmax.f32 %v827, %v996
  %v1024 = vmax.f32 %v766, %v935
  %v1025 = vmax.f32 %v768, %v937
  %v1026 = vmax.f32 %v829, %v998
  %v1027 = vmax.f32 %v831, %v1000
  %v1028 = vmax.f32 %v772, %v941
  %v1029 = vmax.f32 %v774, %v943
  %v1030 = vmax.f32 %v835, %v1004
  %v1031 = vmax.f32 %v837, %v1006
  %v1032 = vmax.f32 %v776, %v945
  %v1033 = vmax.f32 %v778, %v947
  %v1034 = vmax.f32 %v839, %v1008
  %v1035 = vmax.f32 %v841, %v1010
  %v1036 = vmax.f32 %v1012, %v1014
  %v1037 = vmax.f32 %v1013, %v1015
  %v1038 = vmax.f32 %v1016, %v1018
  %v1039 = vmax.f32 %v1017, %v1019
  %v1040 = vmax.f32 %v1020, %v1022
  %v1041 = vmax.f32 %v1021, %v1023
  %v1042 = vmax.f32 %v1024, %v1026
  %v1043 = vmax.f32 %v1025, %v1027
  %v1044 = vmax.f32 %v1028, %v1030
  %v1045 = vmax.f32 %v1029, %v1031
  %v1046 = vmax.f32 %v1032, %v1034
  %v1047 = vmax.f32 %v1033, %v1035
  %v1048 = vadd.f32 %v1036, %v637
  %v1049 = vadd.f32 %v1037, %v641
  %v1050 = vadd.f32 %v1038, %v637
  %v1051 = vadd.f32 %v1039, %v641
  %v1052 = vadd.f32 %v1040, %v637
  %v1053 = vadd.f32 %v1041, %v641
  %v1054 = vadd.f32 %v1042, %v637
  %v1055 = vadd.f32 %v1043, %v641
  %v1056 = vadd.f32 %v1044, %v637
  %v1057 = vadd.f32 %v1045, %v641
  %v1058 = vadd.f32 %v1046, %v637
  %v1059 = vadd.f32 %v1047, %v641
  %v1060 = vmax.f32 %v1048, 0.0
  %v1061 = vmax.f32 %v1049, 0.0
  %v1062 = vmax.f32 %v1050, 0.0
  %v1063 = vmax.f32 %v1051, 0.0
  %v1064 = vmax.f32 %v1052, 0.0
  %v1065 = vmax.f32 %v1053, 0.0
  %v1066 = vmax.f32 %v1054, 0.0
  %v1067 = vmax.f32 %v1055, 0.0
  %v1068 = vmax.f32 %v1056, 0.0
  %v1069 = vmax.f32 %v1057, 0.0
  %v1070 = vmax.f32 %v1058, 0.0
  %v1071 = vmax.f32 %v1059, 0.0
  %v1072 = vpack.c.bf16 %v1062, %v1060
  %v1073 = vpack.c.bf16 %v1063, %v1061
  %v1074 = vpack.c.bf16 %v1066, %v1064
  %v1075 = vpack.c.bf16 %v1067, %v1065
  %v1076 = vpack.c.bf16 %v1070, %v1068
  %v1077 = vpack.c.bf16 %v1071, %v1069
  %v1078 = vld [vmem:[%s3] sm:$0xff]
  %v1079 = vld [vmem:[%s3 + $0x8] sm:$0xff]
  %v1080 = vld [vmem:[%s3 + $0x10] sm:$0xff]
  %v1081 = vld [vmem:[%s3 + $0x18] sm:$0xff]
  %v1082 = vld [vmem:[%s3 + $0x20] sm:$0xff]
  %v1083 = vld [vmem:[%s3 + $0x28] sm:$0xff]
  %v1084 = vld [vmem:[%s3 + $0x30] sm:$0xff]
  %v1085 = vld [vmem:[%s3 + $0x38] sm:$0xff]
  %v1086 = vld [vmem:[%s3 + $0x40] sm:$0xff]
  %v1087 = vld [vmem:[%s3 + $0x48] sm:$0xff]
  %v1088 = vld [vmem:[%s3 + $0x50] sm:$0xff]
  %v1089 = vld [vmem:[%s3 + $0x58] sm:$0xff]
  %v1090 = vld [vmem:[%s3 + $0x60] sm:$0xff]
  %v1091 = vld [vmem:[%s3 + $0x68] sm:$0xff]
  %v1092 = vld [vmem:[%s3 + $0x70] sm:$0xff]
  %v1093 = vld [vmem:[%s3 + $0x78] sm:$0xff]
  %v1094 = vld [vmem:[%s3 + $0x80] sm:$0xff]
  %v1095 = vld [vmem:[%s3 + $0x88] sm:$0xff]
  %v1096 = vld [vmem:[%s3 + $0x90] sm:$0xff]
  %v1097 = vld [vmem:[%s3 + $0x98] sm:$0xff]
  %v1098 = vld [vmem:[%s3 + $0xa0] sm:$0xff]
  %v1099 = vld [vmem:[%s3 + $0xa8] sm:$0xff]
  %v1100 = vld [vmem:[%s3 + $0xb0] sm:$0xff]
  %v1101 = vld [vmem:[%s3 + $0xb8] sm:$0xff]
  %v1102 = vld [vmem:[%s3 + $0xc0] sm:$0xff]
  %v1103 = vld [vmem:[%s3 + $0xc8] sm:$0xff]
  %v1104 = vld [vmem:[%s3 + $0xd0] sm:$0xff]
  %v1105 = vld [vmem:[%s3 + $0xd8] sm:$0xff]
  %v1106 = vld [vmem:[%s3 + $0xe0] sm:$0xff]
  %v1107 = vld [vmem:[%s3 + $0xe8] sm:$0xff]
  %v1108 = vld [vmem:[%s3 + $0xf0] sm:$0xff]
  %v1109 = vld [vmem:[%s3 + $0xf8] sm:$0xff]
  %v1110 = vld [vmem:[%s3 + $0x100] sm:$0xff]
  %v1111 = vld [vmem:[%s3 + $0x108] sm:$0xff]
  %v1112 = vld [vmem:[%s3 + $0x110] sm:$0xff]
  %v1113 = vld [vmem:[%s3 + $0x118] sm:$0xff]
  %v1114 = vld [vmem:[%s3 + $0x120] sm:$0xff]
  %v1115 = vld [vmem:[%s3 + $0x128] sm:$0xff]
  %v1116 = vld [vmem:[%s3 + $0x130] sm:$0xff]
  %v1117 = vld [vmem:[%s3 + $0x138] sm:$0xff]
  %v1118 = vld [vmem:[%s3 + $0x140] sm:$0xff]
  %v1119 = vld [vmem:[%s3 + $0x148] sm:$0xff]
  %v1120 = vld [vmem:[%s3 + $0x150] sm:$0xff]
  %v1121 = vld [vmem:[%s3 + $0x158] sm:$0xff]
  %v1122 = vld [vmem:[%s3 + $0x160] sm:$0xff]
  %v1123 = vld [vmem:[%s3 + $0x168] sm:$0xff]
  %v1124 = vld [vmem:[%s3 + $0x170] sm:$0xff]
  %v1125 = vld [vmem:[%s3 + $0x178] sm:$0xff]
  %v1126 = vld [vmem:[%s3 + $0x180] sm:$0xff]
  %v1127 = vld [vmem:[%s3 + $0x188] sm:$0xff]
  %v1128 = vld [vmem:[%s3 + $0x190] sm:$0xff]
  %v1129 = vld [vmem:[%s3 + $0x198] sm:$0xff]
  %v1130 = vld [vmem:[%s3 + $0x1a0] sm:$0xff]
  %v1131 = vld [vmem:[%s3 + $0x1a8] sm:$0xff]
  %v1132 = vld [vmem:[%s3 + $0x1b0] sm:$0xff]
  %v1133 = vld [vmem:[%s3 + $0x1b8] sm:$0xff]
  %v1134 = vld [vmem:[%s3 + $0x1c0] sm:$0xff]
  %v1135 = vld [vmem:[%s3 + $0x1c8] sm:$0xff]
  %v1136 = vld [vmem:[%s3 + $0x1d0] sm:$0xff]
  %v1137 = vld [vmem:[%s3 + $0x1d8] sm:$0xff]
  %v1138 = vld [vmem:[%s3 + $0x1e0] sm:$0xff]
  %v1139 = vld [vmem:[%s3 + $0x1e8] sm:$0xff]
  %v1140 = vld [vmem:[%s3 + $0x1f0] sm:$0xff]
  %v1141 = vld [vmem:[%s3 + $0x1f8] sm:$0xff]
  %s1142 = scalar_lea.vmem %s3, 512
  %v1143 = vld [vmem:[%s1142] sm:$0xff]
  %v1144 = vld [vmem:[%s1142 + $0x8] sm:$0xff]
  %v1145 = vld [vmem:[%s1142 + $0x10] sm:$0xff]
  %v1146 = vld [vmem:[%s1142 + $0x18] sm:$0xff]
  %v1147 = vld [vmem:[%s1142 + $0x20] sm:$0xff]
  %v1148 = vld [vmem:[%s1142 + $0x28] sm:$0xff]
  %v1149 = vld [vmem:[%s1142 + $0x30] sm:$0xff]
  %v1150 = vld [vmem:[%s1142 + $0x38] sm:$0xff]
  %v1151 = vld [vmem:[%s1142 + $0x40] sm:$0xff]
  %v1152 = vld [vmem:[%s1142 + $0x48] sm:$0xff]
  %v1153 = vld [vmem:[%s1142 + $0x50] sm:$0xff]
  %v1154 = vld [vmem:[%s1142 + $0x58] sm:$0xff]
  %v1155 = vld [vmem:[%s1142 + $0x60] sm:$0xff]
  %v1156 = vld [vmem:[%s1142 + $0x68] sm:$0xff]
  %v1157 = vld [vmem:[%s1142 + $0x70] sm:$0xff]
  %v1158 = vld [vmem:[%s1142 + $0x78] sm:$0xff]
  %v1159 = vld [vmem:[%s1142 + $0x80] sm:$0xff]
  %v1160 = vld [vmem:[%s1142 + $0x88] sm:$0xff]
  %v1161 = vld [vmem:[%s1142 + $0x90] sm:$0xff]
  %v1162 = vld [vmem:[%s1142 + $0x98] sm:$0xff]
  %v1163 = vld [vmem:[%s1142 + $0xa0] sm:$0xff]
  %v1164 = vld [vmem:[%s1142 + $0xa8] sm:$0xff]
  %v1165 = vld [vmem:[%s1142 + $0xb0] sm:$0xff]
  %v1166 = vld [vmem:[%s1142 + $0xb8] sm:$0xff]
  %v1167 = vld [vmem:[%s1142 + $0xc0] sm:$0xff]
  %v1168 = vld [vmem:[%s1142 + $0xc8] sm:$0xff]
  %v1169 = vld [vmem:[%s1142 + $0xd0] sm:$0xff]
  %v1170 = vld [vmem:[%s1142 + $0xd8] sm:$0xff]
  %v1171 = vld [vmem:[%s1142 + $0xe0] sm:$0xff]
  %v1172 = vld [vmem:[%s1142 + $0xe8] sm:$0xff]
  %v1173 = vld [vmem:[%s1142 + $0xf0] sm:$0xff]
  %v1174 = vld [vmem:[%s1142 + $0xf8] sm:$0xff]
  %v1175 = vld [vmem:[%s1142 + $0x100] sm:$0xff]
  %v1176 = vld [vmem:[%s1142 + $0x108] sm:$0xff]
  %v1177 = vld [vmem:[%s1142 + $0x110] sm:$0xff]
  %v1178 = vld [vmem:[%s1142 + $0x118] sm:$0xff]
  %v1179 = vld [vmem:[%s1142 + $0x120] sm:$0xff]
  %v1180 = vld [vmem:[%s1142 + $0x128] sm:$0xff]
  %v1181 = vld [vmem:[%s1142 + $0x130] sm:$0xff]
  %v1182 = vld [vmem:[%s1142 + $0x138] sm:$0xff]
  %v1183 = vld [vmem:[%s1142 + $0x140] sm:$0xff]
  %v1184 = vld [vmem:[%s1142 + $0x148] sm:$0xff]
  %v1185 = vld [vmem:[%s1142 + $0x150] sm:$0xff]
  %v1186 = vld [vmem:[%s1142 + $0x158] sm:$0xff]
  %v1187 = vld [vmem:[%s1142 + $0x160] sm:$0xff]
  %v1188 = vld [vmem:[%s1142 + $0x168] sm:$0xff]
  %v1189 = vld [vmem:[%s1142 + $0x170] sm:$0xff]
  %v1190 = vld [vmem:[%s1142 + $0x178] sm:$0xff]
  %v1191 = vld [vmem:[%s1142 + $0x180] sm:$0xff]
  %v1192 = vld [vmem:[%s1142 + $0x188] sm:$0xff]
  %v1193 = vld [vmem:[%s1142 + $0x190] sm:$0xff]
  %v1194 = vld [vmem:[%s1142 + $0x198] sm:$0xff]
  %v1195 = vld [vmem:[%s1142 + $0x1a0] sm:$0xff]
  %v1196 = vld [vmem:[%s1142 + $0x1a8] sm:$0xff]
  %v1197 = vld [vmem:[%s1142 + $0x1b0] sm:$0xff]
  %v1198 = vld [vmem:[%s1142 + $0x1b8] sm:$0xff]
  %v1199 = vld [vmem:[%s1142 + $0x1c0] sm:$0xff]
  %v1200 = vld [vmem:[%s1142 + $0x1c8] sm:$0xff]
  %v1201 = vld [vmem:[%s1142 + $0x1d0] sm:$0xff]
  %v1202 = vld [vmem:[%s1142 + $0x1d8] sm:$0xff]
  %v1203 = vld [vmem:[%s1142 + $0x1e0] sm:$0xff]
  %v1204 = vld [vmem:[%s1142 + $0x1e8] sm:$0xff]
  %v1205 = vld [vmem:[%s1142 + $0x1f0] sm:$0xff]
  %v1206 = vld [vmem:[%s1142 + $0x1f8] sm:$0xff]
  %v1271 = vunpack.c.l.b16 %v1143
  %v1272 = vunpack.c.h.b16 %v1143
  %v1273 = vunpack.c.l.b16 %v1144
  %v1274 = vunpack.c.h.b16 %v1144
  %v1275 = vunpack.c.l.b16 %v1145
  %v1276 = vunpack.c.h.b16 %v1145
  %v1277 = vunpack.c.l.b16 %v1146
  %v1278 = vunpack.c.h.b16 %v1146
  %v1279 = vunpack.c.l.b16 %v1147
  %v1280 = vunpack.c.h.b16 %v1147
  %v1281 = vunpack.c.l.b16 %v1148
  %v1282 = vunpack.c.h.b16 %v1148
  %v1283 = vunpack.c.l.b16 %v1149
  %v1284 = vunpack.c.h.b16 %v1149
  %v1285 = vunpack.c.l.b16 %v1150
  %v1286 = vunpack.c.h.b16 %v1150
  %v1287 = vunpack.c.l.b16 %v1151
  %v1288 = vunpack.c.h.b16 %v1151
  %v1289 = vunpack.c.l.b16 %v1152
  %v1290 = vunpack.c.h.b16 %v1152
  %v1291 = vunpack.c.l.b16 %v1153
  %v1292 = vunpack.c.h.b16 %v1153
  %v1293 = vunpack.c.l.b16 %v1154
  %v1294 = vunpack.c.h.b16 %v1154
  %v1295 = vunpack.c.l.b16 %v1155
  %v1296 = vunpack.c.h.b16 %v1155
  %v1297 = vunpack.c.l.b16 %v1156
  %v1298 = vunpack.c.h.b16 %v1156
  %v1299 = vunpack.c.l.b16 %v1157
  %v1300 = vunpack.c.h.b16 %v1157
  %v1301 = vunpack.c.l.b16 %v1158
  %v1302 = vunpack.c.h.b16 %v1158
  %v1303 = vunpack.c.l.b16 %v1159
  %v1304 = vunpack.c.h.b16 %v1159
  %v1305 = vunpack.c.l.b16 %v1160
  %v1306 = vunpack.c.h.b16 %v1160
  %v1307 = vunpack.c.l.b16 %v1161
  %v1308 = vunpack.c.h.b16 %v1161
  %v1309 = vunpack.c.l.b16 %v1162
  %v1310 = vunpack.c.h.b16 %v1162
  %v1311 = vunpack.c.l.b16 %v1163
  %v1312 = vunpack.c.h.b16 %v1163
  %v1313 = vunpack.c.l.b16 %v1164
  %v1314 = vunpack.c.h.b16 %v1164
  %v1315 = vunpack.c.l.b16 %v1165
  %v1316 = vunpack.c.h.b16 %v1165
  %v1317 = vunpack.c.l.b16 %v1166
  %v1318 = vunpack.c.h.b16 %v1166
  %v1319 = vunpack.c.l.b16 %v1167
  %v1320 = vunpack.c.h.b16 %v1167
  %v1321 = vunpack.c.l.b16 %v1168
  %v1322 = vunpack.c.h.b16 %v1168
  %v1323 = vunpack.c.l.b16 %v1169
  %v1324 = vunpack.c.h.b16 %v1169
  %v1325 = vunpack.c.l.b16 %v1170
  %v1326 = vunpack.c.h.b16 %v1170
  %v1327 = vunpack.c.l.b16 %v1171
  %v1328 = vunpack.c.h.b16 %v1171
  %v1329 = vunpack.c.l.b16 %v1172
  %v1330 = vunpack.c.h.b16 %v1172
  %v1331 = vunpack.c.l.b16 %v1173
  %v1332 = vunpack.c.h.b16 %v1173
  %v1333 = vunpack.c.l.b16 %v1174
  %v1334 = vunpack.c.h.b16 %v1174
  %v1335 = vunpack.c.l.b16 %v1175
  %v1336 = vunpack.c.h.b16 %v1175
  %v1337 = vunpack.c.l.b16 %v1176
  %v1338 = vunpack.c.h.b16 %v1176
  %v1339 = vunpack.c.l.b16 %v1177
  %v1340 = vunpack.c.h.b16 %v1177
  %v1341 = vunpack.c.l.b16 %v1178
  %v1342 = vunpack.c.h.b16 %v1178
  %v1343 = vunpack.c.l.b16 %v1179
  %v1344 = vunpack.c.h.b16 %v1179
  %v1345 = vunpack.c.l.b16 %v1180
  %v1346 = vunpack.c.h.b16 %v1180
  %v1347 = vunpack.c.l.b16 %v1181
  %v1348 = vunpack.c.h.b16 %v1181
  %v1349 = vunpack.c.l.b16 %v1182
  %v1350 = vunpack.c.h.b16 %v1182
  %v1351 = vunpack.c.l.b16 %v1183
  %v1352 = vunpack.c.h.b16 %v1183
  %v1353 = vunpack.c.l.b16 %v1184
  %v1354 = vunpack.c.h.b16 %v1184
  %v1355 = vunpack.c.l.b16 %v1185
  %v1356 = vunpack.c.h.b16 %v1185
  %v1357 = vunpack.c.l.b16 %v1186
  %v1358 = vunpack.c.h.b16 %v1186
  %v1359 = vunpack.c.l.b16 %v1187
  %v1360 = vunpack.c.h.b16 %v1187
  %v1361 = vunpack.c.l.b16 %v1188
  %v1362 = vunpack.c.h.b16 %v1188
  %v1363 = vunpack.c.l.b16 %v1189
  %v1364 = vunpack.c.h.b16 %v1189
  %v1365 = vunpack.c.l.b16 %v1190
  %v1366 = vunpack.c.h.b16 %v1190
  %v1367 = vunpack.c.l.b16 %v1191
  %v1368 = vunpack.c.h.b16 %v1191
  %v1369 = vunpack.c.l.b16 %v1192
  %v1370 = vunpack.c.h.b16 %v1192
  %v1371 = vunpack.c.l.b16 %v1193
  %v1372 = vunpack.c.h.b16 %v1193
  %v1373 = vunpack.c.l.b16 %v1194
  %v1374 = vunpack.c.h.b16 %v1194
  %v1375 = vunpack.c.l.b16 %v1195
  %v1376 = vunpack.c.h.b16 %v1195
  %v1377 = vunpack.c.l.b16 %v1196
  %v1378 = vunpack.c.h.b16 %v1196
  %v1379 = vunpack.c.l.b16 %v1197
  %v1380 = vunpack.c.h.b16 %v1197
  %v1381 = vunpack.c.l.b16 %v1198
  %v1382 = vunpack.c.h.b16 %v1198
  %v1383 = vunpack.c.l.b16 %v1199
  %v1384 = vunpack.c.h.b16 %v1199
  %v1385 = vunpack.c.l.b16 %v1200
  %v1386 = vunpack.c.h.b16 %v1200
  %v1387 = vunpack.c.l.b16 %v1201
  %v1388 = vunpack.c.h.b16 %v1201
  %v1389 = vunpack.c.l.b16 %v1202
  %v1390 = vunpack.c.h.b16 %v1202
  %v1391 = vunpack.c.l.b16 %v1203
  %v1392 = vunpack.c.h.b16 %v1203
  %v1393 = vunpack.c.l.b16 %v1204
  %v1394 = vunpack.c.h.b16 %v1204
  %v1395 = vunpack.c.l.b16 %v1205
  %v1396 = vunpack.c.h.b16 %v1205
  %v1397 = vunpack.c.l.b16 %v1206
  %v1398 = vunpack.c.h.b16 %v1206
  %v1399 = vpack.c.b16 %v1275, %v1271
  %v1400 = vpack.c.b16 %v1276, %v1272
  %v1401 = vpack.c.b16 %v1277, %v1273
  %v1402 = vpack.c.b16 %v1278, %v1274
  %v1403 = vpack.c.b16 %v1283, %v1279
  %v1404 = vpack.c.b16 %v1284, %v1280
  %v1405 = vpack.c.b16 %v1285, %v1281
  %v1406 = vpack.c.b16 %v1286, %v1282
  %v1407 = vpack.c.b16 %v1291, %v1287
  %v1408 = vpack.c.b16 %v1292, %v1288
  %v1409 = vpack.c.b16 %v1293, %v1289
  %v1410 = vpack.c.b16 %v1294, %v1290
  %v1411 = vpack.c.b16 %v1299, %v1295
  %v1412 = vpack.c.b16 %v1300, %v1296
  %v1413 = vpack.c.b16 %v1301, %v1297
  %v1414 = vpack.c.b16 %v1302, %v1298
  %v1415 = vpack.c.b16 %v1307, %v1303
  %v1416 = vpack.c.b16 %v1308, %v1304
  %v1417 = vpack.c.b16 %v1309, %v1305
  %v1418 = vpack.c.b16 %v1310, %v1306
  %v1419 = vpack.c.b16 %v1315, %v1311
  %v1420 = vpack.c.b16 %v1316, %v1312
  %v1421 = vpack.c.b16 %v1317, %v1313
  %v1422 = vpack.c.b16 %v1318, %v1314
  %v1423 = vpack.c.b16 %v1323, %v1319
  %v1424 = vpack.c.b16 %v1324, %v1320
  %v1425 = vpack.c.b16 %v1325, %v1321
  %v1426 = vpack.c.b16 %v1326, %v1322
  %v1427 = vpack.c.b16 %v1331, %v1327
  %v1428 = vpack.c.b16 %v1332, %v1328
  %v1429 = vpack.c.b16 %v1333, %v1329
  %v1430 = vpack.c.b16 %v1334, %v1330
  %v1431 = vpack.c.b16 %v1339, %v1335
  %v1432 = vpack.c.b16 %v1340, %v1336
  %v1433 = vpack.c.b16 %v1341, %v1337
  %v1434 = vpack.c.b16 %v1342, %v1338
  %v1435 = vpack.c.b16 %v1347, %v1343
  %v1436 = vpack.c.b16 %v1348, %v1344
  %v1437 = vpack.c.b16 %v1349, %v1345
  %v1438 = vpack.c.b16 %v1350, %v1346
  %v1439 = vpack.c.b16 %v1355, %v1351
  %v1440 = vpack.c.b16 %v1356, %v1352
  %v1441 = vpack.c.b16 %v1357, %v1353
  %v1442 = vpack.c.b16 %v1358, %v1354
  %v1443 = vpack.c.b16 %v1363, %v1359
  %v1444 = vpack.c.b16 %v1364, %v1360
  %v1445 = vpack.c.b16 %v1365, %v1361
  %v1446 = vpack.c.b16 %v1366, %v1362
  %v1447 = vpack.c.b16 %v1371, %v1367
  %v1448 = vpack.c.b16 %v1372, %v1368
  %v1449 = vpack.c.b16 %v1373, %v1369
  %v1450 = vpack.c.b16 %v1374, %v1370
  %v1451 = vpack.c.b16 %v1379, %v1375
  %v1452 = vpack.c.b16 %v1380, %v1376
  %v1453 = vpack.c.b16 %v1381, %v1377
  %v1454 = vpack.c.b16 %v1382, %v1378
  %v1455 = vpack.c.b16 %v1387, %v1383
  %v1456 = vpack.c.b16 %v1388, %v1384
  %v1457 = vpack.c.b16 %v1389, %v1385
  %v1458 = vpack.c.b16 %v1390, %v1386
  %v1459 = vpack.c.b16 %v1395, %v1391
  %v1460 = vpack.c.b16 %v1396, %v1392
  %v1461 = vpack.c.b16 %v1397, %v1393
  %v1462 = vpack.c.b16 %v1398, %v1394
  %1527 = vmatprep.subr.bf16.mxu0 %v1428
  %1528 = vmatpush1.bf16.msra.mxu0 %v1427
  %1529 = vmatprep.subr.bf16.mxu0 %v1424
  %1530 = vmatpush1.bf16.msra.mxu0 %v1423
  %1531 = vmatprep.subr.bf16.mxu0 %v1420
  %1532 = vmatpush1.bf16.msra.mxu0 %v1419
  %1533 = vmatprep.subr.bf16.mxu0 %v1416
  %1534 = vmatpush1.bf16.msra.mxu0 %v1415
  %1535 = vmatprep.subr.bf16.mxu0 %v1412
  %1536 = vmatpush1.bf16.msra.mxu0 %v1411
  %1537 = vmatprep.subr.bf16.mxu0 %v1408
  %1538 = vmatpush1.bf16.msra.mxu0 %v1407
  %1539 = vmatprep.subr.bf16.mxu0 %v1404
  %1540 = vmatpush1.bf16.msra.mxu0 %v1403
  %1541 = vmatprep.subr.bf16.mxu0 %v1400
  %1542 = vmatpush1.bf16.msra.mxu0 %v1399
  %1543 = vmatprep.subr.bf16.mxu0 %v1460
  %1544 = vmatpush2.bf16.msra.mxu0 %v1459
  %1545 = vmatprep.subr.bf16.mxu0 %v1456
  %1546 = vmatpush2.bf16.msra.mxu0 %v1455
  %1547 = vmatprep.subr.bf16.mxu0 %v1452
  %1548 = vmatpush2.bf16.msra.mxu0 %v1451
  %1549 = vmatprep.subr.bf16.mxu0 %v1448
  %1550 = vmatpush2.bf16.msra.mxu0 %v1447
  %1551 = vmatprep.subr.bf16.mxu0 %v1444
  %1552 = vmatpush2.bf16.msra.mxu0 %v1443
  %1553 = vmatprep.subr.bf16.mxu0 %v1440
  %1554 = vmatpush2.bf16.msra.mxu0 %v1439
  %1555 = vmatprep.subr.bf16.mxu0 %v1436
  %1556 = vmatpush2.bf16.msra.mxu0 %v1435
  %1557 = vmatprep.subr.bf16.mxu0 %v1432
  %1558 = vmatpush2.bf16.msra.mxu0 %v1431
  %1559 = vmatprep.mubr.bf16.mxu0 %v1073
  %1560 = vmatmul.mubr.bf16.gmra.mxu0 %v1072
  %v1561 = vpop.f32.mrf.mxu0
  %v1562 = vadd.f32 0.0, %v1561
  %v1563 = vpop.f32.mrf.mxu0
  %v1564 = vadd.f32 0.0, %v1563
  %v1565 = vpop.f32.mrf.mxu0
  %v1566 = vadd.f32 0.0, %v1565
  %v1567 = vpop.f32.mrf.mxu0
  %v1568 = vadd.f32 0.0, %v1567
  %1569 = vmatprep.mubr.bf16.mxu0 %v1075
  %1570 = vmatmul.mubr.bf16.gmra.mxu0 %v1074
  %v1571 = vpop.f32.mrf.mxu0
  %v1572 = vadd.f32 0.0, %v1571
  %v1573 = vpop.f32.mrf.mxu0
  %v1574 = vadd.f32 0.0, %v1573
  %v1575 = vpop.f32.mrf.mxu0
  %v1576 = vadd.f32 0.0, %v1575
  %v1577 = vpop.f32.mrf.mxu0
  %v1578 = vadd.f32 0.0, %v1577
  %1579 = vdwg.mxu0
  %1580 = vmatprep.subr.bf16.mxu0 %v1430
  %1581 = vmatpush1.bf16.msra.mxu0 %v1429
  %1582 = vmatprep.subr.bf16.mxu0 %v1426
  %1583 = vmatpush1.bf16.msra.mxu0 %v1425
  %1584 = vmatprep.subr.bf16.mxu0 %v1422
  %1585 = vmatpush1.bf16.msra.mxu0 %v1421
  %1586 = vmatprep.subr.bf16.mxu0 %v1418
  %1587 = vmatpush1.bf16.msra.mxu0 %v1417
  %1588 = vmatprep.subr.bf16.mxu0 %v1414
  %1589 = vmatpush1.bf16.msra.mxu0 %v1413
  %1590 = vmatprep.subr.bf16.mxu0 %v1410
  %1591 = vmatpush1.bf16.msra.mxu0 %v1409
  %1592 = vmatprep.subr.bf16.mxu0 %v1406
  %1593 = vmatpush1.bf16.msra.mxu0 %v1405
  %1594 = vmatprep.subr.bf16.mxu0 %v1402
  %1595 = vmatpush1.bf16.msra.mxu0 %v1401
  %1596 = vmatprep.subr.bf16.mxu0 %v1462
  %1597 = vmatpush2.bf16.msra.mxu0 %v1461
  %1598 = vmatprep.subr.bf16.mxu0 %v1458
  %1599 = vmatpush2.bf16.msra.mxu0 %v1457
  %1600 = vmatprep.subr.bf16.mxu0 %v1454
  %1601 = vmatpush2.bf16.msra.mxu0 %v1453
  %1602 = vmatprep.subr.bf16.mxu0 %v1450
  %1603 = vmatpush2.bf16.msra.mxu0 %v1449
  %1604 = vmatprep.subr.bf16.mxu0 %v1446
  %1605 = vmatpush2.bf16.msra.mxu0 %v1445
  %1606 = vmatprep.subr.bf16.mxu0 %v1442
  %1607 = vmatpush2.bf16.msra.mxu0 %v1441
  %1608 = vmatprep.subr.bf16.mxu0 %v1438
  %1609 = vmatpush2.bf16.msra.mxu0 %v1437
  %1610 = vmatprep.subr.bf16.mxu0 %v1434
  %1611 = vmatpush2.bf16.msra.mxu0 %v1433
  %1612 = vmatprep.mubr.bf16.mxu0 %v1073
  %1613 = vmatmul.mubr.bf16.gmra.mxu0 %v1072
  %v1614 = vpop.f32.mrf.mxu0
  %v1615 = vadd.f32 0.0, %v1614
  %v1616 = vpop.f32.mrf.mxu0
  %v1617 = vadd.f32 0.0, %v1616
  %v1618 = vpop.f32.mrf.mxu0
  %v1619 = vadd.f32 0.0, %v1618
  %v1620 = vpop.f32.mrf.mxu0
  %v1621 = vadd.f32 0.0, %v1620
  %1622 = vmatprep.mubr.bf16.mxu0 %v1075
  %1623 = vmatmul.mubr.bf16.gmra.mxu0 %v1074
  %v1624 = vpop.f32.mrf.mxu0
  %v1625 = vadd.f32 0.0, %v1624
  %v1626 = vpop.f32.mrf.mxu0
  %v1627 = vadd.f32 0.0, %v1626
  %v1628 = vpop.f32.mrf.mxu0
  %v1629 = vadd.f32 0.0, %v1628
  %v1630 = vpop.f32.mrf.mxu0
  %v1631 = vadd.f32 0.0, %v1630
  %1632 = vdwg.mxu0
  %v1697 = vunpack.c.l.b16 %v1078
  %v1698 = vunpack.c.h.b16 %v1078
  %v1699 = vunpack.c.l.b16 %v1079
  %v1700 = vunpack.c.h.b16 %v1079
  %v1701 = vunpack.c.l.b16 %v1080
  %v1702 = vunpack.c.h.b16 %v1080
  %v1703 = vunpack.c.l.b16 %v1081
  %v1704 = vunpack.c.h.b16 %v1081
  %v1705 = vunpack.c.l.b16 %v1082
  %v1706 = vunpack.c.h.b16 %v1082
  %v1707 = vunpack.c.l.b16 %v1083
  %v1708 = vunpack.c.h.b16 %v1083
  %v1709 = vunpack.c.l.b16 %v1084
  %v1710 = vunpack.c.h.b16 %v1084
  %v1711 = vunpack.c.l.b16 %v1085
  %v1712 = vunpack.c.h.b16 %v1085
  %v1713 = vunpack.c.l.b16 %v1086
  %v1714 = vunpack.c.h.b16 %v1086
  %v1715 = vunpack.c.l.b16 %v1087
  %v1716 = vunpack.c.h.b16 %v1087
  %v1717 = vunpack.c.l.b16 %v1088
  %v1718 = vunpack.c.h.b16 %v1088
  %v1719 = vunpack.c.l.b16 %v1089
  %v1720 = vunpack.c.h.b16 %v1089
  %v1721 = vunpack.c.l.b16 %v1090
  %v1722 = vunpack.c.h.b16 %v1090
  %v1723 = vunpack.c.l.b16 %v1091
  %v1724 = vunpack.c.h.b16 %v1091
  %v1725 = vunpack.c.l.b16 %v1092
  %v1726 = vunpack.c.h.b16 %v1092
  %v1727 = vunpack.c.l.b16 %v1093
  %v1728 = vunpack.c.h.b16 %v1093
  %v1729 = vunpack.c.l.b16 %v1094
  %v1730 = vunpack.c.h.b16 %v1094
  %v1731 = vunpack.c.l.b16 %v1095
  %v1732 = vunpack.c.h.b16 %v1095
  %v1733 = vunpack.c.l.b16 %v1096
  %v1734 = vunpack.c.h.b16 %v1096
  %v1735 = vunpack.c.l.b16 %v1097
  %v1736 = vunpack.c.h.b16 %v1097
  %v1737 = vunpack.c.l.b16 %v1098
  %v1738 = vunpack.c.h.b16 %v1098
  %v1739 = vunpack.c.l.b16 %v1099
  %v1740 = vunpack.c.h.b16 %v1099
  %v1741 = vunpack.c.l.b16 %v1100
  %v1742 = vunpack.c.h.b16 %v1100
  %v1743 = vunpack.c.l.b16 %v1101
  %v1744 = vunpack.c.h.b16 %v1101
  %v1745 = vunpack.c.l.b16 %v1102
  %v1746 = vunpack.c.h.b16 %v1102
  %v1747 = vunpack.c.l.b16 %v1103
  %v1748 = vunpack.c.h.b16 %v1103
  %v1749 = vunpack.c.l.b16 %v1104
  %v1750 = vunpack.c.h.b16 %v1104
  %v1751 = vunpack.c.l.b16 %v1105
  %v1752 = vunpack.c.h.b16 %v1105
  %v1753 = vunpack.c.l.b16 %v1106
  %v1754 = vunpack.c.h.b16 %v1106
  %v1755 = vunpack.c.l.b16 %v1107
  %v1756 = vunpack.c.h.b16 %v1107
  %v1757 = vunpack.c.l.b16 %v1108
  %v1758 = vunpack.c.h.b16 %v1108
  %v1759 = vunpack.c.l.b16 %v1109
  %v1760 = vunpack.c.h.b16 %v1109
  %v1761 = vunpack.c.l.b16 %v1110
  %v1762 = vunpack.c.h.b16 %v1110
  %v1763 = vunpack.c.l.b16 %v1111
  %v1764 = vunpack.c.h.b16 %v1111
  %v1765 = vunpack.c.l.b16 %v1112
  %v1766 = vunpack.c.h.b16 %v1112
  %v1767 = vunpack.c.l.b16 %v1113
  %v1768 = vunpack.c.h.b16 %v1113
  %v1769 = vunpack.c.l.b16 %v1114
  %v1770 = vunpack.c.h.b16 %v1114
  %v1771 = vunpack.c.l.b16 %v1115
  %v1772 = vunpack.c.h.b16 %v1115
  %v1773 = vunpack.c.l.b16 %v1116
  %v1774 = vunpack.c.h.b16 %v1116
  %v1775 = vunpack.c.l.b16 %v1117
  %v1776 = vunpack.c.h.b16 %v1117
  %v1777 = vunpack.c.l.b16 %v1118
  %v1778 = vunpack.c.h.b16 %v1118
  %v1779 = vunpack.c.l.b16 %v1119
  %v1780 = vunpack.c.h.b16 %v1119
  %v1781 = vunpack.c.l.b16 %v1120
  %v1782 = vunpack.c.h.b16 %v1120
  %v1783 = vunpack.c.l.b16 %v1121
  %v1784 = vunpack.c.h.b16 %v1121
  %v1785 = vunpack.c.l.b16 %v1122
  %v1786 = vunpack.c.h.b16 %v1122
  %v1787 = vunpack.c.l.b16 %v1123
  %v1788 = vunpack.c.h.b16 %v1123
  %v1789 = vunpack.c.l.b16 %v1124
  %v1790 = vunpack.c.h.b16 %v1124
  %v1791 = vunpack.c.l.b16 %v1125
  %v1792 = vunpack.c.h.b16 %v1125
  %v1793 = vunpack.c.l.b16 %v1126
  %v1794 = vunpack.c.h.b16 %v1126
  %v1795 = vunpack.c.l.b16 %v1127
  %v1796 = vunpack.c.h.b16 %v1127
  %v1797 = vunpack.c.l.b16 %v1128
  %v1798 = vunpack.c.h.b16 %v1128
  %v1799 = vunpack.c.l.b16 %v1129
  %v1800 = vunpack.c.h.b16 %v1129
  %v1801 = vunpack.c.l.b16 %v1130
  %v1802 = vunpack.c.h.b16 %v1130
  %v1803 = vunpack.c.l.b16 %v1131
  %v1804 = vunpack.c.h.b16 %v1131
  %v1805 = vunpack.c.l.b16 %v1132
  %v1806 = vunpack.c.h.b16 %v1132
  %v1807 = vunpack.c.l.b16 %v1133
  %v1808 = vunpack.c.h.b16 %v1133
  %v1809 = vunpack.c.l.b16 %v1134
  %v1810 = vunpack.c.h.b16 %v1134
  %v1811 = vunpack.c.l.b16 %v1135
  %v1812 = vunpack.c.h.b16 %v1135
  %v1813 = vunpack.c.l.b16 %v1136
  %v1814 = vunpack.c.h.b16 %v1136
  %v1815 = vunpack.c.l.b16 %v1137
  %v1816 = vunpack.c.h.b16 %v1137
  %v1817 = vunpack.c.l.b16 %v1138
  %v1818 = vunpack.c.h.b16 %v1138
  %v1819 = vunpack.c.l.b16 %v1139
  %v1820 = vunpack.c.h.b16 %v1139
  %v1821 = vunpack.c.l.b16 %v1140
  %v1822 = vunpack.c.h.b16 %v1140
  %v1823 = vunpack.c.l.b16 %v1141
  %v1824 = vunpack.c.h.b16 %v1141
  %v1825 = vpack.c.b16 %v1701, %v1697
  %v1826 = vpack.c.b16 %v1702, %v1698
  %v1827 = vpack.c.b16 %v1703, %v1699
  %v1828 = vpack.c.b16 %v1704, %v1700
  %v1829 = vpack.c.b16 %v1709, %v1705
  %v1830 = vpack.c.b16 %v1710, %v1706
  %v1831 = vpack.c.b16 %v1711, %v1707
  %v1832 = vpack.c.b16 %v1712, %v1708
  %v1833 = vpack.c.b16 %v1717, %v1713
  %v1834 = vpack.c.b16 %v1718, %v1714
  %v1835 = vpack.c.b16 %v1719, %v1715
  %v1836 = vpack.c.b16 %v1720, %v1716
  %v1837 = vpack.c.b16 %v1725, %v1721
  %v1838 = vpack.c.b16 %v1726, %v1722
  %v1839 = vpack.c.b16 %v1727, %v1723
  %v1840 = vpack.c.b16 %v1728, %v1724
  %v1841 = vpack.c.b16 %v1733, %v1729
  %v1842 = vpack.c.b16 %v1734, %v1730
  %v1843 = vpack.c.b16 %v1735, %v1731
  %v1844 = vpack.c.b16 %v1736, %v1732
  %v1845 = vpack.c.b16 %v1741, %v1737
  %v1846 = vpack.c.b16 %v1742, %v1738
  %v1847 = vpack.c.b16 %v1743, %v1739
  %v1848 = vpack.c.b16 %v1744, %v1740
  %v1849 = vpack.c.b16 %v1749, %v1745
  %v1850 = vpack.c.b16 %v1750, %v1746
  %v1851 = vpack.c.b16 %v1751, %v1747
  %v1852 = vpack.c.b16 %v1752, %v1748
  %v1853 = vpack.c.b16 %v1757, %v1753
  %v1854 = vpack.c.b16 %v1758, %v1754
  %v1855 = vpack.c.b16 %v1759, %v1755
  %v1856 = vpack.c.b16 %v1760, %v1756
  %v1857 = vpack.c.b16 %v1765, %v1761
  %v1858 = vpack.c.b16 %v1766, %v1762
  %v1859 = vpack.c.b16 %v1767, %v1763
  %v1860 = vpack.c.b16 %v1768, %v1764
  %v1861 = vpack.c.b16 %v1773, %v1769
  %v1862 = vpack.c.b16 %v1774, %v1770
  %v1863 = vpack.c.b16 %v1775, %v1771
  %v1864 = vpack.c.b16 %v1776, %v1772
  %v1865 = vpack.c.b16 %v1781, %v1777
  %v1866 = vpack.c.b16 %v1782, %v1778
  %v1867 = vpack.c.b16 %v1783, %v1779
  %v1868 = vpack.c.b16 %v1784, %v1780
  %v1869 = vpack.c.b16 %v1789, %v1785
  %v1870 = vpack.c.b16 %v1790, %v1786
  %v1871 = vpack.c.b16 %v1791, %v1787
  %v1872 = vpack.c.b16 %v1792, %v1788
  %v1873 = vpack.c.b16 %v1797, %v1793
  %v1874 = vpack.c.b16 %v1798, %v1794
  %v1875 = vpack.c.b16 %v1799, %v1795
  %v1876 = vpack.c.b16 %v1800, %v1796
  %v1877 = vpack.c.b16 %v1805, %v1801
  %v1878 = vpack.c.b16 %v1806, %v1802
  %v1879 = vpack.c.b16 %v1807, %v1803
  %v1880 = vpack.c.b16 %v1808, %v1804
  %v1881 = vpack.c.b16 %v1813, %v1809
  %v1882 = vpack.c.b16 %v1814, %v1810
  %v1883 = vpack.c.b16 %v1815, %v1811
  %v1884 = vpack.c.b16 %v1816, %v1812
  %v1885 = vpack.c.b16 %v1821, %v1817
  %v1886 = vpack.c.b16 %v1822, %v1818
  %v1887 = vpack.c.b16 %v1823, %v1819
  %v1888 = vpack.c.b16 %v1824, %v1820
  %1953 = vmatprep.subr.bf16.mxu0 %v1854
  %1954 = vmatpush1.bf16.msra.mxu0 %v1853
  %1955 = vmatprep.subr.bf16.mxu0 %v1850
  %1956 = vmatpush1.bf16.msra.mxu0 %v1849
  %1957 = vmatprep.subr.bf16.mxu0 %v1846
  %1958 = vmatpush1.bf16.msra.mxu0 %v1845
  %1959 = vmatprep.subr.bf16.mxu0 %v1842
  %1960 = vmatpush1.bf16.msra.mxu0 %v1841
  %1961 = vmatprep.subr.bf16.mxu0 %v1838
  %1962 = vmatpush1.bf16.msra.mxu0 %v1837
  %1963 = vmatprep.subr.bf16.mxu0 %v1834
  %1964 = vmatpush1.bf16.msra.mxu0 %v1833
  %1965 = vmatprep.subr.bf16.mxu0 %v1830
  %1966 = vmatpush1.bf16.msra.mxu0 %v1829
  %1967 = vmatprep.subr.bf16.mxu0 %v1826
  %1968 = vmatpush1.bf16.msra.mxu0 %v1825
  %1969 = vmatprep.subr.bf16.mxu0 %v1886
  %1970 = vmatpush2.bf16.msra.mxu0 %v1885
  %1971 = vmatprep.subr.bf16.mxu0 %v1882
  %1972 = vmatpush2.bf16.msra.mxu0 %v1881
  %1973 = vmatprep.subr.bf16.mxu0 %v1878
  %1974 = vmatpush2.bf16.msra.mxu0 %v1877
  %1975 = vmatprep.subr.bf16.mxu0 %v1874
  %1976 = vmatpush2.bf16.msra.mxu0 %v1873
  %1977 = vmatprep.subr.bf16.mxu0 %v1870
  %1978 = vmatpush2.bf16.msra.mxu0 %v1869
  %1979 = vmatprep.subr.bf16.mxu0 %v1866
  %1980 = vmatpush2.bf16.msra.mxu0 %v1865
  %1981 = vmatprep.subr.bf16.mxu0 %v1862
  %1982 = vmatpush2.bf16.msra.mxu0 %v1861
  %1983 = vmatprep.subr.bf16.mxu0 %v1858
  %1984 = vmatpush2.bf16.msra.mxu0 %v1857
  %1985 = vmatprep.mubr.bf16.mxu0 %v669
  %1986 = vmatmul.mubr.bf16.gmra.mxu0 %v668
  %v1987 = vpop.f32.mrf.mxu0
  %v1988 = vadd.f32 %v1562, %v1987
  %v1989 = vpop.f32.mrf.mxu0
  %v1990 = vadd.f32 %v1564, %v1989
  %v1991 = vpop.f32.mrf.mxu0
  %v1992 = vadd.f32 %v1566, %v1991
  %v1993 = vpop.f32.mrf.mxu0
  %v1994 = vadd.f32 %v1568, %v1993
  %1995 = vmatprep.mubr.bf16.mxu0 %v671
  %1996 = vmatmul.mubr.bf16.gmra.mxu0 %v670
  %v1997 = vpop.f32.mrf.mxu0
  %v1998 = vadd.f32 %v1572, %v1997
  %v1999 = vpop.f32.mrf.mxu0
  %v2000 = vadd.f32 %v1574, %v1999
  %v2001 = vpop.f32.mrf.mxu0
  %v2002 = vadd.f32 %v1576, %v2001
  %v2003 = vpop.f32.mrf.mxu0
  %v2004 = vadd.f32 %v1578, %v2003
  %2005 = vdwg.mxu0
  %2006 = vmatprep.subr.bf16.mxu0 %v1856
  %2007 = vmatpush1.bf16.msra.mxu0 %v1855
  %2008 = vmatprep.subr.bf16.mxu0 %v1852
  %2009 = vmatpush1.bf16.msra.mxu0 %v1851
  %2010 = vmatprep.subr.bf16.mxu0 %v1848
  %2011 = vmatpush1.bf16.msra.mxu0 %v1847
  %2012 = vmatprep.subr.bf16.mxu0 %v1844
  %2013 = vmatpush1.bf16.msra.mxu0 %v1843
  %2014 = vmatprep.subr.bf16.mxu0 %v1840
  %2015 = vmatpush1.bf16.msra.mxu0 %v1839
  %2016 = vmatprep.subr.bf16.mxu0 %v1836
  %2017 = vmatpush1.bf16.msra.mxu0 %v1835
  %2018 = vmatprep.subr.bf16.mxu0 %v1832
  %2019 = vmatpush1.bf16.msra.mxu0 %v1831
  %2020 = vmatprep.subr.bf16.mxu0 %v1828
  %2021 = vmatpush1.bf16.msra.mxu0 %v1827
  %2022 = vmatprep.subr.bf16.mxu0 %v1888
  %2023 = vmatpush2.bf16.msra.mxu0 %v1887
  %2024 = vmatprep.subr.bf16.mxu0 %v1884
  %2025 = vmatpush2.bf16.msra.mxu0 %v1883
  %2026 = vmatprep.subr.bf16.mxu0 %v1880
  %2027 = vmatpush2.bf16.msra.mxu0 %v1879
  %2028 = vmatprep.subr.bf16.mxu0 %v1876
  %2029 = vmatpush2.bf16.msra.mxu0 %v1875
  %2030 = vmatprep.subr.bf16.mxu0 %v1872
  %2031 = vmatpush2.bf16.msra.mxu0 %v1871
  %2032 = vmatprep.subr.bf16.mxu0 %v1868
  %2033 = vmatpush2.bf16.msra.mxu0 %v1867
  %2034 = vmatprep.subr.bf16.mxu0 %v1864
  %2035 = vmatpush2.bf16.msra.mxu0 %v1863
  %2036 = vmatprep.subr.bf16.mxu0 %v1860
  %2037 = vmatpush2.bf16.msra.mxu0 %v1859
  %2038 = vmatprep.mubr.bf16.mxu0 %v669
  %2039 = vmatmul.mubr.bf16.gmra.mxu0 %v668
  %v2040 = vpop.f32.mrf.mxu0
  %v2041 = vadd.f32 %v1615, %v2040
  %v2042 = vpop.f32.mrf.mxu0
  %v2043 = vadd.f32 %v1617, %v2042
  %v2044 = vpop.f32.mrf.mxu0
  %v2045 = vadd.f32 %v1619, %v2044
  %v2046 = vpop.f32.mrf.mxu0
  %v2047 = vadd.f32 %v1621, %v2046
  %2048 = vmatprep.mubr.bf16.mxu0 %v671
  %2049 = vmatmul.mubr.bf16.gmra.mxu0 %v670
  %v2050 = vpop.f32.mrf.mxu0
  %v2051 = vadd.f32 %v1625, %v2050
  %v2052 = vpop.f32.mrf.mxu0
  %v2053 = vadd.f32 %v1627, %v2052
  %v2054 = vpop.f32.mrf.mxu0
  %v2055 = vadd.f32 %v1629, %v2054
  %v2056 = vpop.f32.mrf.mxu0
  %v2057 = vadd.f32 %v1631, %v2056
  %2058 = vdwg.mxu0
  %s2059 = scalar_lea.vmem %s3, 1024
  %v2060 = vld [vmem:[%s2059] sm:$0xff]
  %v2061 = vld [vmem:[%s2059 + $0x8] sm:$0xff]
  %v2062 = vld [vmem:[%s2059 + $0x10] sm:$0xff]
  %v2063 = vld [vmem:[%s2059 + $0x18] sm:$0xff]
  %v2064 = vld [vmem:[%s2059 + $0x20] sm:$0xff]
  %v2065 = vld [vmem:[%s2059 + $0x28] sm:$0xff]
  %v2066 = vld [vmem:[%s2059 + $0x30] sm:$0xff]
  %v2067 = vld [vmem:[%s2059 + $0x38] sm:$0xff]
  %v2068 = vld [vmem:[%s2059 + $0x40] sm:$0xff]
  %v2069 = vld [vmem:[%s2059 + $0x48] sm:$0xff]
  %v2070 = vld [vmem:[%s2059 + $0x50] sm:$0xff]
  %v2071 = vld [vmem:[%s2059 + $0x58] sm:$0xff]
  %v2072 = vld [vmem:[%s2059 + $0x60] sm:$0xff]
  %v2073 = vld [vmem:[%s2059 + $0x68] sm:$0xff]
  %v2074 = vld [vmem:[%s2059 + $0x70] sm:$0xff]
  %v2075 = vld [vmem:[%s2059 + $0x78] sm:$0xff]
  %v2076 = vld [vmem:[%s2059 + $0x80] sm:$0xff]
  %v2077 = vld [vmem:[%s2059 + $0x88] sm:$0xff]
  %v2078 = vld [vmem:[%s2059 + $0x90] sm:$0xff]
  %v2079 = vld [vmem:[%s2059 + $0x98] sm:$0xff]
  %v2080 = vld [vmem:[%s2059 + $0xa0] sm:$0xff]
  %v2081 = vld [vmem:[%s2059 + $0xa8] sm:$0xff]
  %v2082 = vld [vmem:[%s2059 + $0xb0] sm:$0xff]
  %v2083 = vld [vmem:[%s2059 + $0xb8] sm:$0xff]
  %v2084 = vld [vmem:[%s2059 + $0xc0] sm:$0xff]
  %v2085 = vld [vmem:[%s2059 + $0xc8] sm:$0xff]
  %v2086 = vld [vmem:[%s2059 + $0xd0] sm:$0xff]
  %v2087 = vld [vmem:[%s2059 + $0xd8] sm:$0xff]
  %v2088 = vld [vmem:[%s2059 + $0xe0] sm:$0xff]
  %v2089 = vld [vmem:[%s2059 + $0xe8] sm:$0xff]
  %v2090 = vld [vmem:[%s2059 + $0xf0] sm:$0xff]
  %v2091 = vld [vmem:[%s2059 + $0xf8] sm:$0xff]
  %v2092 = vld [vmem:[%s2059 + $0x100] sm:$0xff]
  %v2093 = vld [vmem:[%s2059 + $0x108] sm:$0xff]
  %v2094 = vld [vmem:[%s2059 + $0x110] sm:$0xff]
  %v2095 = vld [vmem:[%s2059 + $0x118] sm:$0xff]
  %v2096 = vld [vmem:[%s2059 + $0x120] sm:$0xff]
  %v2097 = vld [vmem:[%s2059 + $0x128] sm:$0xff]
  %v2098 = vld [vmem:[%s2059 + $0x130] sm:$0xff]
  %v2099 = vld [vmem:[%s2059 + $0x138] sm:$0xff]
  %v2100 = vld [vmem:[%s2059 + $0x140] sm:$0xff]
  %v2101 = vld [vmem:[%s2059 + $0x148] sm:$0xff]
  %v2102 = vld [vmem:[%s2059 + $0x150] sm:$0xff]
  %v2103 = vld [vmem:[%s2059 + $0x158] sm:$0xff]
  %v2104 = vld [vmem:[%s2059 + $0x160] sm:$0xff]
  %v2105 = vld [vmem:[%s2059 + $0x168] sm:$0xff]
  %v2106 = vld [vmem:[%s2059 + $0x170] sm:$0xff]
  %v2107 = vld [vmem:[%s2059 + $0x178] sm:$0xff]
  %v2108 = vld [vmem:[%s2059 + $0x180] sm:$0xff]
  %v2109 = vld [vmem:[%s2059 + $0x188] sm:$0xff]
  %v2110 = vld [vmem:[%s2059 + $0x190] sm:$0xff]
  %v2111 = vld [vmem:[%s2059 + $0x198] sm:$0xff]
  %v2112 = vld [vmem:[%s2059 + $0x1a0] sm:$0xff]
  %v2113 = vld [vmem:[%s2059 + $0x1a8] sm:$0xff]
  %v2114 = vld [vmem:[%s2059 + $0x1b0] sm:$0xff]
  %v2115 = vld [vmem:[%s2059 + $0x1b8] sm:$0xff]
  %v2116 = vld [vmem:[%s2059 + $0x1c0] sm:$0xff]
  %v2117 = vld [vmem:[%s2059 + $0x1c8] sm:$0xff]
  %v2118 = vld [vmem:[%s2059 + $0x1d0] sm:$0xff]
  %v2119 = vld [vmem:[%s2059 + $0x1d8] sm:$0xff]
  %v2120 = vld [vmem:[%s2059 + $0x1e0] sm:$0xff]
  %v2121 = vld [vmem:[%s2059 + $0x1e8] sm:$0xff]
  %v2122 = vld [vmem:[%s2059 + $0x1f0] sm:$0xff]
  %v2123 = vld [vmem:[%s2059 + $0x1f8] sm:$0xff]
  %vm2130 = vcmask 1043456
  %v2131 = vrot.slane %v668, 4
  %v2132 = vrot.slane %v670, 4
  %v2133 = vsel %vm2130, %v2131, %v2132
  %v2134 = vrot.slane %v669, 4
  %v2135 = vrot.slane %v671, 4
  %v2136 = vsel %vm2130, %v2134, %v2135
  %v2137 = vrot.slane %v672, 4
  %v2138 = vsel %vm2130, %v2132, %v2137
  %v2139 = vrot.slane %v673, 4
  %v2140 = vsel %vm2130, %v2135, %v2139
  %v2209 = vunpack.c.l.b16 %v2060
  %v2210 = vunpack.c.h.b16 %v2060
  %v2211 = vunpack.c.l.b16 %v2061
  %v2212 = vunpack.c.h.b16 %v2061
  %v2213 = vunpack.c.l.b16 %v2062
  %v2214 = vunpack.c.h.b16 %v2062
  %v2215 = vunpack.c.l.b16 %v2063
  %v2216 = vunpack.c.h.b16 %v2063
  %v2217 = vunpack.c.l.b16 %v2064
  %v2218 = vunpack.c.h.b16 %v2064
  %v2219 = vunpack.c.l.b16 %v2065
  %v2220 = vunpack.c.h.b16 %v2065
  %v2221 = vunpack.c.l.b16 %v2066
  %v2222 = vunpack.c.h.b16 %v2066
  %v2223 = vunpack.c.l.b16 %v2067
  %v2224 = vunpack.c.h.b16 %v2067
  %v2225 = vunpack.c.l.b16 %v2068
  %v2226 = vunpack.c.h.b16 %v2068
  %v2227 = vunpack.c.l.b16 %v2069
  %v2228 = vunpack.c.h.b16 %v2069
  %v2229 = vunpack.c.l.b16 %v2070
  %v2230 = vunpack.c.h.b16 %v2070
  %v2231 = vunpack.c.l.b16 %v2071
  %v2232 = vunpack.c.h.b16 %v2071
  %v2233 = vunpack.c.l.b16 %v2072
  %v2234 = vunpack.c.h.b16 %v2072
  %v2235 = vunpack.c.l.b16 %v2073
  %v2236 = vunpack.c.h.b16 %v2073
  %v2237 = vunpack.c.l.b16 %v2074
  %v2238 = vunpack.c.h.b16 %v2074
  %v2239 = vunpack.c.l.b16 %v2075
  %v2240 = vunpack.c.h.b16 %v2075
  %v2241 = vunpack.c.l.b16 %v2076
  %v2242 = vunpack.c.h.b16 %v2076
  %v2243 = vunpack.c.l.b16 %v2077
  %v2244 = vunpack.c.h.b16 %v2077
  %v2245 = vunpack.c.l.b16 %v2078
  %v2246 = vunpack.c.h.b16 %v2078
  %v2247 = vunpack.c.l.b16 %v2079
  %v2248 = vunpack.c.h.b16 %v2079
  %v2249 = vunpack.c.l.b16 %v2080
  %v2250 = vunpack.c.h.b16 %v2080
  %v2251 = vunpack.c.l.b16 %v2081
  %v2252 = vunpack.c.h.b16 %v2081
  %v2253 = vunpack.c.l.b16 %v2082
  %v2254 = vunpack.c.h.b16 %v2082
  %v2255 = vunpack.c.l.b16 %v2083
  %v2256 = vunpack.c.h.b16 %v2083
  %v2257 = vunpack.c.l.b16 %v2084
  %v2258 = vunpack.c.h.b16 %v2084
  %v2259 = vunpack.c.l.b16 %v2085
  %v2260 = vunpack.c.h.b16 %v2085
  %v2261 = vunpack.c.l.b16 %v2086
  %v2262 = vunpack.c.h.b16 %v2086
  %v2263 = vunpack.c.l.b16 %v2087
  %v2264 = vunpack.c.h.b16 %v2087
  %v2265 = vunpack.c.l.b16 %v2088
  %v2266 = vunpack.c.h.b16 %v2088
  %v2267 = vunpack.c.l.b16 %v2089
  %v2268 = vunpack.c.h.b16 %v2089
  %v2269 = vunpack.c.l.b16 %v2090
  %v2270 = vunpack.c.h.b16 %v2090
  %v2271 = vunpack.c.l.b16 %v2091
  %v2272 = vunpack.c.h.b16 %v2091
  %v2273 = vunpack.c.l.b16 %v2092
  %v2274 = vunpack.c.h.b16 %v2092
  %v2275 = vunpack.c.l.b16 %v2093
  %v2276 = vunpack.c.h.b16 %v2093
  %v2277 = vunpack.c.l.b16 %v2094
  %v2278 = vunpack.c.h.b16 %v2094
  %v2279 = vunpack.c.l.b16 %v2095
  %v2280 = vunpack.c.h.b16 %v2095
  %v2281 = vunpack.c.l.b16 %v2096
  %v2282 = vunpack.c.h.b16 %v2096
  %v2283 = vunpack.c.l.b16 %v2097
  %v2284 = vunpack.c.h.b16 %v2097
  %v2285 = vunpack.c.l.b16 %v2098
  %v2286 = vunpack.c.h.b16 %v2098
  %v2287 = vunpack.c.l.b16 %v2099
  %v2288 = vunpack.c.h.b16 %v2099
  %v2289 = vunpack.c.l.b16 %v2100
  %v2290 = vunpack.c.h.b16 %v2100
  %v2291 = vunpack.c.l.b16 %v2101
  %v2292 = vunpack.c.h.b16 %v2101
  %v2293 = vunpack.c.l.b16 %v2102
  %v2294 = vunpack.c.h.b16 %v2102
  %v2295 = vunpack.c.l.b16 %v2103
  %v2296 = vunpack.c.h.b16 %v2103
  %v2297 = vunpack.c.l.b16 %v2104
  %v2298 = vunpack.c.h.b16 %v2104
  %v2299 = vunpack.c.l.b16 %v2105
  %v2300 = vunpack.c.h.b16 %v2105
  %v2301 = vunpack.c.l.b16 %v2106
  %v2302 = vunpack.c.h.b16 %v2106
  %v2303 = vunpack.c.l.b16 %v2107
  %v2304 = vunpack.c.h.b16 %v2107
  %v2305 = vunpack.c.l.b16 %v2108
  %v2306 = vunpack.c.h.b16 %v2108
  %v2307 = vunpack.c.l.b16 %v2109
  %v2308 = vunpack.c.h.b16 %v2109
  %v2309 = vunpack.c.l.b16 %v2110
  %v2310 = vunpack.c.h.b16 %v2110
  %v2311 = vunpack.c.l.b16 %v2111
  %v2312 = vunpack.c.h.b16 %v2111
  %v2313 = vunpack.c.l.b16 %v2112
  %v2314 = vunpack.c.h.b16 %v2112
  %v2315 = vunpack.c.l.b16 %v2113
  %v2316 = vunpack.c.h.b16 %v2113
  %v2317 = vunpack.c.l.b16 %v2114
  %v2318 = vunpack.c.h.b16 %v2114
  %v2319 = vunpack.c.l.b16 %v2115
  %v2320 = vunpack.c.h.b16 %v2115
  %v2321 = vunpack.c.l.b16 %v2116
  %v2322 = vunpack.c.h.b16 %v2116
  %v2323 = vunpack.c.l.b16 %v2117
  %v2324 = vunpack.c.h.b16 %v2117
  %v2325 = vunpack.c.l.b16 %v2118
  %v2326 = vunpack.c.h.b16 %v2118
  %v2327 = vunpack.c.l.b16 %v2119
  %v2328 = vunpack.c.h.b16 %v2119
  %v2329 = vunpack.c.l.b16 %v2120
  %v2330 = vunpack.c.h.b16 %v2120
  %v2331 = vunpack.c.l.b16 %v2121
  %v2332 = vunpack.c.h.b16 %v2121
  %v2333 = vunpack.c.l.b16 %v2122
  %v2334 = vunpack.c.h.b16 %v2122
  %v2335 = vunpack.c.l.b16 %v2123
  %v2336 = vunpack.c.h.b16 %v2123
  %v2337 = vpack.c.b16 %v2213, %v2209
  %v2338 = vpack.c.b16 %v2214, %v2210
  %v2339 = vpack.c.b16 %v2215, %v2211
  %v2340 = vpack.c.b16 %v2216, %v2212
  %v2341 = vpack.c.b16 %v2221, %v2217
  %v2342 = vpack.c.b16 %v2222, %v2218
  %v2343 = vpack.c.b16 %v2223, %v2219
  %v2344 = vpack.c.b16 %v2224, %v2220
  %v2345 = vpack.c.b16 %v2229, %v2225
  %v2346 = vpack.c.b16 %v2230, %v2226
  %v2347 = vpack.c.b16 %v2231, %v2227
  %v2348 = vpack.c.b16 %v2232, %v2228
  %v2349 = vpack.c.b16 %v2237, %v2233
  %v2350 = vpack.c.b16 %v2238, %v2234
  %v2351 = vpack.c.b16 %v2239, %v2235
  %v2352 = vpack.c.b16 %v2240, %v2236
  %v2353 = vpack.c.b16 %v2245, %v2241
  %v2354 = vpack.c.b16 %v2246, %v2242
  %v2355 = vpack.c.b16 %v2247, %v2243
  %v2356 = vpack.c.b16 %v2248, %v2244
  %v2357 = vpack.c.b16 %v2253, %v2249
  %v2358 = vpack.c.b16 %v2254, %v2250
  %v2359 = vpack.c.b16 %v2255, %v2251
  %v2360 = vpack.c.b16 %v2256, %v2252
  %v2361 = vpack.c.b16 %v2261, %v2257
  %v2362 = vpack.c.b16 %v2262, %v2258
  %v2363 = vpack.c.b16 %v2263, %v2259
  %v2364 = vpack.c.b16 %v2264, %v2260
  %v2365 = vpack.c.b16 %v2269, %v2265
  %v2366 = vpack.c.b16 %v2270, %v2266
  %v2367 = vpack.c.b16 %v2271, %v2267
  %v2368 = vpack.c.b16 %v2272, %v2268
  %v2369 = vpack.c.b16 %v2277, %v2273
  %v2370 = vpack.c.b16 %v2278, %v2274
  %v2371 = vpack.c.b16 %v2279, %v2275
  %v2372 = vpack.c.b16 %v2280, %v2276
  %v2373 = vpack.c.b16 %v2285, %v2281
  %v2374 = vpack.c.b16 %v2286, %v2282
  %v2375 = vpack.c.b16 %v2287, %v2283
  %v2376 = vpack.c.b16 %v2288, %v2284
  %v2377 = vpack.c.b16 %v2293, %v2289
  %v2378 = vpack.c.b16 %v2294, %v2290
  %v2379 = vpack.c.b16 %v2295, %v2291
  %v2380 = vpack.c.b16 %v2296, %v2292
  %v2381 = vpack.c.b16 %v2301, %v2297
  %v2382 = vpack.c.b16 %v2302, %v2298
  %v2383 = vpack.c.b16 %v2303, %v2299
  %v2384 = vpack.c.b16 %v2304, %v2300
  %v2385 = vpack.c.b16 %v2309, %v2305
  %v2386 = vpack.c.b16 %v2310, %v2306
  %v2387 = vpack.c.b16 %v2311, %v2307
  %v2388 = vpack.c.b16 %v2312, %v2308
  %v2389 = vpack.c.b16 %v2317, %v2313
  %v2390 = vpack.c.b16 %v2318, %v2314
  %v2391 = vpack.c.b16 %v2319, %v2315
  %v2392 = vpack.c.b16 %v2320, %v2316
  %v2393 = vpack.c.b16 %v2325, %v2321
  %v2394 = vpack.c.b16 %v2326, %v2322
  %v2395 = vpack.c.b16 %v2327, %v2323
  %v2396 = vpack.c.b16 %v2328, %v2324
  %v2397 = vpack.c.b16 %v2333, %v2329
  %v2398 = vpack.c.b16 %v2334, %v2330
  %v2399 = vpack.c.b16 %v2335, %v2331
  %v2400 = vpack.c.b16 %v2336, %v2332
  %2465 = vmatprep.subr.bf16.mxu0 %v2366
  %2466 = vmatpush1.bf16.msra.mxu0 %v2365
  %2467 = vmatprep.subr.bf16.mxu0 %v2362
  %2468 = vmatpush1.bf16.msra.mxu0 %v2361
  %2469 = vmatprep.subr.bf16.mxu0 %v2358
  %2470 = vmatpush1.bf16.msra.mxu0 %v2357
  %2471 = vmatprep.subr.bf16.mxu0 %v2354
  %2472 = vmatpush1.bf16.msra.mxu0 %v2353
  %2473 = vmatprep.subr.bf16.mxu0 %v2350
  %2474 = vmatpush1.bf16.msra.mxu0 %v2349
  %2475 = vmatprep.subr.bf16.mxu0 %v2346
  %2476 = vmatpush1.bf16.msra.mxu0 %v2345
  %2477 = vmatprep.subr.bf16.mxu0 %v2342
  %2478 = vmatpush1.bf16.msra.mxu0 %v2341
  %2479 = vmatprep.subr.bf16.mxu0 %v2338
  %2480 = vmatpush1.bf16.msra.mxu0 %v2337
  %2481 = vmatprep.subr.bf16.mxu0 %v2398
  %2482 = vmatpush2.bf16.msra.mxu0 %v2397
  %2483 = vmatprep.subr.bf16.mxu0 %v2394
  %2484 = vmatpush2.bf16.msra.mxu0 %v2393
  %2485 = vmatprep.subr.bf16.mxu0 %v2390
  %2486 = vmatpush2.bf16.msra.mxu0 %v2389
  %2487 = vmatprep.subr.bf16.mxu0 %v2386
  %2488 = vmatpush2.bf16.msra.mxu0 %v2385
  %2489 = vmatprep.subr.bf16.mxu0 %v2382
  %2490 = vmatpush2.bf16.msra.mxu0 %v2381
  %2491 = vmatprep.subr.bf16.mxu0 %v2378
  %2492 = vmatpush2.bf16.msra.mxu0 %v2377
  %2493 = vmatprep.subr.bf16.mxu0 %v2374
  %2494 = vmatpush2.bf16.msra.mxu0 %v2373
  %2495 = vmatprep.subr.bf16.mxu0 %v2370
  %2496 = vmatpush2.bf16.msra.mxu0 %v2369
  %2497 = vmatprep.mubr.bf16.mxu0 %v2136
  %2498 = vmatmul.mubr.bf16.gmra.mxu0 %v2133
  %v2499 = vpop.f32.mrf.mxu0
  %v2500 = vadd.f32 0.0, %v2499
  %v2501 = vpop.f32.mrf.mxu0
  %v2502 = vadd.f32 0.0, %v2501
  %v2503 = vpop.f32.mrf.mxu0
  %v2504 = vadd.f32 0.0, %v2503
  %v2505 = vpop.f32.mrf.mxu0
  %v2506 = vadd.f32 0.0, %v2505
  %2507 = vmatprep.mubr.bf16.mxu0 %v2140
  %2508 = vmatmul.mubr.bf16.gmra.mxu0 %v2138
  %v2509 = vpop.f32.mrf.mxu0
  %v2510 = vadd.f32 0.0, %v2509
  %v2511 = vpop.f32.mrf.mxu0
  %v2512 = vadd.f32 0.0, %v2511
  %v2513 = vpop.f32.mrf.mxu0
  %v2514 = vadd.f32 0.0, %v2513
  %v2515 = vpop.f32.mrf.mxu0
  %v2516 = vadd.f32 0.0, %v2515
  %2517 = vdwg.mxu0
  %2518 = vmatprep.subr.bf16.mxu0 %v2368
  %2519 = vmatpush1.bf16.msra.mxu0 %v2367
  %2520 = vmatprep.subr.bf16.mxu0 %v2364
  %2521 = vmatpush1.bf16.msra.mxu0 %v2363
  %2522 = vmatprep.subr.bf16.mxu0 %v2360
  %2523 = vmatpush1.bf16.msra.mxu0 %v2359
  %2524 = vmatprep.subr.bf16.mxu0 %v2356
  %2525 = vmatpush1.bf16.msra.mxu0 %v2355
  %2526 = vmatprep.subr.bf16.mxu0 %v2352
  %2527 = vmatpush1.bf16.msra.mxu0 %v2351
  %2528 = vmatprep.subr.bf16.mxu0 %v2348
  %2529 = vmatpush1.bf16.msra.mxu0 %v2347
  %2530 = vmatprep.subr.bf16.mxu0 %v2344
  %2531 = vmatpush1.bf16.msra.mxu0 %v2343
  %2532 = vmatprep.subr.bf16.mxu0 %v2340
  %2533 = vmatpush1.bf16.msra.mxu0 %v2339
  %2534 = vmatprep.subr.bf16.mxu0 %v2400
  %2535 = vmatpush2.bf16.msra.mxu0 %v2399
  %2536 = vmatprep.subr.bf16.mxu0 %v2396
  %2537 = vmatpush2.bf16.msra.mxu0 %v2395
  %2538 = vmatprep.subr.bf16.mxu0 %v2392
  %2539 = vmatpush2.bf16.msra.mxu0 %v2391
  %2540 = vmatprep.subr.bf16.mxu0 %v2388
  %2541 = vmatpush2.bf16.msra.mxu0 %v2387
  %2542 = vmatprep.subr.bf16.mxu0 %v2384
  %2543 = vmatpush2.bf16.msra.mxu0 %v2383
  %2544 = vmatprep.subr.bf16.mxu0 %v2380
  %2545 = vmatpush2.bf16.msra.mxu0 %v2379
  %2546 = vmatprep.subr.bf16.mxu0 %v2376
  %2547 = vmatpush2.bf16.msra.mxu0 %v2375
  %2548 = vmatprep.subr.bf16.mxu0 %v2372
  %2549 = vmatpush2.bf16.msra.mxu0 %v2371
  %2550 = vmatprep.mubr.bf16.mxu0 %v2136
  %2551 = vmatmul.mubr.bf16.gmra.mxu0 %v2133
  %v2552 = vpop.f32.mrf.mxu0
  %v2553 = vadd.f32 0.0, %v2552
  %v2554 = vpop.f32.mrf.mxu0
  %v2555 = vadd.f32 0.0, %v2554
  %v2556 = vpop.f32.mrf.mxu0
  %v2557 = vadd.f32 0.0, %v2556
  %v2558 = vpop.f32.mrf.mxu0
  %v2559 = vadd.f32 0.0, %v2558
  %2560 = vmatprep.mubr.bf16.mxu0 %v2140
  %2561 = vmatmul.mubr.bf16.gmra.mxu0 %v2138
  %v2562 = vpop.f32.mrf.mxu0
  %v2563 = vadd.f32 0.0, %v2562
  %v2564 = vpop.f32.mrf.mxu0
  %v2565 = vadd.f32 0.0, %v2564
  %v2566 = vpop.f32.mrf.mxu0
  %v2567 = vadd.f32 0.0, %v2566
  %v2568 = vpop.f32.mrf.mxu0
  %v2569 = vadd.f32 0.0, %v2568
  %2570 = vdwg.mxu0
  %v2571 = vadd.f32 %v1988, %v2500
  %v2572 = vadd.f32 %v1990, %v2502
  %v2573 = vadd.f32 %v2041, %v2553
  %v2574 = vadd.f32 %v2043, %v2555
  %v2575 = vadd.f32 %v1992, %v2504
  %v2576 = vadd.f32 %v1994, %v2506
  %v2577 = vadd.f32 %v2045, %v2557
  %v2578 = vadd.f32 %v2047, %v2559
  %v2579 = vadd.f32 %v1998, %v2510
  %v2580 = vadd.f32 %v2000, %v2512
  %v2581 = vadd.f32 %v2051, %v2563
  %v2582 = vadd.f32 %v2053, %v2565
  %v2583 = vadd.f32 %v2002, %v2514
  %v2584 = vadd.f32 %v2004, %v2516
  %v2585 = vadd.f32 %v2055, %v2567
  %v2586 = vadd.f32 %v2057, %v2569
  %s2587 = scalar_lea.vmem %s3, 1536
  %v2588 = vld [vmem:[%s2587] sm:$0xff]
  %v2589 = vld [vmem:[%s2587 + $0x8] sm:$0xff]
  %v2590 = vld [vmem:[%s2587 + $0x10] sm:$0xff]
  %v2591 = vld [vmem:[%s2587 + $0x18] sm:$0xff]
  %v2592 = vld [vmem:[%s2587 + $0x20] sm:$0xff]
  %v2593 = vld [vmem:[%s2587 + $0x28] sm:$0xff]
  %v2594 = vld [vmem:[%s2587 + $0x30] sm:$0xff]
  %v2595 = vld [vmem:[%s2587 + $0x38] sm:$0xff]
  %v2596 = vld [vmem:[%s2587 + $0x40] sm:$0xff]
  %v2597 = vld [vmem:[%s2587 + $0x48] sm:$0xff]
  %v2598 = vld [vmem:[%s2587 + $0x50] sm:$0xff]
  %v2599 = vld [vmem:[%s2587 + $0x58] sm:$0xff]
  %v2600 = vld [vmem:[%s2587 + $0x60] sm:$0xff]
  %v2601 = vld [vmem:[%s2587 + $0x68] sm:$0xff]
  %v2602 = vld [vmem:[%s2587 + $0x70] sm:$0xff]
  %v2603 = vld [vmem:[%s2587 + $0x78] sm:$0xff]
  %v2604 = vld [vmem:[%s2587 + $0x80] sm:$0xff]
  %v2605 = vld [vmem:[%s2587 + $0x88] sm:$0xff]
  %v2606 = vld [vmem:[%s2587 + $0x90] sm:$0xff]
  %v2607 = vld [vmem:[%s2587 + $0x98] sm:$0xff]
  %v2608 = vld [vmem:[%s2587 + $0xa0] sm:$0xff]
  %v2609 = vld [vmem:[%s2587 + $0xa8] sm:$0xff]
  %v2610 = vld [vmem:[%s2587 + $0xb0] sm:$0xff]
  %v2611 = vld [vmem:[%s2587 + $0xb8] sm:$0xff]
  %v2612 = vld [vmem:[%s2587 + $0xc0] sm:$0xff]
  %v2613 = vld [vmem:[%s2587 + $0xc8] sm:$0xff]
  %v2614 = vld [vmem:[%s2587 + $0xd0] sm:$0xff]
  %v2615 = vld [vmem:[%s2587 + $0xd8] sm:$0xff]
  %v2616 = vld [vmem:[%s2587 + $0xe0] sm:$0xff]
  %v2617 = vld [vmem:[%s2587 + $0xe8] sm:$0xff]
  %v2618 = vld [vmem:[%s2587 + $0xf0] sm:$0xff]
  %v2619 = vld [vmem:[%s2587 + $0xf8] sm:$0xff]
  %v2620 = vld [vmem:[%s2587 + $0x100] sm:$0xff]
  %v2621 = vld [vmem:[%s2587 + $0x108] sm:$0xff]
  %v2622 = vld [vmem:[%s2587 + $0x110] sm:$0xff]
  %v2623 = vld [vmem:[%s2587 + $0x118] sm:$0xff]
  %v2624 = vld [vmem:[%s2587 + $0x120] sm:$0xff]
  %v2625 = vld [vmem:[%s2587 + $0x128] sm:$0xff]
  %v2626 = vld [vmem:[%s2587 + $0x130] sm:$0xff]
  %v2627 = vld [vmem:[%s2587 + $0x138] sm:$0xff]
  %v2628 = vld [vmem:[%s2587 + $0x140] sm:$0xff]
  %v2629 = vld [vmem:[%s2587 + $0x148] sm:$0xff]
  %v2630 = vld [vmem:[%s2587 + $0x150] sm:$0xff]
  %v2631 = vld [vmem:[%s2587 + $0x158] sm:$0xff]
  %v2632 = vld [vmem:[%s2587 + $0x160] sm:$0xff]
  %v2633 = vld [vmem:[%s2587 + $0x168] sm:$0xff]
  %v2634 = vld [vmem:[%s2587 + $0x170] sm:$0xff]
  %v2635 = vld [vmem:[%s2587 + $0x178] sm:$0xff]
  %v2636 = vld [vmem:[%s2587 + $0x180] sm:$0xff]
  %v2637 = vld [vmem:[%s2587 + $0x188] sm:$0xff]
  %v2638 = vld [vmem:[%s2587 + $0x190] sm:$0xff]
  %v2639 = vld [vmem:[%s2587 + $0x198] sm:$0xff]
  %v2640 = vld [vmem:[%s2587 + $0x1a0] sm:$0xff]
  %v2641 = vld [vmem:[%s2587 + $0x1a8] sm:$0xff]
  %v2642 = vld [vmem:[%s2587 + $0x1b0] sm:$0xff]
  %v2643 = vld [vmem:[%s2587 + $0x1b8] sm:$0xff]
  %v2644 = vld [vmem:[%s2587 + $0x1c0] sm:$0xff]
  %v2645 = vld [vmem:[%s2587 + $0x1c8] sm:$0xff]
  %v2646 = vld [vmem:[%s2587 + $0x1d0] sm:$0xff]
  %v2647 = vld [vmem:[%s2587 + $0x1d8] sm:$0xff]
  %v2648 = vld [vmem:[%s2587 + $0x1e0] sm:$0xff]
  %v2649 = vld [vmem:[%s2587 + $0x1e8] sm:$0xff]
  %v2650 = vld [vmem:[%s2587 + $0x1f0] sm:$0xff]
  %v2651 = vld [vmem:[%s2587 + $0x1f8] sm:$0xff]
  %v2658 = vrot.slane %v1072, 4
  %v2659 = vrot.slane %v1074, 4
  %v2660 = vsel %vm2130, %v2658, %v2659
  %v2661 = vrot.slane %v1073, 4
  %v2662 = vrot.slane %v1075, 4
  %v2663 = vsel %vm2130, %v2661, %v2662
  %v2664 = vrot.slane %v1076, 4
  %v2665 = vsel %vm2130, %v2659, %v2664
  %v2666 = vrot.slane %v1077, 4
  %v2667 = vsel %vm2130, %v2662, %v2666
  %v2736 = vunpack.c.l.b16 %v2588
  %v2737 = vunpack.c.h.b16 %v2588
  %v2738 = vunpack.c.l.b16 %v2589
  %v2739 = vunpack.c.h.b16 %v2589
  %v2740 = vunpack.c.l.b16 %v2590
  %v2741 = vunpack.c.h.b16 %v2590
  %v2742 = vunpack.c.l.b16 %v2591
  %v2743 = vunpack.c.h.b16 %v2591
  %v2744 = vunpack.c.l.b16 %v2592
  %v2745 = vunpack.c.h.b16 %v2592
  %v2746 = vunpack.c.l.b16 %v2593
  %v2747 = vunpack.c.h.b16 %v2593
  %v2748 = vunpack.c.l.b16 %v2594
  %v2749 = vunpack.c.h.b16 %v2594
  %v2750 = vunpack.c.l.b16 %v2595
  %v2751 = vunpack.c.h.b16 %v2595
  %v2752 = vunpack.c.l.b16 %v2596
  %v2753 = vunpack.c.h.b16 %v2596
  %v2754 = vunpack.c.l.b16 %v2597
  %v2755 = vunpack.c.h.b16 %v2597
  %v2756 = vunpack.c.l.b16 %v2598
  %v2757 = vunpack.c.h.b16 %v2598
  %v2758 = vunpack.c.l.b16 %v2599
  %v2759 = vunpack.c.h.b16 %v2599
  %v2760 = vunpack.c.l.b16 %v2600
  %v2761 = vunpack.c.h.b16 %v2600
  %v2762 = vunpack.c.l.b16 %v2601
  %v2763 = vunpack.c.h.b16 %v2601
  %v2764 = vunpack.c.l.b16 %v2602
  %v2765 = vunpack.c.h.b16 %v2602
  %v2766 = vunpack.c.l.b16 %v2603
  %v2767 = vunpack.c.h.b16 %v2603
  %v2768 = vunpack.c.l.b16 %v2604
  %v2769 = vunpack.c.h.b16 %v2604
  %v2770 = vunpack.c.l.b16 %v2605
  %v2771 = vunpack.c.h.b16 %v2605
  %v2772 = vunpack.c.l.b16 %v2606
  %v2773 = vunpack.c.h.b16 %v2606
  %v2774 = vunpack.c.l.b16 %v2607
  %v2775 = vunpack.c.h.b16 %v2607
  %v2776 = vunpack.c.l.b16 %v2608
  %v2777 = vunpack.c.h.b16 %v2608
  %v2778 = vunpack.c.l.b16 %v2609
  %v2779 = vunpack.c.h.b16 %v2609
  %v2780 = vunpack.c.l.b16 %v2610
  %v2781 = vunpack.c.h.b16 %v2610
  %v2782 = vunpack.c.l.b16 %v2611
  %v2783 = vunpack.c.h.b16 %v2611
  %v2784 = vunpack.c.l.b16 %v2612
  %v2785 = vunpack.c.h.b16 %v2612
  %v2786 = vunpack.c.l.b16 %v2613
  %v2787 = vunpack.c.h.b16 %v2613
  %v2788 = vunpack.c.l.b16 %v2614
  %v2789 = vunpack.c.h.b16 %v2614
  %v2790 = vunpack.c.l.b16 %v2615
  %v2791 = vunpack.c.h.b16 %v2615
  %v2792 = vunpack.c.l.b16 %v2616
  %v2793 = vunpack.c.h.b16 %v2616
  %v2794 = vunpack.c.l.b16 %v2617
  %v2795 = vunpack.c.h.b16 %v2617
  %v2796 = vunpack.c.l.b16 %v2618
  %v2797 = vunpack.c.h.b16 %v2618
  %v2798 = vunpack.c.l.b16 %v2619
  %v2799 = vunpack.c.h.b16 %v2619
  %v2800 = vunpack.c.l.b16 %v2620
  %v2801 = vunpack.c.h.b16 %v2620
  %v2802 = vunpack.c.l.b16 %v2621
  %v2803 = vunpack.c.h.b16 %v2621
  %v2804 = vunpack.c.l.b16 %v2622
  %v2805 = vunpack.c.h.b16 %v2622
  %v2806 = vunpack.c.l.b16 %v2623
  %v2807 = vunpack.c.h.b16 %v2623
  %v2808 = vunpack.c.l.b16 %v2624
  %v2809 = vunpack.c.h.b16 %v2624
  %v2810 = vunpack.c.l.b16 %v2625
  %v2811 = vunpack.c.h.b16 %v2625
  %v2812 = vunpack.c.l.b16 %v2626
  %v2813 = vunpack.c.h.b16 %v2626
  %v2814 = vunpack.c.l.b16 %v2627
  %v2815 = vunpack.c.h.b16 %v2627
  %v2816 = vunpack.c.l.b16 %v2628
  %v2817 = vunpack.c.h.b16 %v2628
  %v2818 = vunpack.c.l.b16 %v2629
  %v2819 = vunpack.c.h.b16 %v2629
  %v2820 = vunpack.c.l.b16 %v2630
  %v2821 = vunpack.c.h.b16 %v2630
  %v2822 = vunpack.c.l.b16 %v2631
  %v2823 = vunpack.c.h.b16 %v2631
  %v2824 = vunpack.c.l.b16 %v2632
  %v2825 = vunpack.c.h.b16 %v2632
  %v2826 = vunpack.c.l.b16 %v2633
  %v2827 = vunpack.c.h.b16 %v2633
  %v2828 = vunpack.c.l.b16 %v2634
  %v2829 = vunpack.c.h.b16 %v2634
  %v2830 = vunpack.c.l.b16 %v2635
  %v2831 = vunpack.c.h.b16 %v2635
  %v2832 = vunpack.c.l.b16 %v2636
  %v2833 = vunpack.c.h.b16 %v2636
  %v2834 = vunpack.c.l.b16 %v2637
  %v2835 = vunpack.c.h.b16 %v2637
  %v2836 = vunpack.c.l.b16 %v2638
  %v2837 = vunpack.c.h.b16 %v2638
  %v2838 = vunpack.c.l.b16 %v2639
  %v2839 = vunpack.c.h.b16 %v2639
  %v2840 = vunpack.c.l.b16 %v2640
  %v2841 = vunpack.c.h.b16 %v2640
  %v2842 = vunpack.c.l.b16 %v2641
  %v2843 = vunpack.c.h.b16 %v2641
  %v2844 = vunpack.c.l.b16 %v2642
  %v2845 = vunpack.c.h.b16 %v2642
  %v2846 = vunpack.c.l.b16 %v2643
  %v2847 = vunpack.c.h.b16 %v2643
  %v2848 = vunpack.c.l.b16 %v2644
  %v2849 = vunpack.c.h.b16 %v2644
  %v2850 = vunpack.c.l.b16 %v2645
  %v2851 = vunpack.c.h.b16 %v2645
  %v2852 = vunpack.c.l.b16 %v2646
  %v2853 = vunpack.c.h.b16 %v2646
  %v2854 = vunpack.c.l.b16 %v2647
  %v2855 = vunpack.c.h.b16 %v2647
  %v2856 = vunpack.c.l.b16 %v2648
  %v2857 = vunpack.c.h.b16 %v2648
  %v2858 = vunpack.c.l.b16 %v2649
  %v2859 = vunpack.c.h.b16 %v2649
  %v2860 = vunpack.c.l.b16 %v2650
  %v2861 = vunpack.c.h.b16 %v2650
  %v2862 = vunpack.c.l.b16 %v2651
  %v2863 = vunpack.c.h.b16 %v2651
  %v2864 = vpack.c.b16 %v2740, %v2736
  %v2865 = vpack.c.b16 %v2741, %v2737
  %v2866 = vpack.c.b16 %v2742, %v2738
  %v2867 = vpack.c.b16 %v2743, %v2739
  %v2868 = vpack.c.b16 %v2748, %v2744
  %v2869 = vpack.c.b16 %v2749, %v2745
  %v2870 = vpack.c.b16 %v2750, %v2746
  %v2871 = vpack.c.b16 %v2751, %v2747
  %v2872 = vpack.c.b16 %v2756, %v2752
  %v2873 = vpack.c.b16 %v2757, %v2753
  %v2874 = vpack.c.b16 %v2758, %v2754
  %v2875 = vpack.c.b16 %v2759, %v2755
  %v2876 = vpack.c.b16 %v2764, %v2760
  %v2877 = vpack.c.b16 %v2765, %v2761
  %v2878 = vpack.c.b16 %v2766, %v2762
  %v2879 = vpack.c.b16 %v2767, %v2763
  %v2880 = vpack.c.b16 %v2772, %v2768
  %v2881 = vpack.c.b16 %v2773, %v2769
  %v2882 = vpack.c.b16 %v2774, %v2770
  %v2883 = vpack.c.b16 %v2775, %v2771
  %v2884 = vpack.c.b16 %v2780, %v2776
  %v2885 = vpack.c.b16 %v2781, %v2777
  %v2886 = vpack.c.b16 %v2782, %v2778
  %v2887 = vpack.c.b16 %v2783, %v2779
  %v2888 = vpack.c.b16 %v2788, %v2784
  %v2889 = vpack.c.b16 %v2789, %v2785
  %v2890 = vpack.c.b16 %v2790, %v2786
  %v2891 = vpack.c.b16 %v2791, %v2787
  %v2892 = vpack.c.b16 %v2796, %v2792
  %v2893 = vpack.c.b16 %v2797, %v2793
  %v2894 = vpack.c.b16 %v2798, %v2794
  %v2895 = vpack.c.b16 %v2799, %v2795
  %v2896 = vpack.c.b16 %v2804, %v2800
  %v2897 = vpack.c.b16 %v2805, %v2801
  %v2898 = vpack.c.b16 %v2806, %v2802
  %v2899 = vpack.c.b16 %v2807, %v2803
  %v2900 = vpack.c.b16 %v2812, %v2808
  %v2901 = vpack.c.b16 %v2813, %v2809
  %v2902 = vpack.c.b16 %v2814, %v2810
  %v2903 = vpack.c.b16 %v2815, %v2811
  %v2904 = vpack.c.b16 %v2820, %v2816
  %v2905 = vpack.c.b16 %v2821, %v2817
  %v2906 = vpack.c.b16 %v2822, %v2818
  %v2907 = vpack.c.b16 %v2823, %v2819
  %v2908 = vpack.c.b16 %v2828, %v2824
  %v2909 = vpack.c.b16 %v2829, %v2825
  %v2910 = vpack.c.b16 %v2830, %v2826
  %v2911 = vpack.c.b16 %v2831, %v2827
  %v2912 = vpack.c.b16 %v2836, %v2832
  %v2913 = vpack.c.b16 %v2837, %v2833
  %v2914 = vpack.c.b16 %v2838, %v2834
  %v2915 = vpack.c.b16 %v2839, %v2835
  %v2916 = vpack.c.b16 %v2844, %v2840
  %v2917 = vpack.c.b16 %v2845, %v2841
  %v2918 = vpack.c.b16 %v2846, %v2842
  %v2919 = vpack.c.b16 %v2847, %v2843
  %v2920 = vpack.c.b16 %v2852, %v2848
  %v2921 = vpack.c.b16 %v2853, %v2849
  %v2922 = vpack.c.b16 %v2854, %v2850
  %v2923 = vpack.c.b16 %v2855, %v2851
  %v2924 = vpack.c.b16 %v2860, %v2856
  %v2925 = vpack.c.b16 %v2861, %v2857
  %v2926 = vpack.c.b16 %v2862, %v2858
  %v2927 = vpack.c.b16 %v2863, %v2859
  %2992 = vmatprep.subr.bf16.mxu0 %v2893
  %2993 = vmatpush1.bf16.msra.mxu0 %v2892
  %2994 = vmatprep.subr.bf16.mxu0 %v2889
  %2995 = vmatpush1.bf16.msra.mxu0 %v2888
  %2996 = vmatprep.subr.bf16.mxu0 %v2885
  %2997 = vmatpush1.bf16.msra.mxu0 %v2884
  %2998 = vmatprep.subr.bf16.mxu0 %v2881
  %2999 = vmatpush1.bf16.msra.mxu0 %v2880
  %3000 = vmatprep.subr.bf16.mxu0 %v2877
  %3001 = vmatpush1.bf16.msra.mxu0 %v2876
  %3002 = vmatprep.subr.bf16.mxu0 %v2873
  %3003 = vmatpush1.bf16.msra.mxu0 %v2872
  %3004 = vmatprep.subr.bf16.mxu0 %v2869
  %3005 = vmatpush1.bf16.msra.mxu0 %v2868
  %3006 = vmatprep.subr.bf16.mxu0 %v2865
  %3007 = vmatpush1.bf16.msra.mxu0 %v2864
  %3008 = vmatprep.subr.bf16.mxu0 %v2925
  %3009 = vmatpush2.bf16.msra.mxu0 %v2924
  %3010 = vmatprep.subr.bf16.mxu0 %v2921
  %3011 = vmatpush2.bf16.msra.mxu0 %v2920
  %3012 = vmatprep.subr.bf16.mxu0 %v2917
  %3013 = vmatpush2.bf16.msra.mxu0 %v2916
  %3014 = vmatprep.subr.bf16.mxu0 %v2913
  %3015 = vmatpush2.bf16.msra.mxu0 %v2912
  %3016 = vmatprep.subr.bf16.mxu0 %v2909
  %3017 = vmatpush2.bf16.msra.mxu0 %v2908
  %3018 = vmatprep.subr.bf16.mxu0 %v2905
  %3019 = vmatpush2.bf16.msra.mxu0 %v2904
  %3020 = vmatprep.subr.bf16.mxu0 %v2901
  %3021 = vmatpush2.bf16.msra.mxu0 %v2900
  %3022 = vmatprep.subr.bf16.mxu0 %v2897
  %3023 = vmatpush2.bf16.msra.mxu0 %v2896
  %3024 = vmatprep.mubr.bf16.mxu0 %v2663
  %3025 = vmatmul.mubr.bf16.gmra.mxu0 %v2660
  %v3026 = vpop.f32.mrf.mxu0
  %v3027 = vadd.f32 0.0, %v3026
  %v3028 = vpop.f32.mrf.mxu0
  %v3029 = vadd.f32 0.0, %v3028
  %v3030 = vpop.f32.mrf.mxu0
  %v3031 = vadd.f32 0.0, %v3030
  %v3032 = vpop.f32.mrf.mxu0
  %v3033 = vadd.f32 0.0, %v3032
  %3034 = vmatprep.mubr.bf16.mxu0 %v2667
  %3035 = vmatmul.mubr.bf16.gmra.mxu0 %v2665
  %v3036 = vpop.f32.mrf.mxu0
  %v3037 = vadd.f32 0.0, %v3036
  %v3038 = vpop.f32.mrf.mxu0
  %v3039 = vadd.f32 0.0, %v3038
  %v3040 = vpop.f32.mrf.mxu0
  %v3041 = vadd.f32 0.0, %v3040
  %v3042 = vpop.f32.mrf.mxu0
  %v3043 = vadd.f32 0.0, %v3042
  %3044 = vdwg.mxu0
  %3045 = vmatprep.subr.bf16.mxu0 %v2895
  %3046 = vmatpush1.bf16.msra.mxu0 %v2894
  %3047 = vmatprep.subr.bf16.mxu0 %v2891
  %3048 = vmatpush1.bf16.msra.mxu0 %v2890
  %3049 = vmatprep.subr.bf16.mxu0 %v2887
  %3050 = vmatpush1.bf16.msra.mxu0 %v2886
  %3051 = vmatprep.subr.bf16.mxu0 %v2883
  %3052 = vmatpush1.bf16.msra.mxu0 %v2882
  %3053 = vmatprep.subr.bf16.mxu0 %v2879
  %3054 = vmatpush1.bf16.msra.mxu0 %v2878
  %3055 = vmatprep.subr.bf16.mxu0 %v2875
  %3056 = vmatpush1.bf16.msra.mxu0 %v2874
  %3057 = vmatprep.subr.bf16.mxu0 %v2871
  %3058 = vmatpush1.bf16.msra.mxu0 %v2870
  %3059 = vmatprep.subr.bf16.mxu0 %v2867
  %3060 = vmatpush1.bf16.msra.mxu0 %v2866
  %3061 = vmatprep.subr.bf16.mxu0 %v2927
  %3062 = vmatpush2.bf16.msra.mxu0 %v2926
  %3063 = vmatprep.subr.bf16.mxu0 %v2923
  %3064 = vmatpush2.bf16.msra.mxu0 %v2922
  %3065 = vmatprep.subr.bf16.mxu0 %v2919
  %3066 = vmatpush2.bf16.msra.mxu0 %v2918
  %3067 = vmatprep.subr.bf16.mxu0 %v2915
  %3068 = vmatpush2.bf16.msra.mxu0 %v2914
  %3069 = vmatprep.subr.bf16.mxu0 %v2911
  %3070 = vmatpush2.bf16.msra.mxu0 %v2910
  %3071 = vmatprep.subr.bf16.mxu0 %v2907
  %3072 = vmatpush2.bf16.msra.mxu0 %v2906
  %3073 = vmatprep.subr.bf16.mxu0 %v2903
  %3074 = vmatpush2.bf16.msra.mxu0 %v2902
  %3075 = vmatprep.subr.bf16.mxu0 %v2899
  %3076 = vmatpush2.bf16.msra.mxu0 %v2898
  %3077 = vmatprep.mubr.bf16.mxu0 %v2663
  %3078 = vmatmul.mubr.bf16.gmra.mxu0 %v2660
  %v3079 = vpop.f32.mrf.mxu0
  %v3080 = vadd.f32 0.0, %v3079
  %v3081 = vpop.f32.mrf.mxu0
  %v3082 = vadd.f32 0.0, %v3081
  %v3083 = vpop.f32.mrf.mxu0
  %v3084 = vadd.f32 0.0, %v3083
  %v3085 = vpop.f32.mrf.mxu0
  %v3086 = vadd.f32 0.0, %v3085
  %3087 = vmatprep.mubr.bf16.mxu0 %v2667
  %3088 = vmatmul.mubr.bf16.gmra.mxu0 %v2665
  %v3089 = vpop.f32.mrf.mxu0
  %v3090 = vadd.f32 0.0, %v3089
  %v3091 = vpop.f32.mrf.mxu0
  %v3092 = vadd.f32 0.0, %v3091
  %v3093 = vpop.f32.mrf.mxu0
  %v3094 = vadd.f32 0.0, %v3093
  %v3095 = vpop.f32.mrf.mxu0
  %v3096 = vadd.f32 0.0, %v3095
  %3097 = vdwg.mxu0
  %v3098 = vadd.f32 %v2571, %v3027
  %v3099 = vadd.f32 %v2572, %v3029
  %v3100 = vadd.f32 %v2573, %v3080
  %v3101 = vadd.f32 %v2574, %v3082
  %v3102 = vadd.f32 %v2575, %v3031
  %v3103 = vadd.f32 %v2576, %v3033
  %v3104 = vadd.f32 %v2577, %v3084
  %v3105 = vadd.f32 %v2578, %v3086
  %v3106 = vadd.f32 %v2579, %v3037
  %v3107 = vadd.f32 %v2580, %v3039
  %v3108 = vadd.f32 %v2581, %v3090
  %v3109 = vadd.f32 %v2582, %v3092
  %v3110 = vadd.f32 %v2583, %v3041
  %v3111 = vadd.f32 %v2584, %v3043
  %v3112 = vadd.f32 %v2585, %v3094
  %v3113 = vadd.f32 %v2586, %v3096
  %s3114 = scalar_lea.vmem %s3, 2048
  %v3115 = vld [vmem:[%s3114] sm:$0xff]
  %v3116 = vld [vmem:[%s3114 + $0x8] sm:$0xff]
  %v3117 = vld [vmem:[%s3114 + $0x10] sm:$0xff]
  %v3118 = vld [vmem:[%s3114 + $0x18] sm:$0xff]
  %v3119 = vld [vmem:[%s3114 + $0x20] sm:$0xff]
  %v3120 = vld [vmem:[%s3114 + $0x28] sm:$0xff]
  %v3121 = vld [vmem:[%s3114 + $0x30] sm:$0xff]
  %v3122 = vld [vmem:[%s3114 + $0x38] sm:$0xff]
  %v3123 = vld [vmem:[%s3114 + $0x40] sm:$0xff]
  %v3124 = vld [vmem:[%s3114 + $0x48] sm:$0xff]
  %v3125 = vld [vmem:[%s3114 + $0x50] sm:$0xff]
  %v3126 = vld [vmem:[%s3114 + $0x58] sm:$0xff]
  %v3127 = vld [vmem:[%s3114 + $0x60] sm:$0xff]
  %v3128 = vld [vmem:[%s3114 + $0x68] sm:$0xff]
  %v3129 = vld [vmem:[%s3114 + $0x70] sm:$0xff]
  %v3130 = vld [vmem:[%s3114 + $0x78] sm:$0xff]
  %v3131 = vld [vmem:[%s3114 + $0x80] sm:$0xff]
  %v3132 = vld [vmem:[%s3114 + $0x88] sm:$0xff]
  %v3133 = vld [vmem:[%s3114 + $0x90] sm:$0xff]
  %v3134 = vld [vmem:[%s3114 + $0x98] sm:$0xff]
  %v3135 = vld [vmem:[%s3114 + $0xa0] sm:$0xff]
  %v3136 = vld [vmem:[%s3114 + $0xa8] sm:$0xff]
  %v3137 = vld [vmem:[%s3114 + $0xb0] sm:$0xff]
  %v3138 = vld [vmem:[%s3114 + $0xb8] sm:$0xff]
  %v3139 = vld [vmem:[%s3114 + $0xc0] sm:$0xff]
  %v3140 = vld [vmem:[%s3114 + $0xc8] sm:$0xff]
  %v3141 = vld [vmem:[%s3114 + $0xd0] sm:$0xff]
  %v3142 = vld [vmem:[%s3114 + $0xd8] sm:$0xff]
  %v3143 = vld [vmem:[%s3114 + $0xe0] sm:$0xff]
  %v3144 = vld [vmem:[%s3114 + $0xe8] sm:$0xff]
  %v3145 = vld [vmem:[%s3114 + $0xf0] sm:$0xff]
  %v3146 = vld [vmem:[%s3114 + $0xf8] sm:$0xff]
  %v3147 = vld [vmem:[%s3114 + $0x100] sm:$0xff]
  %v3148 = vld [vmem:[%s3114 + $0x108] sm:$0xff]
  %v3149 = vld [vmem:[%s3114 + $0x110] sm:$0xff]
  %v3150 = vld [vmem:[%s3114 + $0x118] sm:$0xff]
  %v3151 = vld [vmem:[%s3114 + $0x120] sm:$0xff]
  %v3152 = vld [vmem:[%s3114 + $0x128] sm:$0xff]
  %v3153 = vld [vmem:[%s3114 + $0x130] sm:$0xff]
  %v3154 = vld [vmem:[%s3114 + $0x138] sm:$0xff]
  %v3155 = vld [vmem:[%s3114 + $0x140] sm:$0xff]
  %v3156 = vld [vmem:[%s3114 + $0x148] sm:$0xff]
  %v3157 = vld [vmem:[%s3114 + $0x150] sm:$0xff]
  %v3158 = vld [vmem:[%s3114 + $0x158] sm:$0xff]
  %v3159 = vld [vmem:[%s3114 + $0x160] sm:$0xff]
  %v3160 = vld [vmem:[%s3114 + $0x168] sm:$0xff]
  %v3161 = vld [vmem:[%s3114 + $0x170] sm:$0xff]
  %v3162 = vld [vmem:[%s3114 + $0x178] sm:$0xff]
  %v3163 = vld [vmem:[%s3114 + $0x180] sm:$0xff]
  %v3164 = vld [vmem:[%s3114 + $0x188] sm:$0xff]
  %v3165 = vld [vmem:[%s3114 + $0x190] sm:$0xff]
  %v3166 = vld [vmem:[%s3114 + $0x198] sm:$0xff]
  %v3167 = vld [vmem:[%s3114 + $0x1a0] sm:$0xff]
  %v3168 = vld [vmem:[%s3114 + $0x1a8] sm:$0xff]
  %v3169 = vld [vmem:[%s3114 + $0x1b0] sm:$0xff]
  %v3170 = vld [vmem:[%s3114 + $0x1b8] sm:$0xff]
  %v3171 = vld [vmem:[%s3114 + $0x1c0] sm:$0xff]
  %v3172 = vld [vmem:[%s3114 + $0x1c8] sm:$0xff]
  %v3173 = vld [vmem:[%s3114 + $0x1d0] sm:$0xff]
  %v3174 = vld [vmem:[%s3114 + $0x1d8] sm:$0xff]
  %v3175 = vld [vmem:[%s3114 + $0x1e0] sm:$0xff]
  %v3176 = vld [vmem:[%s3114 + $0x1e8] sm:$0xff]
  %v3177 = vld [vmem:[%s3114 + $0x1f0] sm:$0xff]
  %v3178 = vld [vmem:[%s3114 + $0x1f8] sm:$0xff]
  %v3243 = vunpack.c.l.b16 %v3115
  %v3244 = vunpack.c.h.b16 %v3115
  %v3245 = vunpack.c.l.b16 %v3116
  %v3246 = vunpack.c.h.b16 %v3116
  %v3247 = vunpack.c.l.b16 %v3117
  %v3248 = vunpack.c.h.b16 %v3117
  %v3249 = vunpack.c.l.b16 %v3118
  %v3250 = vunpack.c.h.b16 %v3118
  %v3251 = vunpack.c.l.b16 %v3119
  %v3252 = vunpack.c.h.b16 %v3119
  %v3253 = vunpack.c.l.b16 %v3120
  %v3254 = vunpack.c.h.b16 %v3120
  %v3255 = vunpack.c.l.b16 %v3121
  %v3256 = vunpack.c.h.b16 %v3121
  %v3257 = vunpack.c.l.b16 %v3122
  %v3258 = vunpack.c.h.b16 %v3122
  %v3259 = vunpack.c.l.b16 %v3123
  %v3260 = vunpack.c.h.b16 %v3123
  %v3261 = vunpack.c.l.b16 %v3124
  %v3262 = vunpack.c.h.b16 %v3124
  %v3263 = vunpack.c.l.b16 %v3125
  %v3264 = vunpack.c.h.b16 %v3125
  %v3265 = vunpack.c.l.b16 %v3126
  %v3266 = vunpack.c.h.b16 %v3126
  %v3267 = vunpack.c.l.b16 %v3127
  %v3268 = vunpack.c.h.b16 %v3127
  %v3269 = vunpack.c.l.b16 %v3128
  %v3270 = vunpack.c.h.b16 %v3128
  %v3271 = vunpack.c.l.b16 %v3129
  %v3272 = vunpack.c.h.b16 %v3129
  %v3273 = vunpack.c.l.b16 %v3130
  %v3274 = vunpack.c.h.b16 %v3130
  %v3275 = vunpack.c.l.b16 %v3131
  %v3276 = vunpack.c.h.b16 %v3131
  %v3277 = vunpack.c.l.b16 %v3132
  %v3278 = vunpack.c.h.b16 %v3132
  %v3279 = vunpack.c.l.b16 %v3133
  %v3280 = vunpack.c.h.b16 %v3133
  %v3281 = vunpack.c.l.b16 %v3134
  %v3282 = vunpack.c.h.b16 %v3134
  %v3283 = vunpack.c.l.b16 %v3135
  %v3284 = vunpack.c.h.b16 %v3135
  %v3285 = vunpack.c.l.b16 %v3136
  %v3286 = vunpack.c.h.b16 %v3136
  %v3287 = vunpack.c.l.b16 %v3137
  %v3288 = vunpack.c.h.b16 %v3137
  %v3289 = vunpack.c.l.b16 %v3138
  %v3290 = vunpack.c.h.b16 %v3138
  %v3291 = vunpack.c.l.b16 %v3139
  %v3292 = vunpack.c.h.b16 %v3139
  %v3293 = vunpack.c.l.b16 %v3140
  %v3294 = vunpack.c.h.b16 %v3140
  %v3295 = vunpack.c.l.b16 %v3141
  %v3296 = vunpack.c.h.b16 %v3141
  %v3297 = vunpack.c.l.b16 %v3142
  %v3298 = vunpack.c.h.b16 %v3142
  %v3299 = vunpack.c.l.b16 %v3143
  %v3300 = vunpack.c.h.b16 %v3143
  %v3301 = vunpack.c.l.b16 %v3144
  %v3302 = vunpack.c.h.b16 %v3144
  %v3303 = vunpack.c.l.b16 %v3145
  %v3304 = vunpack.c.h.b16 %v3145
  %v3305 = vunpack.c.l.b16 %v3146
  %v3306 = vunpack.c.h.b16 %v3146
  %v3307 = vunpack.c.l.b16 %v3147
  %v3308 = vunpack.c.h.b16 %v3147
  %v3309 = vunpack.c.l.b16 %v3148
  %v3310 = vunpack.c.h.b16 %v3148
  %v3311 = vunpack.c.l.b16 %v3149
  %v3312 = vunpack.c.h.b16 %v3149
  %v3313 = vunpack.c.l.b16 %v3150
  %v3314 = vunpack.c.h.b16 %v3150
  %v3315 = vunpack.c.l.b16 %v3151
  %v3316 = vunpack.c.h.b16 %v3151
  %v3317 = vunpack.c.l.b16 %v3152
  %v3318 = vunpack.c.h.b16 %v3152
  %v3319 = vunpack.c.l.b16 %v3153
  %v3320 = vunpack.c.h.b16 %v3153
  %v3321 = vunpack.c.l.b16 %v3154
  %v3322 = vunpack.c.h.b16 %v3154
  %v3323 = vunpack.c.l.b16 %v3155
  %v3324 = vunpack.c.h.b16 %v3155
  %v3325 = vunpack.c.l.b16 %v3156
  %v3326 = vunpack.c.h.b16 %v3156
  %v3327 = vunpack.c.l.b16 %v3157
  %v3328 = vunpack.c.h.b16 %v3157
  %v3329 = vunpack.c.l.b16 %v3158
  %v3330 = vunpack.c.h.b16 %v3158
  %v3331 = vunpack.c.l.b16 %v3159
  %v3332 = vunpack.c.h.b16 %v3159
  %v3333 = vunpack.c.l.b16 %v3160
  %v3334 = vunpack.c.h.b16 %v3160
  %v3335 = vunpack.c.l.b16 %v3161
  %v3336 = vunpack.c.h.b16 %v3161
  %v3337 = vunpack.c.l.b16 %v3162
  %v3338 = vunpack.c.h.b16 %v3162
  %v3339 = vunpack.c.l.b16 %v3163
  %v3340 = vunpack.c.h.b16 %v3163
  %v3341 = vunpack.c.l.b16 %v3164
  %v3342 = vunpack.c.h.b16 %v3164
  %v3343 = vunpack.c.l.b16 %v3165
  %v3344 = vunpack.c.h.b16 %v3165
  %v3345 = vunpack.c.l.b16 %v3166
  %v3346 = vunpack.c.h.b16 %v3166
  %v3347 = vunpack.c.l.b16 %v3167
  %v3348 = vunpack.c.h.b16 %v3167
  %v3349 = vunpack.c.l.b16 %v3168
  %v3350 = vunpack.c.h.b16 %v3168
  %v3351 = vunpack.c.l.b16 %v3169
  %v3352 = vunpack.c.h.b16 %v3169
  %v3353 = vunpack.c.l.b16 %v3170
  %v3354 = vunpack.c.h.b16 %v3170
  %v3355 = vunpack.c.l.b16 %v3171
  %v3356 = vunpack.c.h.b16 %v3171
  %v3357 = vunpack.c.l.b16 %v3172
  %v3358 = vunpack.c.h.b16 %v3172
  %v3359 = vunpack.c.l.b16 %v3173
  %v3360 = vunpack.c.h.b16 %v3173
  %v3361 = vunpack.c.l.b16 %v3174
  %v3362 = vunpack.c.h.b16 %v3174
  %v3363 = vunpack.c.l.b16 %v3175
  %v3364 = vunpack.c.h.b16 %v3175
  %v3365 = vunpack.c.l.b16 %v3176
  %v3366 = vunpack.c.h.b16 %v3176
  %v3367 = vunpack.c.l.b16 %v3177
  %v3368 = vunpack.c.h.b16 %v3177
  %v3369 = vunpack.c.l.b16 %v3178
  %v3370 = vunpack.c.h.b16 %v3178
  %v3371 = vpack.c.b16 %v3247, %v3243
  %v3372 = vpack.c.b16 %v3248, %v3244
  %v3373 = vpack.c.b16 %v3249, %v3245
  %v3374 = vpack.c.b16 %v3250, %v3246
  %v3375 = vpack.c.b16 %v3255, %v3251
  %v3376 = vpack.c.b16 %v3256, %v3252
  %v3377 = vpack.c.b16 %v3257, %v3253
  %v3378 = vpack.c.b16 %v3258, %v3254
  %v3379 = vpack.c.b16 %v3263, %v3259
  %v3380 = vpack.c.b16 %v3264, %v3260
  %v3381 = vpack.c.b16 %v3265, %v3261
  %v3382 = vpack.c.b16 %v3266, %v3262
  %v3383 = vpack.c.b16 %v3271, %v3267
  %v3384 = vpack.c.b16 %v3272, %v3268
  %v3385 = vpack.c.b16 %v3273, %v3269
  %v3386 = vpack.c.b16 %v3274, %v3270
  %v3387 = vpack.c.b16 %v3279, %v3275
  %v3388 = vpack.c.b16 %v3280, %v3276
  %v3389 = vpack.c.b16 %v3281, %v3277
  %v3390 = vpack.c.b16 %v3282, %v3278
  %v3391 = vpack.c.b16 %v3287, %v3283
  %v3392 = vpack.c.b16 %v3288, %v3284
  %v3393 = vpack.c.b16 %v3289, %v3285
  %v3394 = vpack.c.b16 %v3290, %v3286
  %v3395 = vpack.c.b16 %v3295, %v3291
  %v3396 = vpack.c.b16 %v3296, %v3292
  %v3397 = vpack.c.b16 %v3297, %v3293
  %v3398 = vpack.c.b16 %v3298, %v3294
  %v3399 = vpack.c.b16 %v3303, %v3299
  %v3400 = vpack.c.b16 %v3304, %v3300
  %v3401 = vpack.c.b16 %v3305, %v3301
  %v3402 = vpack.c.b16 %v3306, %v3302
  %v3403 = vpack.c.b16 %v3311, %v3307
  %v3404 = vpack.c.b16 %v3312, %v3308
  %v3405 = vpack.c.b16 %v3313, %v3309
  %v3406 = vpack.c.b16 %v3314, %v3310
  %v3407 = vpack.c.b16 %v3319, %v3315
  %v3408 = vpack.c.b16 %v3320, %v3316
  %v3409 = vpack.c.b16 %v3321, %v3317
  %v3410 = vpack.c.b16 %v3322, %v3318
  %v3411 = vpack.c.b16 %v3327, %v3323
  %v3412 = vpack.c.b16 %v3328, %v3324
  %v3413 = vpack.c.b16 %v3329, %v3325
  %v3414 = vpack.c.b16 %v3330, %v3326
  %v3415 = vpack.c.b16 %v3335, %v3331
  %v3416 = vpack.c.b16 %v3336, %v3332
  %v3417 = vpack.c.b16 %v3337, %v3333
  %v3418 = vpack.c.b16 %v3338, %v3334
  %v3419 = vpack.c.b16 %v3343, %v3339
  %v3420 = vpack.c.b16 %v3344, %v3340
  %v3421 = vpack.c.b16 %v3345, %v3341
  %v3422 = vpack.c.b16 %v3346, %v3342
  %v3423 = vpack.c.b16 %v3351, %v3347
  %v3424 = vpack.c.b16 %v3352, %v3348
  %v3425 = vpack.c.b16 %v3353, %v3349
  %v3426 = vpack.c.b16 %v3354, %v3350
  %v3427 = vpack.c.b16 %v3359, %v3355
  %v3428 = vpack.c.b16 %v3360, %v3356
  %v3429 = vpack.c.b16 %v3361, %v3357
  %v3430 = vpack.c.b16 %v3362, %v3358
  %v3431 = vpack.c.b16 %v3367, %v3363
  %v3432 = vpack.c.b16 %v3368, %v3364
  %v3433 = vpack.c.b16 %v3369, %v3365
  %v3434 = vpack.c.b16 %v3370, %v3366
  %3499 = vmatprep.subr.bf16.mxu0 %v3400
  %3500 = vmatpush1.bf16.msra.mxu0 %v3399
  %3501 = vmatprep.subr.bf16.mxu0 %v3396
  %3502 = vmatpush1.bf16.msra.mxu0 %v3395
  %3503 = vmatprep.subr.bf16.mxu0 %v3392
  %3504 = vmatpush1.bf16.msra.mxu0 %v3391
  %3505 = vmatprep.subr.bf16.mxu0 %v3388
  %3506 = vmatpush1.bf16.msra.mxu0 %v3387
  %3507 = vmatprep.subr.bf16.mxu0 %v3384
  %3508 = vmatpush1.bf16.msra.mxu0 %v3383
  %3509 = vmatprep.subr.bf16.mxu0 %v3380
  %3510 = vmatpush1.bf16.msra.mxu0 %v3379
  %3511 = vmatprep.subr.bf16.mxu0 %v3376
  %3512 = vmatpush1.bf16.msra.mxu0 %v3375
  %3513 = vmatprep.subr.bf16.mxu0 %v3372
  %3514 = vmatpush1.bf16.msra.mxu0 %v3371
  %3515 = vmatprep.subr.bf16.mxu0 %v3432
  %3516 = vmatpush2.bf16.msra.mxu0 %v3431
  %3517 = vmatprep.subr.bf16.mxu0 %v3428
  %3518 = vmatpush2.bf16.msra.mxu0 %v3427
  %3519 = vmatprep.subr.bf16.mxu0 %v3424
  %3520 = vmatpush2.bf16.msra.mxu0 %v3423
  %3521 = vmatprep.subr.bf16.mxu0 %v3420
  %3522 = vmatpush2.bf16.msra.mxu0 %v3419
  %3523 = vmatprep.subr.bf16.mxu0 %v3416
  %3524 = vmatpush2.bf16.msra.mxu0 %v3415
  %3525 = vmatprep.subr.bf16.mxu0 %v3412
  %3526 = vmatpush2.bf16.msra.mxu0 %v3411
  %3527 = vmatprep.subr.bf16.mxu0 %v3408
  %3528 = vmatpush2.bf16.msra.mxu0 %v3407
  %3529 = vmatprep.subr.bf16.mxu0 %v3404
  %3530 = vmatpush2.bf16.msra.mxu0 %v3403
  %3531 = vmatprep.mubr.bf16.mxu0 %v671
  %3532 = vmatmul.mubr.bf16.gmra.mxu0 %v670
  %v3533 = vpop.f32.mrf.mxu0
  %v3534 = vadd.f32 0.0, %v3533
  %v3535 = vpop.f32.mrf.mxu0
  %v3536 = vadd.f32 0.0, %v3535
  %v3537 = vpop.f32.mrf.mxu0
  %v3538 = vadd.f32 0.0, %v3537
  %v3539 = vpop.f32.mrf.mxu0
  %v3540 = vadd.f32 0.0, %v3539
  %3541 = vmatprep.mubr.bf16.mxu0 %v673
  %3542 = vmatmul.mubr.bf16.gmra.mxu0 %v672
  %v3543 = vpop.f32.mrf.mxu0
  %v3544 = vadd.f32 0.0, %v3543
  %v3545 = vpop.f32.mrf.mxu0
  %v3546 = vadd.f32 0.0, %v3545
  %v3547 = vpop.f32.mrf.mxu0
  %v3548 = vadd.f32 0.0, %v3547
  %v3549 = vpop.f32.mrf.mxu0
  %v3550 = vadd.f32 0.0, %v3549
  %3551 = vdwg.mxu0
  %3552 = vmatprep.subr.bf16.mxu0 %v3402
  %3553 = vmatpush1.bf16.msra.mxu0 %v3401
  %3554 = vmatprep.subr.bf16.mxu0 %v3398
  %3555 = vmatpush1.bf16.msra.mxu0 %v3397
  %3556 = vmatprep.subr.bf16.mxu0 %v3394
  %3557 = vmatpush1.bf16.msra.mxu0 %v3393
  %3558 = vmatprep.subr.bf16.mxu0 %v3390
  %3559 = vmatpush1.bf16.msra.mxu0 %v3389
  %3560 = vmatprep.subr.bf16.mxu0 %v3386
  %3561 = vmatpush1.bf16.msra.mxu0 %v3385
  %3562 = vmatprep.subr.bf16.mxu0 %v3382
  %3563 = vmatpush1.bf16.msra.mxu0 %v3381
  %3564 = vmatprep.subr.bf16.mxu0 %v3378
  %3565 = vmatpush1.bf16.msra.mxu0 %v3377
  %3566 = vmatprep.subr.bf16.mxu0 %v3374
  %3567 = vmatpush1.bf16.msra.mxu0 %v3373
  %3568 = vmatprep.subr.bf16.mxu0 %v3434
  %3569 = vmatpush2.bf16.msra.mxu0 %v3433
  %3570 = vmatprep.subr.bf16.mxu0 %v3430
  %3571 = vmatpush2.bf16.msra.mxu0 %v3429
  %3572 = vmatprep.subr.bf16.mxu0 %v3426
  %3573 = vmatpush2.bf16.msra.mxu0 %v3425
  %3574 = vmatprep.subr.bf16.mxu0 %v3422
  %3575 = vmatpush2.bf16.msra.mxu0 %v3421
  %3576 = vmatprep.subr.bf16.mxu0 %v3418
  %3577 = vmatpush2.bf16.msra.mxu0 %v3417
  %3578 = vmatprep.subr.bf16.mxu0 %v3414
  %3579 = vmatpush2.bf16.msra.mxu0 %v3413
  %3580 = vmatprep.subr.bf16.mxu0 %v3410
  %3581 = vmatpush2.bf16.msra.mxu0 %v3409
  %3582 = vmatprep.subr.bf16.mxu0 %v3406
  %3583 = vmatpush2.bf16.msra.mxu0 %v3405
  %3584 = vmatprep.mubr.bf16.mxu0 %v671
  %3585 = vmatmul.mubr.bf16.gmra.mxu0 %v670
  %v3586 = vpop.f32.mrf.mxu0
  %v3587 = vadd.f32 0.0, %v3586
  %v3588 = vpop.f32.mrf.mxu0
  %v3589 = vadd.f32 0.0, %v3588
  %v3590 = vpop.f32.mrf.mxu0
  %v3591 = vadd.f32 0.0, %v3590
  %v3592 = vpop.f32.mrf.mxu0
  %v3593 = vadd.f32 0.0, %v3592
  %3594 = vmatprep.mubr.bf16.mxu0 %v673
  %3595 = vmatmul.mubr.bf16.gmra.mxu0 %v672
  %v3596 = vpop.f32.mrf.mxu0
  %v3597 = vadd.f32 0.0, %v3596
  %v3598 = vpop.f32.mrf.mxu0
  %v3599 = vadd.f32 0.0, %v3598
  %v3600 = vpop.f32.mrf.mxu0
  %v3601 = vadd.f32 0.0, %v3600
  %v3602 = vpop.f32.mrf.mxu0
  %v3603 = vadd.f32 0.0, %v3602
  %3604 = vdwg.mxu0
  %v3605 = vadd.f32 %v3098, %v3534
  %v3606 = vadd.f32 %v3099, %v3536
  %v3607 = vadd.f32 %v3100, %v3587
  %v3608 = vadd.f32 %v3101, %v3589
  %v3609 = vadd.f32 %v3102, %v3538
  %v3610 = vadd.f32 %v3103, %v3540
  %v3611 = vadd.f32 %v3104, %v3591
  %v3612 = vadd.f32 %v3105, %v3593
  %v3613 = vadd.f32 %v3106, %v3544
  %v3614 = vadd.f32 %v3107, %v3546
  %v3615 = vadd.f32 %v3108, %v3597
  %v3616 = vadd.f32 %v3109, %v3599
  %v3617 = vadd.f32 %v3110, %v3548
  %v3618 = vadd.f32 %v3111, %v3550
  %v3619 = vadd.f32 %v3112, %v3601
  %v3620 = vadd.f32 %v3113, %v3603
  %3621 = vmatprep.subr.bf16.mxu0 %v1428
  %3622 = vmatpush1.bf16.msra.mxu0 %v1427
  %3623 = vmatprep.subr.bf16.mxu0 %v1424
  %3624 = vmatpush1.bf16.msra.mxu0 %v1423
  %3625 = vmatprep.subr.bf16.mxu0 %v1420
  %3626 = vmatpush1.bf16.msra.mxu0 %v1419
  %3627 = vmatprep.subr.bf16.mxu0 %v1416
  %3628 = vmatpush1.bf16.msra.mxu0 %v1415
  %3629 = vmatprep.subr.bf16.mxu0 %v1412
  %3630 = vmatpush1.bf16.msra.mxu0 %v1411
  %3631 = vmatprep.subr.bf16.mxu0 %v1408
  %3632 = vmatpush1.bf16.msra.mxu0 %v1407
  %3633 = vmatprep.subr.bf16.mxu0 %v1404
  %3634 = vmatpush1.bf16.msra.mxu0 %v1403
  %3635 = vmatprep.subr.bf16.mxu0 %v1400
  %3636 = vmatpush1.bf16.msra.mxu0 %v1399
  %3637 = vmatprep.subr.bf16.mxu0 %v1460
  %3638 = vmatpush2.bf16.msra.mxu0 %v1459
  %3639 = vmatprep.subr.bf16.mxu0 %v1456
  %3640 = vmatpush2.bf16.msra.mxu0 %v1455
  %3641 = vmatprep.subr.bf16.mxu0 %v1452
  %3642 = vmatpush2.bf16.msra.mxu0 %v1451
  %3643 = vmatprep.subr.bf16.mxu0 %v1448
  %3644 = vmatpush2.bf16.msra.mxu0 %v1447
  %3645 = vmatprep.subr.bf16.mxu0 %v1444
  %3646 = vmatpush2.bf16.msra.mxu0 %v1443
  %3647 = vmatprep.subr.bf16.mxu0 %v1440
  %3648 = vmatpush2.bf16.msra.mxu0 %v1439
  %3649 = vmatprep.subr.bf16.mxu0 %v1436
  %3650 = vmatpush2.bf16.msra.mxu0 %v1435
  %3651 = vmatprep.subr.bf16.mxu0 %v1432
  %3652 = vmatpush2.bf16.msra.mxu0 %v1431
  %3653 = vmatprep.mubr.bf16.mxu0 %v2136
  %3654 = vmatmul.mubr.bf16.gmra.mxu0 %v2133
  %v3655 = vpop.f32.mrf.mxu0
  %v3656 = vadd.f32 0.0, %v3655
  %v3657 = vpop.f32.mrf.mxu0
  %v3658 = vadd.f32 0.0, %v3657
  %v3659 = vpop.f32.mrf.mxu0
  %v3660 = vadd.f32 0.0, %v3659
  %v3661 = vpop.f32.mrf.mxu0
  %v3662 = vadd.f32 0.0, %v3661
  %3663 = vmatprep.mubr.bf16.mxu0 %v2140
  %3664 = vmatmul.mubr.bf16.gmra.mxu0 %v2138
  %v3665 = vpop.f32.mrf.mxu0
  %v3666 = vadd.f32 0.0, %v3665
  %v3667 = vpop.f32.mrf.mxu0
  %v3668 = vadd.f32 0.0, %v3667
  %v3669 = vpop.f32.mrf.mxu0
  %v3670 = vadd.f32 0.0, %v3669
  %v3671 = vpop.f32.mrf.mxu0
  %v3672 = vadd.f32 0.0, %v3671
  %3673 = vdwg.mxu0
  %3674 = vmatprep.subr.bf16.mxu0 %v1430
  %3675 = vmatpush1.bf16.msra.mxu0 %v1429
  %3676 = vmatprep.subr.bf16.mxu0 %v1426
  %3677 = vmatpush1.bf16.msra.mxu0 %v1425
  %3678 = vmatprep.subr.bf16.mxu0 %v1422
  %3679 = vmatpush1.bf16.msra.mxu0 %v1421
  %3680 = vmatprep.subr.bf16.mxu0 %v1418
  %3681 = vmatpush1.bf16.msra.mxu0 %v1417
  %3682 = vmatprep.subr.bf16.mxu0 %v1414
  %3683 = vmatpush1.bf16.msra.mxu0 %v1413
  %3684 = vmatprep.subr.bf16.mxu0 %v1410
  %3685 = vmatpush1.bf16.msra.mxu0 %v1409
  %3686 = vmatprep.subr.bf16.mxu0 %v1406
  %3687 = vmatpush1.bf16.msra.mxu0 %v1405
  %3688 = vmatprep.subr.bf16.mxu0 %v1402
  %3689 = vmatpush1.bf16.msra.mxu0 %v1401
  %3690 = vmatprep.subr.bf16.mxu0 %v1462
  %3691 = vmatpush2.bf16.msra.mxu0 %v1461
  %3692 = vmatprep.subr.bf16.mxu0 %v1458
  %3693 = vmatpush2.bf16.msra.mxu0 %v1457
  %3694 = vmatprep.subr.bf16.mxu0 %v1454
  %3695 = vmatpush2.bf16.msra.mxu0 %v1453
  %3696 = vmatprep.subr.bf16.mxu0 %v1450
  %3697 = vmatpush2.bf16.msra.mxu0 %v1449
  %3698 = vmatprep.subr.bf16.mxu0 %v1446
  %3699 = vmatpush2.bf16.msra.mxu0 %v1445
  %3700 = vmatprep.subr.bf16.mxu0 %v1442
  %3701 = vmatpush2.bf16.msra.mxu0 %v1441
  %3702 = vmatprep.subr.bf16.mxu0 %v1438
  %3703 = vmatpush2.bf16.msra.mxu0 %v1437
  %3704 = vmatprep.subr.bf16.mxu0 %v1434
  %3705 = vmatpush2.bf16.msra.mxu0 %v1433
  %3706 = vmatprep.mubr.bf16.mxu0 %v2136
  %3707 = vmatmul.mubr.bf16.gmra.mxu0 %v2133
  %v3708 = vpop.f32.mrf.mxu0
  %v3709 = vadd.f32 0.0, %v3708
  %v3710 = vpop.f32.mrf.mxu0
  %v3711 = vadd.f32 0.0, %v3710
  %v3712 = vpop.f32.mrf.mxu0
  %v3713 = vadd.f32 0.0, %v3712
  %v3714 = vpop.f32.mrf.mxu0
  %v3715 = vadd.f32 0.0, %v3714
  %3716 = vmatprep.mubr.bf16.mxu0 %v2140
  %3717 = vmatmul.mubr.bf16.gmra.mxu0 %v2138
  %v3718 = vpop.f32.mrf.mxu0
  %v3719 = vadd.f32 0.0, %v3718
  %v3720 = vpop.f32.mrf.mxu0
  %v3721 = vadd.f32 0.0, %v3720
  %v3722 = vpop.f32.mrf.mxu0
  %v3723 = vadd.f32 0.0, %v3722
  %v3724 = vpop.f32.mrf.mxu0
  %v3725 = vadd.f32 0.0, %v3724
  %3726 = vdwg.mxu0
  %3727 = vmatprep.subr.bf16.mxu0 %v1854
  %3728 = vmatpush1.bf16.msra.mxu0 %v1853
  %3729 = vmatprep.subr.bf16.mxu0 %v1850
  %3730 = vmatpush1.bf16.msra.mxu0 %v1849
  %3731 = vmatprep.subr.bf16.mxu0 %v1846
  %3732 = vmatpush1.bf16.msra.mxu0 %v1845
  %3733 = vmatprep.subr.bf16.mxu0 %v1842
  %3734 = vmatpush1.bf16.msra.mxu0 %v1841
  %3735 = vmatprep.subr.bf16.mxu0 %v1838
  %3736 = vmatpush1.bf16.msra.mxu0 %v1837
  %3737 = vmatprep.subr.bf16.mxu0 %v1834
  %3738 = vmatpush1.bf16.msra.mxu0 %v1833
  %3739 = vmatprep.subr.bf16.mxu0 %v1830
  %3740 = vmatpush1.bf16.msra.mxu0 %v1829
  %3741 = vmatprep.subr.bf16.mxu0 %v1826
  %3742 = vmatpush1.bf16.msra.mxu0 %v1825
  %3743 = vmatprep.subr.bf16.mxu0 %v1886
  %3744 = vmatpush2.bf16.msra.mxu0 %v1885
  %3745 = vmatprep.subr.bf16.mxu0 %v1882
  %3746 = vmatpush2.bf16.msra.mxu0 %v1881
  %3747 = vmatprep.subr.bf16.mxu0 %v1878
  %3748 = vmatpush2.bf16.msra.mxu0 %v1877
  %3749 = vmatprep.subr.bf16.mxu0 %v1874
  %3750 = vmatpush2.bf16.msra.mxu0 %v1873
  %3751 = vmatprep.subr.bf16.mxu0 %v1870
  %3752 = vmatpush2.bf16.msra.mxu0 %v1869
  %3753 = vmatprep.subr.bf16.mxu0 %v1866
  %3754 = vmatpush2.bf16.msra.mxu0 %v1865
  %3755 = vmatprep.subr.bf16.mxu0 %v1862
  %3756 = vmatpush2.bf16.msra.mxu0 %v1861
  %3757 = vmatprep.subr.bf16.mxu0 %v1858
  %3758 = vmatpush2.bf16.msra.mxu0 %v1857
  %3759 = vmatprep.mubr.bf16.mxu0 %v1073
  %3760 = vmatmul.mubr.bf16.gmra.mxu0 %v1072
  %v3761 = vpop.f32.mrf.mxu0
  %v3762 = vadd.f32 %v3656, %v3761
  %v3763 = vpop.f32.mrf.mxu0
  %v3764 = vadd.f32 %v3658, %v3763
  %v3765 = vpop.f32.mrf.mxu0
  %v3766 = vadd.f32 %v3660, %v3765
  %v3767 = vpop.f32.mrf.mxu0
  %v3768 = vadd.f32 %v3662, %v3767
  %3769 = vmatprep.mubr.bf16.mxu0 %v1075
  %3770 = vmatmul.mubr.bf16.gmra.mxu0 %v1074
  %v3771 = vpop.f32.mrf.mxu0
  %v3772 = vadd.f32 %v3666, %v3771
  %v3773 = vpop.f32.mrf.mxu0
  %v3774 = vadd.f32 %v3668, %v3773
  %v3775 = vpop.f32.mrf.mxu0
  %v3776 = vadd.f32 %v3670, %v3775
  %v3777 = vpop.f32.mrf.mxu0
  %v3778 = vadd.f32 %v3672, %v3777
  %3779 = vdwg.mxu0
  %3780 = vmatprep.subr.bf16.mxu0 %v1856
  %3781 = vmatpush1.bf16.msra.mxu0 %v1855
  %3782 = vmatprep.subr.bf16.mxu0 %v1852
  %3783 = vmatpush1.bf16.msra.mxu0 %v1851
  %3784 = vmatprep.subr.bf16.mxu0 %v1848
  %3785 = vmatpush1.bf16.msra.mxu0 %v1847
  %3786 = vmatprep.subr.bf16.mxu0 %v1844
  %3787 = vmatpush1.bf16.msra.mxu0 %v1843
  %3788 = vmatprep.subr.bf16.mxu0 %v1840
  %3789 = vmatpush1.bf16.msra.mxu0 %v1839
  %3790 = vmatprep.subr.bf16.mxu0 %v1836
  %3791 = vmatpush1.bf16.msra.mxu0 %v1835
  %3792 = vmatprep.subr.bf16.mxu0 %v1832
  %3793 = vmatpush1.bf16.msra.mxu0 %v1831
  %3794 = vmatprep.subr.bf16.mxu0 %v1828
  %3795 = vmatpush1.bf16.msra.mxu0 %v1827
  %3796 = vmatprep.subr.bf16.mxu0 %v1888
  %3797 = vmatpush2.bf16.msra.mxu0 %v1887
  %3798 = vmatprep.subr.bf16.mxu0 %v1884
  %3799 = vmatpush2.bf16.msra.mxu0 %v1883
  %3800 = vmatprep.subr.bf16.mxu0 %v1880
  %3801 = vmatpush2.bf16.msra.mxu0 %v1879
  %3802 = vmatprep.subr.bf16.mxu0 %v1876
  %3803 = vmatpush2.bf16.msra.mxu0 %v1875
  %3804 = vmatprep.subr.bf16.mxu0 %v1872
  %3805 = vmatpush2.bf16.msra.mxu0 %v1871
  %3806 = vmatprep.subr.bf16.mxu0 %v1868
  %3807 = vmatpush2.bf16.msra.mxu0 %v1867
  %3808 = vmatprep.subr.bf16.mxu0 %v1864
  %3809 = vmatpush2.bf16.msra.mxu0 %v1863
  %3810 = vmatprep.subr.bf16.mxu0 %v1860
  %3811 = vmatpush2.bf16.msra.mxu0 %v1859
  %3812 = vmatprep.mubr.bf16.mxu0 %v1073
  %3813 = vmatmul.mubr.bf16.gmra.mxu0 %v1072
  %v3814 = vpop.f32.mrf.mxu0
  %v3815 = vadd.f32 %v3709, %v3814
  %v3816 = vpop.f32.mrf.mxu0
  %v3817 = vadd.f32 %v3711, %v3816
  %v3818 = vpop.f32.mrf.mxu0
  %v3819 = vadd.f32 %v3713, %v3818
  %v3820 = vpop.f32.mrf.mxu0
  %v3821 = vadd.f32 %v3715, %v3820
  %3822 = vmatprep.mubr.bf16.mxu0 %v1075
  %3823 = vmatmul.mubr.bf16.gmra.mxu0 %v1074
  %v3824 = vpop.f32.mrf.mxu0
  %v3825 = vadd.f32 %v3719, %v3824
  %v3826 = vpop.f32.mrf.mxu0
  %v3827 = vadd.f32 %v3721, %v3826
  %v3828 = vpop.f32.mrf.mxu0
  %v3829 = vadd.f32 %v3723, %v3828
  %v3830 = vpop.f32.mrf.mxu0
  %v3831 = vadd.f32 %v3725, %v3830
  %3832 = vdwg.mxu0
  %3833 = vmatprep.subr.bf16.mxu0 %v2366
  %3834 = vmatpush1.bf16.msra.mxu0 %v2365
  %3835 = vmatprep.subr.bf16.mxu0 %v2362
  %3836 = vmatpush1.bf16.msra.mxu0 %v2361
  %3837 = vmatprep.subr.bf16.mxu0 %v2358
  %3838 = vmatpush1.bf16.msra.mxu0 %v2357
  %3839 = vmatprep.subr.bf16.mxu0 %v2354
  %3840 = vmatpush1.bf16.msra.mxu0 %v2353
  %3841 = vmatprep.subr.bf16.mxu0 %v2350
  %3842 = vmatpush1.bf16.msra.mxu0 %v2349
  %3843 = vmatprep.subr.bf16.mxu0 %v2346
  %3844 = vmatpush1.bf16.msra.mxu0 %v2345
  %3845 = vmatprep.subr.bf16.mxu0 %v2342
  %3846 = vmatpush1.bf16.msra.mxu0 %v2341
  %3847 = vmatprep.subr.bf16.mxu0 %v2338
  %3848 = vmatpush1.bf16.msra.mxu0 %v2337
  %3849 = vmatprep.subr.bf16.mxu0 %v2398
  %3850 = vmatpush2.bf16.msra.mxu0 %v2397
  %3851 = vmatprep.subr.bf16.mxu0 %v2394
  %3852 = vmatpush2.bf16.msra.mxu0 %v2393
  %3853 = vmatprep.subr.bf16.mxu0 %v2390
  %3854 = vmatpush2.bf16.msra.mxu0 %v2389
  %3855 = vmatprep.subr.bf16.mxu0 %v2386
  %3856 = vmatpush2.bf16.msra.mxu0 %v2385
  %3857 = vmatprep.subr.bf16.mxu0 %v2382
  %3858 = vmatpush2.bf16.msra.mxu0 %v2381
  %3859 = vmatprep.subr.bf16.mxu0 %v2378
  %3860 = vmatpush2.bf16.msra.mxu0 %v2377
  %3861 = vmatprep.subr.bf16.mxu0 %v2374
  %3862 = vmatpush2.bf16.msra.mxu0 %v2373
  %3863 = vmatprep.subr.bf16.mxu0 %v2370
  %3864 = vmatpush2.bf16.msra.mxu0 %v2369
  %3865 = vmatprep.mubr.bf16.mxu0 %v2663
  %3866 = vmatmul.mubr.bf16.gmra.mxu0 %v2660
  %v3867 = vpop.f32.mrf.mxu0
  %v3868 = vadd.f32 0.0, %v3867
  %v3869 = vpop.f32.mrf.mxu0
  %v3870 = vadd.f32 0.0, %v3869
  %v3871 = vpop.f32.mrf.mxu0
  %v3872 = vadd.f32 0.0, %v3871
  %v3873 = vpop.f32.mrf.mxu0
  %v3874 = vadd.f32 0.0, %v3873
  %3875 = vmatprep.mubr.bf16.mxu0 %v2667
  %3876 = vmatmul.mubr.bf16.gmra.mxu0 %v2665
  %v3877 = vpop.f32.mrf.mxu0
  %v3878 = vadd.f32 0.0, %v3877
  %v3879 = vpop.f32.mrf.mxu0
  %v3880 = vadd.f32 0.0, %v3879
  %v3881 = vpop.f32.mrf.mxu0
  %v3882 = vadd.f32 0.0, %v3881
  %v3883 = vpop.f32.mrf.mxu0
  %v3884 = vadd.f32 0.0, %v3883
  %3885 = vdwg.mxu0
  %3886 = vmatprep.subr.bf16.mxu0 %v2368
  %3887 = vmatpush1.bf16.msra.mxu0 %v2367
  %3888 = vmatprep.subr.bf16.mxu0 %v2364
  %3889 = vmatpush1.bf16.msra.mxu0 %v2363
  %3890 = vmatprep.subr.bf16.mxu0 %v2360
  %3891 = vmatpush1.bf16.msra.mxu0 %v2359
  %3892 = vmatprep.subr.bf16.mxu0 %v2356
  %3893 = vmatpush1.bf16.msra.mxu0 %v2355
  %3894 = vmatprep.subr.bf16.mxu0 %v2352
  %3895 = vmatpush1.bf16.msra.mxu0 %v2351
  %3896 = vmatprep.subr.bf16.mxu0 %v2348
  %3897 = vmatpush1.bf16.msra.mxu0 %v2347
  %3898 = vmatprep.subr.bf16.mxu0 %v2344
  %3899 = vmatpush1.bf16.msra.mxu0 %v2343
  %3900 = vmatprep.subr.bf16.mxu0 %v2340
  %3901 = vmatpush1.bf16.msra.mxu0 %v2339
  %3902 = vmatprep.subr.bf16.mxu0 %v2400
  %3903 = vmatpush2.bf16.msra.mxu0 %v2399
  %3904 = vmatprep.subr.bf16.mxu0 %v2396
  %3905 = vmatpush2.bf16.msra.mxu0 %v2395
  %3906 = vmatprep.subr.bf16.mxu0 %v2392
  %3907 = vmatpush2.bf16.msra.mxu0 %v2391
  %3908 = vmatprep.subr.bf16.mxu0 %v2388
  %3909 = vmatpush2.bf16.msra.mxu0 %v2387
  %3910 = vmatprep.subr.bf16.mxu0 %v2384
  %3911 = vmatpush2.bf16.msra.mxu0 %v2383
  %3912 = vmatprep.subr.bf16.mxu0 %v2380
  %3913 = vmatpush2.bf16.msra.mxu0 %v2379
  %3914 = vmatprep.subr.bf16.mxu0 %v2376
  %3915 = vmatpush2.bf16.msra.mxu0 %v2375
  %3916 = vmatprep.subr.bf16.mxu0 %v2372
  %3917 = vmatpush2.bf16.msra.mxu0 %v2371
  %3918 = vmatprep.mubr.bf16.mxu0 %v2663
  %3919 = vmatmul.mubr.bf16.gmra.mxu0 %v2660
  %v3920 = vpop.f32.mrf.mxu0
  %v3921 = vadd.f32 0.0, %v3920
  %v3922 = vpop.f32.mrf.mxu0
  %v3923 = vadd.f32 0.0, %v3922
  %v3924 = vpop.f32.mrf.mxu0
  %v3925 = vadd.f32 0.0, %v3924
  %v3926 = vpop.f32.mrf.mxu0
  %v3927 = vadd.f32 0.0, %v3926
  %3928 = vmatprep.mubr.bf16.mxu0 %v2667
  %3929 = vmatmul.mubr.bf16.gmra.mxu0 %v2665
  %v3930 = vpop.f32.mrf.mxu0
  %v3931 = vadd.f32 0.0, %v3930
  %v3932 = vpop.f32.mrf.mxu0
  %v3933 = vadd.f32 0.0, %v3932
  %v3934 = vpop.f32.mrf.mxu0
  %v3935 = vadd.f32 0.0, %v3934
  %v3936 = vpop.f32.mrf.mxu0
  %v3937 = vadd.f32 0.0, %v3936
  %3938 = vdwg.mxu0
  %v3939 = vadd.f32 %v3762, %v3868
  %v3940 = vadd.f32 %v3764, %v3870
  %v3941 = vadd.f32 %v3815, %v3921
  %v3942 = vadd.f32 %v3817, %v3923
  %v3943 = vadd.f32 %v3766, %v3872
  %v3944 = vadd.f32 %v3768, %v3874
  %v3945 = vadd.f32 %v3819, %v3925
  %v3946 = vadd.f32 %v3821, %v3927
  %v3947 = vadd.f32 %v3772, %v3878
  %v3948 = vadd.f32 %v3774, %v3880
  %v3949 = vadd.f32 %v3825, %v3931
  %v3950 = vadd.f32 %v3827, %v3933
  %v3951 = vadd.f32 %v3776, %v3882
  %v3952 = vadd.f32 %v3778, %v3884
  %v3953 = vadd.f32 %v3829, %v3935
  %v3954 = vadd.f32 %v3831, %v3937
  %3955 = vmatprep.subr.bf16.mxu0 %v2893
  %3956 = vmatpush1.bf16.msra.mxu0 %v2892
  %3957 = vmatprep.subr.bf16.mxu0 %v2889
  %3958 = vmatpush1.bf16.msra.mxu0 %v2888
  %3959 = vmatprep.subr.bf16.mxu0 %v2885
  %3960 = vmatpush1.bf16.msra.mxu0 %v2884
  %3961 = vmatprep.subr.bf16.mxu0 %v2881
  %3962 = vmatpush1.bf16.msra.mxu0 %v2880
  %3963 = vmatprep.subr.bf16.mxu0 %v2877
  %3964 = vmatpush1.bf16.msra.mxu0 %v2876
  %3965 = vmatprep.subr.bf16.mxu0 %v2873
  %3966 = vmatpush1.bf16.msra.mxu0 %v2872
  %3967 = vmatprep.subr.bf16.mxu0 %v2869
  %3968 = vmatpush1.bf16.msra.mxu0 %v2868
  %3969 = vmatprep.subr.bf16.mxu0 %v2865
  %3970 = vmatpush1.bf16.msra.mxu0 %v2864
  %3971 = vmatprep.subr.bf16.mxu0 %v2925
  %3972 = vmatpush2.bf16.msra.mxu0 %v2924
  %3973 = vmatprep.subr.bf16.mxu0 %v2921
  %3974 = vmatpush2.bf16.msra.mxu0 %v2920
  %3975 = vmatprep.subr.bf16.mxu0 %v2917
  %3976 = vmatpush2.bf16.msra.mxu0 %v2916
  %3977 = vmatprep.subr.bf16.mxu0 %v2913
  %3978 = vmatpush2.bf16.msra.mxu0 %v2912
  %3979 = vmatprep.subr.bf16.mxu0 %v2909
  %3980 = vmatpush2.bf16.msra.mxu0 %v2908
  %3981 = vmatprep.subr.bf16.mxu0 %v2905
  %3982 = vmatpush2.bf16.msra.mxu0 %v2904
  %3983 = vmatprep.subr.bf16.mxu0 %v2901
  %3984 = vmatpush2.bf16.msra.mxu0 %v2900
  %3985 = vmatprep.subr.bf16.mxu0 %v2897
  %3986 = vmatpush2.bf16.msra.mxu0 %v2896
  %3987 = vmatprep.mubr.bf16.mxu0 %v671
  %3988 = vmatmul.mubr.bf16.gmra.mxu0 %v670
  %v3989 = vpop.f32.mrf.mxu0
  %v3990 = vadd.f32 0.0, %v3989
  %v3991 = vpop.f32.mrf.mxu0
  %v3992 = vadd.f32 0.0, %v3991
  %v3993 = vpop.f32.mrf.mxu0
  %v3994 = vadd.f32 0.0, %v3993
  %v3995 = vpop.f32.mrf.mxu0
  %v3996 = vadd.f32 0.0, %v3995
  %3997 = vmatprep.mubr.bf16.mxu0 %v673
  %3998 = vmatmul.mubr.bf16.gmra.mxu0 %v672
  %v3999 = vpop.f32.mrf.mxu0
  %v4000 = vadd.f32 0.0, %v3999
  %v4001 = vpop.f32.mrf.mxu0
  %v4002 = vadd.f32 0.0, %v4001
  %v4003 = vpop.f32.mrf.mxu0
  %v4004 = vadd.f32 0.0, %v4003
  %v4005 = vpop.f32.mrf.mxu0
  %v4006 = vadd.f32 0.0, %v4005
  %4007 = vdwg.mxu0
  %4008 = vmatprep.subr.bf16.mxu0 %v2895
  %4009 = vmatpush1.bf16.msra.mxu0 %v2894
  %4010 = vmatprep.subr.bf16.mxu0 %v2891
  %4011 = vmatpush1.bf16.msra.mxu0 %v2890
  %4012 = vmatprep.subr.bf16.mxu0 %v2887
  %4013 = vmatpush1.bf16.msra.mxu0 %v2886
  %4014 = vmatprep.subr.bf16.mxu0 %v2883
  %4015 = vmatpush1.bf16.msra.mxu0 %v2882
  %4016 = vmatprep.subr.bf16.mxu0 %v2879
  %4017 = vmatpush1.bf16.msra.mxu0 %v2878
  %4018 = vmatprep.subr.bf16.mxu0 %v2875
  %4019 = vmatpush1.bf16.msra.mxu0 %v2874
  %4020 = vmatprep.subr.bf16.mxu0 %v2871
  %4021 = vmatpush1.bf16.msra.mxu0 %v2870
  %4022 = vmatprep.subr.bf16.mxu0 %v2867
  %4023 = vmatpush1.bf16.msra.mxu0 %v2866
  %4024 = vmatprep.subr.bf16.mxu0 %v2927
  %4025 = vmatpush2.bf16.msra.mxu0 %v2926
  %4026 = vmatprep.subr.bf16.mxu0 %v2923
  %4027 = vmatpush2.bf16.msra.mxu0 %v2922
  %4028 = vmatprep.subr.bf16.mxu0 %v2919
  %4029 = vmatpush2.bf16.msra.mxu0 %v2918
  %4030 = vmatprep.subr.bf16.mxu0 %v2915
  %4031 = vmatpush2.bf16.msra.mxu0 %v2914
  %4032 = vmatprep.subr.bf16.mxu0 %v2911
  %4033 = vmatpush2.bf16.msra.mxu0 %v2910
  %4034 = vmatprep.subr.bf16.mxu0 %v2907
  %4035 = vmatpush2.bf16.msra.mxu0 %v2906
  %4036 = vmatprep.subr.bf16.mxu0 %v2903
  %4037 = vmatpush2.bf16.msra.mxu0 %v2902
  %4038 = vmatprep.subr.bf16.mxu0 %v2899
  %4039 = vmatpush2.bf16.msra.mxu0 %v2898
  %4040 = vmatprep.mubr.bf16.mxu0 %v671
  %4041 = vmatmul.mubr.bf16.gmra.mxu0 %v670
  %v4042 = vpop.f32.mrf.mxu0
  %v4043 = vadd.f32 0.0, %v4042
  %v4044 = vpop.f32.mrf.mxu0
  %v4045 = vadd.f32 0.0, %v4044
  %v4046 = vpop.f32.mrf.mxu0
  %v4047 = vadd.f32 0.0, %v4046
  %v4048 = vpop.f32.mrf.mxu0
  %v4049 = vadd.f32 0.0, %v4048
  %4050 = vmatprep.mubr.bf16.mxu0 %v673
  %4051 = vmatmul.mubr.bf16.gmra.mxu0 %v672
  %v4052 = vpop.f32.mrf.mxu0
  %v4053 = vadd.f32 0.0, %v4052
  %v4054 = vpop.f32.mrf.mxu0
  %v4055 = vadd.f32 0.0, %v4054
  %v4056 = vpop.f32.mrf.mxu0
  %v4057 = vadd.f32 0.0, %v4056
  %v4058 = vpop.f32.mrf.mxu0
  %v4059 = vadd.f32 0.0, %v4058
  %4060 = vdwg.mxu0
  %v4061 = vadd.f32 %v3939, %v3990
  %v4062 = vadd.f32 %v3940, %v3992
  %v4063 = vadd.f32 %v3941, %v4043
  %v4064 = vadd.f32 %v3942, %v4045
  %v4065 = vadd.f32 %v3943, %v3994
  %v4066 = vadd.f32 %v3944, %v3996
  %v4067 = vadd.f32 %v3945, %v4047
  %v4068 = vadd.f32 %v3946, %v4049
  %v4069 = vadd.f32 %v3947, %v4000
  %v4070 = vadd.f32 %v3948, %v4002
  %v4071 = vadd.f32 %v3949, %v4053
  %v4072 = vadd.f32 %v3950, %v4055
  %v4073 = vadd.f32 %v3951, %v4004
  %v4074 = vadd.f32 %v3952, %v4006
  %v4075 = vadd.f32 %v3953, %v4057
  %v4076 = vadd.f32 %v3954, %v4059
  %4077 = vmatprep.subr.bf16.mxu0 %v3400
  %4078 = vmatpush1.bf16.msra.mxu0 %v3399
  %4079 = vmatprep.subr.bf16.mxu0 %v3396
  %4080 = vmatpush1.bf16.msra.mxu0 %v3395
  %4081 = vmatprep.subr.bf16.mxu0 %v3392
  %4082 = vmatpush1.bf16.msra.mxu0 %v3391
  %4083 = vmatprep.subr.bf16.mxu0 %v3388
  %4084 = vmatpush1.bf16.msra.mxu0 %v3387
  %4085 = vmatprep.subr.bf16.mxu0 %v3384
  %4086 = vmatpush1.bf16.msra.mxu0 %v3383
  %4087 = vmatprep.subr.bf16.mxu0 %v3380
  %4088 = vmatpush1.bf16.msra.mxu0 %v3379
  %4089 = vmatprep.subr.bf16.mxu0 %v3376
  %4090 = vmatpush1.bf16.msra.mxu0 %v3375
  %4091 = vmatprep.subr.bf16.mxu0 %v3372
  %4092 = vmatpush1.bf16.msra.mxu0 %v3371
  %4093 = vmatprep.subr.bf16.mxu0 %v3432
  %4094 = vmatpush2.bf16.msra.mxu0 %v3431
  %4095 = vmatprep.subr.bf16.mxu0 %v3428
  %4096 = vmatpush2.bf16.msra.mxu0 %v3427
  %4097 = vmatprep.subr.bf16.mxu0 %v3424
  %4098 = vmatpush2.bf16.msra.mxu0 %v3423
  %4099 = vmatprep.subr.bf16.mxu0 %v3420
  %4100 = vmatpush2.bf16.msra.mxu0 %v3419
  %4101 = vmatprep.subr.bf16.mxu0 %v3416
  %4102 = vmatpush2.bf16.msra.mxu0 %v3415
  %4103 = vmatprep.subr.bf16.mxu0 %v3412
  %4104 = vmatpush2.bf16.msra.mxu0 %v3411
  %4105 = vmatprep.subr.bf16.mxu0 %v3408
  %4106 = vmatpush2.bf16.msra.mxu0 %v3407
  %4107 = vmatprep.subr.bf16.mxu0 %v3404
  %4108 = vmatpush2.bf16.msra.mxu0 %v3403
  %4109 = vmatprep.mubr.bf16.mxu0 %v1075
  %4110 = vmatmul.mubr.bf16.gmra.mxu0 %v1074
  %v4111 = vpop.f32.mrf.mxu0
  %v4112 = vadd.f32 0.0, %v4111
  %v4113 = vpop.f32.mrf.mxu0
  %v4114 = vadd.f32 0.0, %v4113
  %v4115 = vpop.f32.mrf.mxu0
  %v4116 = vadd.f32 0.0, %v4115
  %v4117 = vpop.f32.mrf.mxu0
  %v4118 = vadd.f32 0.0, %v4117
  %4119 = vmatprep.mubr.bf16.mxu0 %v1077
  %4120 = vmatmul.mubr.bf16.gmra.mxu0 %v1076
  %v4121 = vpop.f32.mrf.mxu0
  %v4122 = vadd.f32 0.0, %v4121
  %v4123 = vpop.f32.mrf.mxu0
  %v4124 = vadd.f32 0.0, %v4123
  %v4125 = vpop.f32.mrf.mxu0
  %v4126 = vadd.f32 0.0, %v4125
  %v4127 = vpop.f32.mrf.mxu0
  %v4128 = vadd.f32 0.0, %v4127
  %4129 = vdwg.mxu0
  %4130 = vmatprep.subr.bf16.mxu0 %v3402
  %4131 = vmatpush1.bf16.msra.mxu0 %v3401
  %4132 = vmatprep.subr.bf16.mxu0 %v3398
  %4133 = vmatpush1.bf16.msra.mxu0 %v3397
  %4134 = vmatprep.subr.bf16.mxu0 %v3394
  %4135 = vmatpush1.bf16.msra.mxu0 %v3393
  %4136 = vmatprep.subr.bf16.mxu0 %v3390
  %4137 = vmatpush1.bf16.msra.mxu0 %v3389
  %4138 = vmatprep.subr.bf16.mxu0 %v3386
  %4139 = vmatpush1.bf16.msra.mxu0 %v3385
  %4140 = vmatprep.subr.bf16.mxu0 %v3382
  %4141 = vmatpush1.bf16.msra.mxu0 %v3381
  %4142 = vmatprep.subr.bf16.mxu0 %v3378
  %4143 = vmatpush1.bf16.msra.mxu0 %v3377
  %4144 = vmatprep.subr.bf16.mxu0 %v3374
  %4145 = vmatpush1.bf16.msra.mxu0 %v3373
  %4146 = vmatprep.subr.bf16.mxu0 %v3434
  %4147 = vmatpush2.bf16.msra.mxu0 %v3433
  %4148 = vmatprep.subr.bf16.mxu0 %v3430
  %4149 = vmatpush2.bf16.msra.mxu0 %v3429
  %4150 = vmatprep.subr.bf16.mxu0 %v3426
  %4151 = vmatpush2.bf16.msra.mxu0 %v3425
  %4152 = vmatprep.subr.bf16.mxu0 %v3422
  %4153 = vmatpush2.bf16.msra.mxu0 %v3421
  %4154 = vmatprep.subr.bf16.mxu0 %v3418
  %4155 = vmatpush2.bf16.msra.mxu0 %v3417
  %4156 = vmatprep.subr.bf16.mxu0 %v3414
  %4157 = vmatpush2.bf16.msra.mxu0 %v3413
  %4158 = vmatprep.subr.bf16.mxu0 %v3410
  %4159 = vmatpush2.bf16.msra.mxu0 %v3409
  %4160 = vmatprep.subr.bf16.mxu0 %v3406
  %4161 = vmatpush2.bf16.msra.mxu0 %v3405
  %4162 = vmatprep.mubr.bf16.mxu0 %v1075
  %4163 = vmatmul.mubr.bf16.gmra.mxu0 %v1074
  %v4164 = vpop.f32.mrf.mxu0
  %v4165 = vadd.f32 0.0, %v4164
  %v4166 = vpop.f32.mrf.mxu0
  %v4167 = vadd.f32 0.0, %v4166
  %v4168 = vpop.f32.mrf.mxu0
  %v4169 = vadd.f32 0.0, %v4168
  %v4170 = vpop.f32.mrf.mxu0
  %v4171 = vadd.f32 0.0, %v4170
  %4172 = vmatprep.mubr.bf16.mxu0 %v1077
  %4173 = vmatmul.mubr.bf16.gmra.mxu0 %v1076
  %v4174 = vpop.f32.mrf.mxu0
  %v4175 = vadd.f32 0.0, %v4174
  %v4176 = vpop.f32.mrf.mxu0
  %v4177 = vadd.f32 0.0, %v4176
  %v4178 = vpop.f32.mrf.mxu0
  %v4179 = vadd.f32 0.0, %v4178
  %v4180 = vpop.f32.mrf.mxu0
  %v4181 = vadd.f32 0.0, %v4180
  %4182 = vdwg.mxu0
  %v4183 = vadd.f32 %v4061, %v4112
  %v4184 = vadd.f32 %v4062, %v4114
  %v4185 = vadd.f32 %v4063, %v4165
  %v4186 = vadd.f32 %v4064, %v4167
  %v4187 = vadd.f32 %v4065, %v4116
  %v4188 = vadd.f32 %v4066, %v4118
  %v4189 = vadd.f32 %v4067, %v4169
  %v4190 = vadd.f32 %v4068, %v4171
  %v4191 = vadd.f32 %v4069, %v4122
  %v4192 = vadd.f32 %v4070, %v4124
  %v4193 = vadd.f32 %v4071, %v4175
  %v4194 = vadd.f32 %v4072, %v4177
  %v4195 = vadd.f32 %v4073, %v4126
  %v4196 = vadd.f32 %v4074, %v4128
  %v4197 = vadd.f32 %v4075, %v4179
  %v4198 = vadd.f32 %v4076, %v4181
  %v4199 = vmax.f32 %v3605, %v4183
  %v4200 = vmax.f32 %v3606, %v4184
  %v4201 = vmax.f32 %v3607, %v4185
  %v4202 = vmax.f32 %v3608, %v4186
  %v4203 = vmax.f32 %v3609, %v4187
  %v4204 = vmax.f32 %v3610, %v4188
  %v4205 = vmax.f32 %v3611, %v4189
  %v4206 = vmax.f32 %v3612, %v4190
  %v4207 = vmax.f32 %v3613, %v4191
  %v4208 = vmax.f32 %v3614, %v4192
  %v4209 = vmax.f32 %v3615, %v4193
  %v4210 = vmax.f32 %v3616, %v4194
  %v4211 = vmax.f32 %v3617, %v4195
  %v4212 = vmax.f32 %v3618, %v4196
  %v4213 = vmax.f32 %v3619, %v4197
  %v4214 = vmax.f32 %v3620, %v4198
  %v4215 = vmax.f32 %v4199, %v4201
  %v4216 = vmax.f32 %v4200, %v4202
  %v4217 = vmax.f32 %v4203, %v4205
  %v4218 = vmax.f32 %v4204, %v4206
  %v4219 = vmax.f32 %v4207, %v4209
  %v4220 = vmax.f32 %v4208, %v4210
  %v4221 = vmax.f32 %v4211, %v4213
  %v4222 = vmax.f32 %v4212, %v4214
  %v4223 = vld [vmem:[%s4] sm:$0x3]
  %v4225 = vlaneseq
  %v4226 = vshrl.u32 %v4225, 7
  %v4227 = vsub.s32 0, %v4226
  %v4228 = vrot.slane %v4223, %v4227
  %v4229 = vlaneseq
  %v4230 = vshrl.u32 %v4229, 7
  %v4231 = vsub.s32 1, %v4230
  %v4232 = vrot.slane %v4223, %v4231
  %v4235 = vadd.f32 %v4215, %v4228
  %v4236 = vadd.f32 %v4216, %v4232
  %v4237 = vadd.f32 %v4217, %v4228
  %v4238 = vadd.f32 %v4218, %v4232
  %v4239 = vadd.f32 %v4219, %v4228
  %v4240 = vadd.f32 %v4220, %v4232
  %v4241 = vadd.f32 %v4221, %v4228
  %v4242 = vadd.f32 %v4222, %v4232
  %v4243 = vmax.f32 %v4235, 0.0
  %v4244 = vmax.f32 %v4236, 0.0
  %v4245 = vmax.f32 %v4237, 0.0
  %v4246 = vmax.f32 %v4238, 0.0
  %v4247 = vmax.f32 %v4239, 0.0
  %v4248 = vmax.f32 %v4240, 0.0
  %v4249 = vmax.f32 %v4241, 0.0
  %v4250 = vmax.f32 %v4242, 0.0
  %v4251 = vpack.c.bf16 %v4245, %v4243
  %v4252 = vpack.c.bf16 %v4246, %v4244
  %v4253 = vpack.c.bf16 %v4249, %v4247
  %v4254 = vpack.c.bf16 %v4250, %v4248
  %v4257 = vrot.slane %v4251, 4
  %v4258 = vrot.slane %v4252, 4
  %v4263 = vrot.slane %v4253, 4
  %v4264 = vrot.slane %v4254, 4
  %v4267 = vld [vmem:[%s5] sm:$0xff]
  %v4268 = vld [vmem:[%s5 + $0x8] sm:$0xff]
  %v4269 = vld [vmem:[%s5 + $0x10] sm:$0xff]
  %v4270 = vld [vmem:[%s5 + $0x18] sm:$0xff]
  %v4271 = vld [vmem:[%s5 + $0x20] sm:$0xff]
  %v4272 = vld [vmem:[%s5 + $0x28] sm:$0xff]
  %v4273 = vld [vmem:[%s5 + $0x30] sm:$0xff]
  %v4274 = vld [vmem:[%s5 + $0x38] sm:$0xff]
  %v4275 = vld [vmem:[%s5 + $0x40] sm:$0xff]
  %v4276 = vld [vmem:[%s5 + $0x48] sm:$0xff]
  %v4277 = vld [vmem:[%s5 + $0x50] sm:$0xff]
  %v4278 = vld [vmem:[%s5 + $0x58] sm:$0xff]
  %v4279 = vld [vmem:[%s5 + $0x60] sm:$0xff]
  %v4280 = vld [vmem:[%s5 + $0x68] sm:$0xff]
  %v4281 = vld [vmem:[%s5 + $0x70] sm:$0xff]
  %v4282 = vld [vmem:[%s5 + $0x78] sm:$0xff]
  %v4283 = vld [vmem:[%s5 + $0x80] sm:$0xff]
  %v4284 = vld [vmem:[%s5 + $0x88] sm:$0xff]
  %v4285 = vld [vmem:[%s5 + $0x90] sm:$0xff]
  %v4286 = vld [vmem:[%s5 + $0x98] sm:$0xff]
  %v4287 = vld [vmem:[%s5 + $0xa0] sm:$0xff]
  %v4288 = vld [vmem:[%s5 + $0xa8] sm:$0xff]
  %v4289 = vld [vmem:[%s5 + $0xb0] sm:$0xff]
  %v4290 = vld [vmem:[%s5 + $0xb8] sm:$0xff]
  %v4291 = vld [vmem:[%s5 + $0xc0] sm:$0xff]
  %v4292 = vld [vmem:[%s5 + $0xc8] sm:$0xff]
  %v4293 = vld [vmem:[%s5 + $0xd0] sm:$0xff]
  %v4294 = vld [vmem:[%s5 + $0xd8] sm:$0xff]
  %v4295 = vld [vmem:[%s5 + $0xe0] sm:$0xff]
  %v4296 = vld [vmem:[%s5 + $0xe8] sm:$0xff]
  %v4297 = vld [vmem:[%s5 + $0xf0] sm:$0xff]
  %v4298 = vld [vmem:[%s5 + $0xf8] sm:$0xff]
  %v4299 = vld [vmem:[%s5 + $0x100] sm:$0xff]
  %v4300 = vld [vmem:[%s5 + $0x108] sm:$0xff]
  %v4301 = vld [vmem:[%s5 + $0x110] sm:$0xff]
  %v4302 = vld [vmem:[%s5 + $0x118] sm:$0xff]
  %v4303 = vld [vmem:[%s5 + $0x120] sm:$0xff]
  %v4304 = vld [vmem:[%s5 + $0x128] sm:$0xff]
  %v4305 = vld [vmem:[%s5 + $0x130] sm:$0xff]
  %v4306 = vld [vmem:[%s5 + $0x138] sm:$0xff]
  %v4307 = vld [vmem:[%s5 + $0x140] sm:$0xff]
  %v4308 = vld [vmem:[%s5 + $0x148] sm:$0xff]
  %v4309 = vld [vmem:[%s5 + $0x150] sm:$0xff]
  %v4310 = vld [vmem:[%s5 + $0x158] sm:$0xff]
  %v4311 = vld [vmem:[%s5 + $0x160] sm:$0xff]
  %v4312 = vld [vmem:[%s5 + $0x168] sm:$0xff]
  %v4313 = vld [vmem:[%s5 + $0x170] sm:$0xff]
  %v4314 = vld [vmem:[%s5 + $0x178] sm:$0xff]
  %v4315 = vld [vmem:[%s5 + $0x180] sm:$0xff]
  %v4316 = vld [vmem:[%s5 + $0x188] sm:$0xff]
  %v4317 = vld [vmem:[%s5 + $0x190] sm:$0xff]
  %v4318 = vld [vmem:[%s5 + $0x198] sm:$0xff]
  %v4319 = vld [vmem:[%s5 + $0x1a0] sm:$0xff]
  %v4320 = vld [vmem:[%s5 + $0x1a8] sm:$0xff]
  %v4321 = vld [vmem:[%s5 + $0x1b0] sm:$0xff]
  %v4322 = vld [vmem:[%s5 + $0x1b8] sm:$0xff]
  %v4323 = vld [vmem:[%s5 + $0x1c0] sm:$0xff]
  %v4324 = vld [vmem:[%s5 + $0x1c8] sm:$0xff]
  %v4325 = vld [vmem:[%s5 + $0x1d0] sm:$0xff]
  %v4326 = vld [vmem:[%s5 + $0x1d8] sm:$0xff]
  %v4327 = vld [vmem:[%s5 + $0x1e0] sm:$0xff]
  %v4328 = vld [vmem:[%s5 + $0x1e8] sm:$0xff]
  %v4329 = vld [vmem:[%s5 + $0x1f0] sm:$0xff]
  %v4330 = vld [vmem:[%s5 + $0x1f8] sm:$0xff]
  %v4331 = vld [vmem:[%s5 + $0x200] sm:$0xff]
  %v4332 = vld [vmem:[%s5 + $0x208] sm:$0xff]
  %v4333 = vld [vmem:[%s5 + $0x210] sm:$0xff]
  %v4334 = vld [vmem:[%s5 + $0x218] sm:$0xff]
  %v4335 = vld [vmem:[%s5 + $0x220] sm:$0xff]
  %v4336 = vld [vmem:[%s5 + $0x228] sm:$0xff]
  %v4337 = vld [vmem:[%s5 + $0x230] sm:$0xff]
  %v4338 = vld [vmem:[%s5 + $0x238] sm:$0xff]
  %v4339 = vld [vmem:[%s5 + $0x240] sm:$0xff]
  %v4340 = vld [vmem:[%s5 + $0x248] sm:$0xff]
  %v4341 = vld [vmem:[%s5 + $0x250] sm:$0xff]
  %v4342 = vld [vmem:[%s5 + $0x258] sm:$0xff]
  %v4343 = vld [vmem:[%s5 + $0x260] sm:$0xff]
  %v4344 = vld [vmem:[%s5 + $0x268] sm:$0xff]
  %v4345 = vld [vmem:[%s5 + $0x270] sm:$0xff]
  %v4346 = vld [vmem:[%s5 + $0x278] sm:$0xff]
  %v4347 = vld [vmem:[%s5 + $0x280] sm:$0xff]
  %v4348 = vld [vmem:[%s5 + $0x288] sm:$0xff]
  %v4349 = vld [vmem:[%s5 + $0x290] sm:$0xff]
  %v4350 = vld [vmem:[%s5 + $0x298] sm:$0xff]
  %v4351 = vld [vmem:[%s5 + $0x2a0] sm:$0xff]
  %v4352 = vld [vmem:[%s5 + $0x2a8] sm:$0xff]
  %v4353 = vld [vmem:[%s5 + $0x2b0] sm:$0xff]
  %v4354 = vld [vmem:[%s5 + $0x2b8] sm:$0xff]
  %v4355 = vld [vmem:[%s5 + $0x2c0] sm:$0xff]
  %v4356 = vld [vmem:[%s5 + $0x2c8] sm:$0xff]
  %v4357 = vld [vmem:[%s5 + $0x2d0] sm:$0xff]
  %v4358 = vld [vmem:[%s5 + $0x2d8] sm:$0xff]
  %v4359 = vld [vmem:[%s5 + $0x2e0] sm:$0xff]
  %v4360 = vld [vmem:[%s5 + $0x2e8] sm:$0xff]
  %v4361 = vld [vmem:[%s5 + $0x2f0] sm:$0xff]
  %v4362 = vld [vmem:[%s5 + $0x2f8] sm:$0xff]
  %v4363 = vld [vmem:[%s5 + $0x300] sm:$0xff]
  %v4364 = vld [vmem:[%s5 + $0x308] sm:$0xff]
  %v4365 = vld [vmem:[%s5 + $0x310] sm:$0xff]
  %v4366 = vld [vmem:[%s5 + $0x318] sm:$0xff]
  %v4367 = vld [vmem:[%s5 + $0x320] sm:$0xff]
  %v4368 = vld [vmem:[%s5 + $0x328] sm:$0xff]
  %v4369 = vld [vmem:[%s5 + $0x330] sm:$0xff]
  %v4370 = vld [vmem:[%s5 + $0x338] sm:$0xff]
  %v4371 = vld [vmem:[%s5 + $0x340] sm:$0xff]
  %v4372 = vld [vmem:[%s5 + $0x348] sm:$0xff]
  %v4373 = vld [vmem:[%s5 + $0x350] sm:$0xff]
  %v4374 = vld [vmem:[%s5 + $0x358] sm:$0xff]
  %v4375 = vld [vmem:[%s5 + $0x360] sm:$0xff]
  %v4376 = vld [vmem:[%s5 + $0x368] sm:$0xff]
  %v4377 = vld [vmem:[%s5 + $0x370] sm:$0xff]
  %v4378 = vld [vmem:[%s5 + $0x378] sm:$0xff]
  %v4379 = vld [vmem:[%s5 + $0x380] sm:$0xff]
  %v4380 = vld [vmem:[%s5 + $0x388] sm:$0xff]
  %v4381 = vld [vmem:[%s5 + $0x390] sm:$0xff]
  %v4382 = vld [vmem:[%s5 + $0x398] sm:$0xff]
  %v4383 = vld [vmem:[%s5 + $0x3a0] sm:$0xff]
  %v4384 = vld [vmem:[%s5 + $0x3a8] sm:$0xff]
  %v4385 = vld [vmem:[%s5 + $0x3b0] sm:$0xff]
  %v4386 = vld [vmem:[%s5 + $0x3b8] sm:$0xff]
  %v4387 = vld [vmem:[%s5 + $0x3c0] sm:$0xff]
  %v4388 = vld [vmem:[%s5 + $0x3c8] sm:$0xff]
  %v4389 = vld [vmem:[%s5 + $0x3d0] sm:$0xff]
  %v4390 = vld [vmem:[%s5 + $0x3d8] sm:$0xff]
  %v4391 = vld [vmem:[%s5 + $0x3e0] sm:$0xff]
  %v4392 = vld [vmem:[%s5 + $0x3e8] sm:$0xff]
  %v4393 = vld [vmem:[%s5 + $0x3f0] sm:$0xff]
  %v4394 = vld [vmem:[%s5 + $0x3f8] sm:$0xff]
  %v4395 = vld [vmem:[%s5 + $0x400] sm:$0xff]
  %v4396 = vld [vmem:[%s5 + $0x408] sm:$0xff]
  %v4397 = vld [vmem:[%s5 + $0x410] sm:$0xff]
  %v4398 = vld [vmem:[%s5 + $0x418] sm:$0xff]
  %v4399 = vld [vmem:[%s5 + $0x420] sm:$0xff]
  %v4400 = vld [vmem:[%s5 + $0x428] sm:$0xff]
  %v4401 = vld [vmem:[%s5 + $0x430] sm:$0xff]
  %v4402 = vld [vmem:[%s5 + $0x438] sm:$0xff]
  %v4403 = vld [vmem:[%s5 + $0x440] sm:$0xff]
  %v4404 = vld [vmem:[%s5 + $0x448] sm:$0xff]
  %v4405 = vld [vmem:[%s5 + $0x450] sm:$0xff]
  %v4406 = vld [vmem:[%s5 + $0x458] sm:$0xff]
  %v4407 = vld [vmem:[%s5 + $0x460] sm:$0xff]
  %v4408 = vld [vmem:[%s5 + $0x468] sm:$0xff]
  %v4409 = vld [vmem:[%s5 + $0x470] sm:$0xff]
  %v4410 = vld [vmem:[%s5 + $0x478] sm:$0xff]
  %v4411 = vld [vmem:[%s5 + $0x480] sm:$0xff]
  %v4412 = vld [vmem:[%s5 + $0x488] sm:$0xff]
  %v4413 = vld [vmem:[%s5 + $0x490] sm:$0xff]
  %v4414 = vld [vmem:[%s5 + $0x498] sm:$0xff]
  %v4415 = vld [vmem:[%s5 + $0x4a0] sm:$0xff]
  %v4416 = vld [vmem:[%s5 + $0x4a8] sm:$0xff]
  %v4417 = vld [vmem:[%s5 + $0x4b0] sm:$0xff]
  %v4418 = vld [vmem:[%s5 + $0x4b8] sm:$0xff]
  %v4419 = vld [vmem:[%s5 + $0x4c0] sm:$0xff]
  %v4420 = vld [vmem:[%s5 + $0x4c8] sm:$0xff]
  %v4421 = vld [vmem:[%s5 + $0x4d0] sm:$0xff]
  %v4422 = vld [vmem:[%s5 + $0x4d8] sm:$0xff]
  %v4423 = vld [vmem:[%s5 + $0x4e0] sm:$0xff]
  %v4424 = vld [vmem:[%s5 + $0x4e8] sm:$0xff]
  %v4425 = vld [vmem:[%s5 + $0x4f0] sm:$0xff]
  %v4426 = vld [vmem:[%s5 + $0x4f8] sm:$0xff]
  %v4427 = vld [vmem:[%s5 + $0x500] sm:$0xff]
  %v4428 = vld [vmem:[%s5 + $0x508] sm:$0xff]
  %v4429 = vld [vmem:[%s5 + $0x510] sm:$0xff]
  %v4430 = vld [vmem:[%s5 + $0x518] sm:$0xff]
  %v4431 = vld [vmem:[%s5 + $0x520] sm:$0xff]
  %v4432 = vld [vmem:[%s5 + $0x528] sm:$0xff]
  %v4433 = vld [vmem:[%s5 + $0x530] sm:$0xff]
  %v4434 = vld [vmem:[%s5 + $0x538] sm:$0xff]
  %v4435 = vld [vmem:[%s5 + $0x540] sm:$0xff]
  %v4436 = vld [vmem:[%s5 + $0x548] sm:$0xff]
  %v4437 = vld [vmem:[%s5 + $0x550] sm:$0xff]
  %v4438 = vld [vmem:[%s5 + $0x558] sm:$0xff]
  %v4439 = vld [vmem:[%s5 + $0x560] sm:$0xff]
  %v4440 = vld [vmem:[%s5 + $0x568] sm:$0xff]
  %v4441 = vld [vmem:[%s5 + $0x570] sm:$0xff]
  %v4442 = vld [vmem:[%s5 + $0x578] sm:$0xff]
  %v4443 = vld [vmem:[%s5 + $0x580] sm:$0xff]
  %v4444 = vld [vmem:[%s5 + $0x588] sm:$0xff]
  %v4445 = vld [vmem:[%s5 + $0x590] sm:$0xff]
  %v4446 = vld [vmem:[%s5 + $0x598] sm:$0xff]
  %v4447 = vld [vmem:[%s5 + $0x5a0] sm:$0xff]
  %v4448 = vld [vmem:[%s5 + $0x5a8] sm:$0xff]
  %v4449 = vld [vmem:[%s5 + $0x5b0] sm:$0xff]
  %v4450 = vld [vmem:[%s5 + $0x5b8] sm:$0xff]
  %v4451 = vld [vmem:[%s5 + $0x5c0] sm:$0xff]
  %v4452 = vld [vmem:[%s5 + $0x5c8] sm:$0xff]
  %v4453 = vld [vmem:[%s5 + $0x5d0] sm:$0xff]
  %v4454 = vld [vmem:[%s5 + $0x5d8] sm:$0xff]
  %v4455 = vld [vmem:[%s5 + $0x5e0] sm:$0xff]
  %v4456 = vld [vmem:[%s5 + $0x5e8] sm:$0xff]
  %v4457 = vld [vmem:[%s5 + $0x5f0] sm:$0xff]
  %v4458 = vld [vmem:[%s5 + $0x5f8] sm:$0xff]
  %v4459 = vld [vmem:[%s5 + $0x600] sm:$0xff]
  %v4460 = vld [vmem:[%s5 + $0x608] sm:$0xff]
  %v4461 = vld [vmem:[%s5 + $0x610] sm:$0xff]
  %v4462 = vld [vmem:[%s5 + $0x618] sm:$0xff]
  %v4463 = vld [vmem:[%s5 + $0x620] sm:$0xff]
  %v4464 = vld [vmem:[%s5 + $0x628] sm:$0xff]
  %v4465 = vld [vmem:[%s5 + $0x630] sm:$0xff]
  %v4466 = vld [vmem:[%s5 + $0x638] sm:$0xff]
  %v4467 = vld [vmem:[%s5 + $0x640] sm:$0xff]
  %v4468 = vld [vmem:[%s5 + $0x648] sm:$0xff]
  %v4469 = vld [vmem:[%s5 + $0x650] sm:$0xff]
  %v4470 = vld [vmem:[%s5 + $0x658] sm:$0xff]
  %v4471 = vld [vmem:[%s5 + $0x660] sm:$0xff]
  %v4472 = vld [vmem:[%s5 + $0x668] sm:$0xff]
  %v4473 = vld [vmem:[%s5 + $0x670] sm:$0xff]
  %v4474 = vld [vmem:[%s5 + $0x678] sm:$0xff]
  %v4475 = vld [vmem:[%s5 + $0x680] sm:$0xff]
  %v4476 = vld [vmem:[%s5 + $0x688] sm:$0xff]
  %v4477 = vld [vmem:[%s5 + $0x690] sm:$0xff]
  %v4478 = vld [vmem:[%s5 + $0x698] sm:$0xff]
  %v4479 = vld [vmem:[%s5 + $0x6a0] sm:$0xff]
  %v4480 = vld [vmem:[%s5 + $0x6a8] sm:$0xff]
  %v4481 = vld [vmem:[%s5 + $0x6b0] sm:$0xff]
  %v4482 = vld [vmem:[%s5 + $0x6b8] sm:$0xff]
  %v4483 = vld [vmem:[%s5 + $0x6c0] sm:$0xff]
  %v4484 = vld [vmem:[%s5 + $0x6c8] sm:$0xff]
  %v4485 = vld [vmem:[%s5 + $0x6d0] sm:$0xff]
  %v4486 = vld [vmem:[%s5 + $0x6d8] sm:$0xff]
  %v4487 = vld [vmem:[%s5 + $0x6e0] sm:$0xff]
  %v4488 = vld [vmem:[%s5 + $0x6e8] sm:$0xff]
  %v4489 = vld [vmem:[%s5 + $0x6f0] sm:$0xff]
  %v4490 = vld [vmem:[%s5 + $0x6f8] sm:$0xff]
  %v4491 = vld [vmem:[%s5 + $0x700] sm:$0xff]
  %v4492 = vld [vmem:[%s5 + $0x708] sm:$0xff]
  %v4493 = vld [vmem:[%s5 + $0x710] sm:$0xff]
  %v4494 = vld [vmem:[%s5 + $0x718] sm:$0xff]
  %v4495 = vld [vmem:[%s5 + $0x720] sm:$0xff]
  %v4496 = vld [vmem:[%s5 + $0x728] sm:$0xff]
  %v4497 = vld [vmem:[%s5 + $0x730] sm:$0xff]
  %v4498 = vld [vmem:[%s5 + $0x738] sm:$0xff]
  %v4499 = vld [vmem:[%s5 + $0x740] sm:$0xff]
  %v4500 = vld [vmem:[%s5 + $0x748] sm:$0xff]
  %v4501 = vld [vmem:[%s5 + $0x750] sm:$0xff]
  %v4502 = vld [vmem:[%s5 + $0x758] sm:$0xff]
  %v4503 = vld [vmem:[%s5 + $0x760] sm:$0xff]
  %v4504 = vld [vmem:[%s5 + $0x768] sm:$0xff]
  %v4505 = vld [vmem:[%s5 + $0x770] sm:$0xff]
  %v4506 = vld [vmem:[%s5 + $0x778] sm:$0xff]
  %v4507 = vld [vmem:[%s5 + $0x780] sm:$0xff]
  %v4508 = vld [vmem:[%s5 + $0x788] sm:$0xff]
  %v4509 = vld [vmem:[%s5 + $0x790] sm:$0xff]
  %v4510 = vld [vmem:[%s5 + $0x798] sm:$0xff]
  %v4511 = vld [vmem:[%s5 + $0x7a0] sm:$0xff]
  %v4512 = vld [vmem:[%s5 + $0x7a8] sm:$0xff]
  %v4513 = vld [vmem:[%s5 + $0x7b0] sm:$0xff]
  %v4514 = vld [vmem:[%s5 + $0x7b8] sm:$0xff]
  %v4515 = vld [vmem:[%s5 + $0x7c0] sm:$0xff]
  %v4516 = vld [vmem:[%s5 + $0x7c8] sm:$0xff]
  %v4517 = vld [vmem:[%s5 + $0x7d0] sm:$0xff]
  %v4518 = vld [vmem:[%s5 + $0x7d8] sm:$0xff]
  %v4519 = vld [vmem:[%s5 + $0x7e0] sm:$0xff]
  %v4520 = vld [vmem:[%s5 + $0x7e8] sm:$0xff]
  %v4521 = vld [vmem:[%s5 + $0x7f0] sm:$0xff]
  %v4522 = vld [vmem:[%s5 + $0x7f8] sm:$0xff]
  %v4523 = vld [vmem:[%s6] sm:$0xf]
  %v4525 = vlaneseq
  %v4526 = vshrl.u32 %v4525, 7
  %v4527 = vsub.s32 0, %v4526
  %v4528 = vrot.slane %v4523, %v4527
  %v4529 = vlaneseq
  %v4530 = vshrl.u32 %v4529, 7
  %v4531 = vsub.s32 1, %v4530
  %v4532 = vrot.slane %v4523, %v4531
  %v4533 = vlaneseq
  %v4534 = vshrl.u32 %v4533, 7
  %v4535 = vsub.s32 2, %v4534
  %v4536 = vrot.slane %v4523, %v4535
  %v4537 = vlaneseq
  %v4538 = vshrl.u32 %v4537, 7
  %v4539 = vsub.s32 3, %v4538
  %v4540 = vrot.slane %v4523, %v4539
  %v4801 = vunpack.c.l.b16 %v4267
  %v4802 = vunpack.c.h.b16 %v4267
  %v4803 = vunpack.c.l.b16 %v4268
  %v4804 = vunpack.c.h.b16 %v4268
  %v4805 = vunpack.c.l.b16 %v4269
  %v4806 = vunpack.c.h.b16 %v4269
  %v4807 = vunpack.c.l.b16 %v4270
  %v4808 = vunpack.c.h.b16 %v4270
  %v4809 = vunpack.c.l.b16 %v4271
  %v4810 = vunpack.c.h.b16 %v4271
  %v4811 = vunpack.c.l.b16 %v4272
  %v4812 = vunpack.c.h.b16 %v4272
  %v4813 = vunpack.c.l.b16 %v4273
  %v4814 = vunpack.c.h.b16 %v4273
  %v4815 = vunpack.c.l.b16 %v4274
  %v4816 = vunpack.c.h.b16 %v4274
  %v4817 = vunpack.c.l.b16 %v4275
  %v4818 = vunpack.c.h.b16 %v4275
  %v4819 = vunpack.c.l.b16 %v4276
  %v4820 = vunpack.c.h.b16 %v4276
  %v4821 = vunpack.c.l.b16 %v4277
  %v4822 = vunpack.c.h.b16 %v4277
  %v4823 = vunpack.c.l.b16 %v4278
  %v4824 = vunpack.c.h.b16 %v4278
  %v4825 = vunpack.c.l.b16 %v4279
  %v4826 = vunpack.c.h.b16 %v4279
  %v4827 = vunpack.c.l.b16 %v4280
  %v4828 = vunpack.c.h.b16 %v4280
  %v4829 = vunpack.c.l.b16 %v4281
  %v4830 = vunpack.c.h.b16 %v4281
  %v4831 = vunpack.c.l.b16 %v4282
  %v4832 = vunpack.c.h.b16 %v4282
  %v4833 = vunpack.c.l.b16 %v4283
  %v4834 = vunpack.c.h.b16 %v4283
  %v4835 = vunpack.c.l.b16 %v4284
  %v4836 = vunpack.c.h.b16 %v4284
  %v4837 = vunpack.c.l.b16 %v4285
  %v4838 = vunpack.c.h.b16 %v4285
  %v4839 = vunpack.c.l.b16 %v4286
  %v4840 = vunpack.c.h.b16 %v4286
  %v4841 = vunpack.c.l.b16 %v4287
  %v4842 = vunpack.c.h.b16 %v4287
  %v4843 = vunpack.c.l.b16 %v4288
  %v4844 = vunpack.c.h.b16 %v4288
  %v4845 = vunpack.c.l.b16 %v4289
  %v4846 = vunpack.c.h.b16 %v4289
  %v4847 = vunpack.c.l.b16 %v4290
  %v4848 = vunpack.c.h.b16 %v4290
  %v4849 = vunpack.c.l.b16 %v4291
  %v4850 = vunpack.c.h.b16 %v4291
  %v4851 = vunpack.c.l.b16 %v4292
  %v4852 = vunpack.c.h.b16 %v4292
  %v4853 = vunpack.c.l.b16 %v4293
  %v4854 = vunpack.c.h.b16 %v4293
  %v4855 = vunpack.c.l.b16 %v4294
  %v4856 = vunpack.c.h.b16 %v4294
  %v4857 = vunpack.c.l.b16 %v4295
  %v4858 = vunpack.c.h.b16 %v4295
  %v4859 = vunpack.c.l.b16 %v4296
  %v4860 = vunpack.c.h.b16 %v4296
  %v4861 = vunpack.c.l.b16 %v4297
  %v4862 = vunpack.c.h.b16 %v4297
  %v4863 = vunpack.c.l.b16 %v4298
  %v4864 = vunpack.c.h.b16 %v4298
  %v4865 = vunpack.c.l.b16 %v4299
  %v4866 = vunpack.c.h.b16 %v4299
  %v4867 = vunpack.c.l.b16 %v4300
  %v4868 = vunpack.c.h.b16 %v4300
  %v4869 = vunpack.c.l.b16 %v4301
  %v4870 = vunpack.c.h.b16 %v4301
  %v4871 = vunpack.c.l.b16 %v4302
  %v4872 = vunpack.c.h.b16 %v4302
  %v4873 = vunpack.c.l.b16 %v4303
  %v4874 = vunpack.c.h.b16 %v4303
  %v4875 = vunpack.c.l.b16 %v4304
  %v4876 = vunpack.c.h.b16 %v4304
  %v4877 = vunpack.c.l.b16 %v4305
  %v4878 = vunpack.c.h.b16 %v4305
  %v4879 = vunpack.c.l.b16 %v4306
  %v4880 = vunpack.c.h.b16 %v4306
  %v4881 = vunpack.c.l.b16 %v4307
  %v4882 = vunpack.c.h.b16 %v4307
  %v4883 = vunpack.c.l.b16 %v4308
  %v4884 = vunpack.c.h.b16 %v4308
  %v4885 = vunpack.c.l.b16 %v4309
  %v4886 = vunpack.c.h.b16 %v4309
  %v4887 = vunpack.c.l.b16 %v4310
  %v4888 = vunpack.c.h.b16 %v4310
  %v4889 = vunpack.c.l.b16 %v4311
  %v4890 = vunpack.c.h.b16 %v4311
  %v4891 = vunpack.c.l.b16 %v4312
  %v4892 = vunpack.c.h.b16 %v4312
  %v4893 = vunpack.c.l.b16 %v4313
  %v4894 = vunpack.c.h.b16 %v4313
  %v4895 = vunpack.c.l.b16 %v4314
  %v4896 = vunpack.c.h.b16 %v4314
  %v4897 = vunpack.c.l.b16 %v4315
  %v4898 = vunpack.c.h.b16 %v4315
  %v4899 = vunpack.c.l.b16 %v4316
  %v4900 = vunpack.c.h.b16 %v4316
  %v4901 = vunpack.c.l.b16 %v4317
  %v4902 = vunpack.c.h.b16 %v4317
  %v4903 = vunpack.c.l.b16 %v4318
  %v4904 = vunpack.c.h.b16 %v4318
  %v4905 = vunpack.c.l.b16 %v4319
  %v4906 = vunpack.c.h.b16 %v4319
  %v4907 = vunpack.c.l.b16 %v4320
  %v4908 = vunpack.c.h.b16 %v4320
  %v4909 = vunpack.c.l.b16 %v4321
  %v4910 = vunpack.c.h.b16 %v4321
  %v4911 = vunpack.c.l.b16 %v4322
  %v4912 = vunpack.c.h.b16 %v4322
  %v4913 = vunpack.c.l.b16 %v4323
  %v4914 = vunpack.c.h.b16 %v4323
  %v4915 = vunpack.c.l.b16 %v4324
  %v4916 = vunpack.c.h.b16 %v4324
  %v4917 = vunpack.c.l.b16 %v4325
  %v4918 = vunpack.c.h.b16 %v4325
  %v4919 = vunpack.c.l.b16 %v4326
  %v4920 = vunpack.c.h.b16 %v4326
  %v4921 = vunpack.c.l.b16 %v4327
  %v4922 = vunpack.c.h.b16 %v4327
  %v4923 = vunpack.c.l.b16 %v4328
  %v4924 = vunpack.c.h.b16 %v4328
  %v4925 = vunpack.c.l.b16 %v4329
  %v4926 = vunpack.c.h.b16 %v4329
  %v4927 = vunpack.c.l.b16 %v4330
  %v4928 = vunpack.c.h.b16 %v4330
  %v4929 = vunpack.c.l.b16 %v4331
  %v4930 = vunpack.c.h.b16 %v4331
  %v4931 = vunpack.c.l.b16 %v4332
  %v4932 = vunpack.c.h.b16 %v4332
  %v4933 = vunpack.c.l.b16 %v4333
  %v4934 = vunpack.c.h.b16 %v4333
  %v4935 = vunpack.c.l.b16 %v4334
  %v4936 = vunpack.c.h.b16 %v4334
  %v4937 = vunpack.c.l.b16 %v4335
  %v4938 = vunpack.c.h.b16 %v4335
  %v4939 = vunpack.c.l.b16 %v4336
  %v4940 = vunpack.c.h.b16 %v4336
  %v4941 = vunpack.c.l.b16 %v4337
  %v4942 = vunpack.c.h.b16 %v4337
  %v4943 = vunpack.c.l.b16 %v4338
  %v4944 = vunpack.c.h.b16 %v4338
  %v4945 = vunpack.c.l.b16 %v4339
  %v4946 = vunpack.c.h.b16 %v4339
  %v4947 = vunpack.c.l.b16 %v4340
  %v4948 = vunpack.c.h.b16 %v4340
  %v4949 = vunpack.c.l.b16 %v4341
  %v4950 = vunpack.c.h.b16 %v4341
  %v4951 = vunpack.c.l.b16 %v4342
  %v4952 = vunpack.c.h.b16 %v4342
  %v4953 = vunpack.c.l.b16 %v4343
  %v4954 = vunpack.c.h.b16 %v4343
  %v4955 = vunpack.c.l.b16 %v4344
  %v4956 = vunpack.c.h.b16 %v4344
  %v4957 = vunpack.c.l.b16 %v4345
  %v4958 = vunpack.c.h.b16 %v4345
  %v4959 = vunpack.c.l.b16 %v4346
  %v4960 = vunpack.c.h.b16 %v4346
  %v4961 = vunpack.c.l.b16 %v4347
  %v4962 = vunpack.c.h.b16 %v4347
  %v4963 = vunpack.c.l.b16 %v4348
  %v4964 = vunpack.c.h.b16 %v4348
  %v4965 = vunpack.c.l.b16 %v4349
  %v4966 = vunpack.c.h.b16 %v4349
  %v4967 = vunpack.c.l.b16 %v4350
  %v4968 = vunpack.c.h.b16 %v4350
  %v4969 = vunpack.c.l.b16 %v4351
  %v4970 = vunpack.c.h.b16 %v4351
  %v4971 = vunpack.c.l.b16 %v4352
  %v4972 = vunpack.c.h.b16 %v4352
  %v4973 = vunpack.c.l.b16 %v4353
  %v4974 = vunpack.c.h.b16 %v4353
  %v4975 = vunpack.c.l.b16 %v4354
  %v4976 = vunpack.c.h.b16 %v4354
  %v4977 = vunpack.c.l.b16 %v4355
  %v4978 = vunpack.c.h.b16 %v4355
  %v4979 = vunpack.c.l.b16 %v4356
  %v4980 = vunpack.c.h.b16 %v4356
  %v4981 = vunpack.c.l.b16 %v4357
  %v4982 = vunpack.c.h.b16 %v4357
  %v4983 = vunpack.c.l.b16 %v4358
  %v4984 = vunpack.c.h.b16 %v4358
  %v4985 = vunpack.c.l.b16 %v4359
  %v4986 = vunpack.c.h.b16 %v4359
  %v4987 = vunpack.c.l.b16 %v4360
  %v4988 = vunpack.c.h.b16 %v4360
  %v4989 = vunpack.c.l.b16 %v4361
  %v4990 = vunpack.c.h.b16 %v4361
  %v4991 = vunpack.c.l.b16 %v4362
  %v4992 = vunpack.c.h.b16 %v4362
  %v4993 = vunpack.c.l.b16 %v4363
  %v4994 = vunpack.c.h.b16 %v4363
  %v4995 = vunpack.c.l.b16 %v4364
  %v4996 = vunpack.c.h.b16 %v4364
  %v4997 = vunpack.c.l.b16 %v4365
  %v4998 = vunpack.c.h.b16 %v4365
  %v4999 = vunpack.c.l.b16 %v4366
  %v5000 = vunpack.c.h.b16 %v4366
  %v5001 = vunpack.c.l.b16 %v4367
  %v5002 = vunpack.c.h.b16 %v4367
  %v5003 = vunpack.c.l.b16 %v4368
  %v5004 = vunpack.c.h.b16 %v4368
  %v5005 = vunpack.c.l.b16 %v4369
  %v5006 = vunpack.c.h.b16 %v4369
  %v5007 = vunpack.c.l.b16 %v4370
  %v5008 = vunpack.c.h.b16 %v4370
  %v5009 = vunpack.c.l.b16 %v4371
  %v5010 = vunpack.c.h.b16 %v4371
  %v5011 = vunpack.c.l.b16 %v4372
  %v5012 = vunpack.c.h.b16 %v4372
  %v5013 = vunpack.c.l.b16 %v4373
  %v5014 = vunpack.c.h.b16 %v4373
  %v5015 = vunpack.c.l.b16 %v4374
  %v5016 = vunpack.c.h.b16 %v4374
  %v5017 = vunpack.c.l.b16 %v4375
  %v5018 = vunpack.c.h.b16 %v4375
  %v5019 = vunpack.c.l.b16 %v4376
  %v5020 = vunpack.c.h.b16 %v4376
  %v5021 = vunpack.c.l.b16 %v4377
  %v5022 = vunpack.c.h.b16 %v4377
  %v5023 = vunpack.c.l.b16 %v4378
  %v5024 = vunpack.c.h.b16 %v4378
  %v5025 = vunpack.c.l.b16 %v4379
  %v5026 = vunpack.c.h.b16 %v4379
  %v5027 = vunpack.c.l.b16 %v4380
  %v5028 = vunpack.c.h.b16 %v4380
  %v5029 = vunpack.c.l.b16 %v4381
  %v5030 = vunpack.c.h.b16 %v4381
  %v5031 = vunpack.c.l.b16 %v4382
  %v5032 = vunpack.c.h.b16 %v4382
  %v5033 = vunpack.c.l.b16 %v4383
  %v5034 = vunpack.c.h.b16 %v4383
  %v5035 = vunpack.c.l.b16 %v4384
  %v5036 = vunpack.c.h.b16 %v4384
  %v5037 = vunpack.c.l.b16 %v4385
  %v5038 = vunpack.c.h.b16 %v4385
  %v5039 = vunpack.c.l.b16 %v4386
  %v5040 = vunpack.c.h.b16 %v4386
  %v5041 = vunpack.c.l.b16 %v4387
  %v5042 = vunpack.c.h.b16 %v4387
  %v5043 = vunpack.c.l.b16 %v4388
  %v5044 = vunpack.c.h.b16 %v4388
  %v5045 = vunpack.c.l.b16 %v4389
  %v5046 = vunpack.c.h.b16 %v4389
  %v5047 = vunpack.c.l.b16 %v4390
  %v5048 = vunpack.c.h.b16 %v4390
  %v5049 = vunpack.c.l.b16 %v4391
  %v5050 = vunpack.c.h.b16 %v4391
  %v5051 = vunpack.c.l.b16 %v4392
  %v5052 = vunpack.c.h.b16 %v4392
  %v5053 = vunpack.c.l.b16 %v4393
  %v5054 = vunpack.c.h.b16 %v4393
  %v5055 = vunpack.c.l.b16 %v4394
  %v5056 = vunpack.c.h.b16 %v4394
  %v5057 = vunpack.c.l.b16 %v4395
  %v5058 = vunpack.c.h.b16 %v4395
  %v5059 = vunpack.c.l.b16 %v4396
  %v5060 = vunpack.c.h.b16 %v4396
  %v5061 = vunpack.c.l.b16 %v4397
  %v5062 = vunpack.c.h.b16 %v4397
  %v5063 = vunpack.c.l.b16 %v4398
  %v5064 = vunpack.c.h.b16 %v4398
  %v5065 = vunpack.c.l.b16 %v4399
  %v5066 = vunpack.c.h.b16 %v4399
  %v5067 = vunpack.c.l.b16 %v4400
  %v5068 = vunpack.c.h.b16 %v4400
  %v5069 = vunpack.c.l.b16 %v4401
  %v5070 = vunpack.c.h.b16 %v4401
  %v5071 = vunpack.c.l.b16 %v4402
  %v5072 = vunpack.c.h.b16 %v4402
  %v5073 = vunpack.c.l.b16 %v4403
  %v5074 = vunpack.c.h.b16 %v4403
  %v5075 = vunpack.c.l.b16 %v4404
  %v5076 = vunpack.c.h.b16 %v4404
  %v5077 = vunpack.c.l.b16 %v4405
  %v5078 = vunpack.c.h.b16 %v4405
  %v5079 = vunpack.c.l.b16 %v4406
  %v5080 = vunpack.c.h.b16 %v4406
  %v5081 = vunpack.c.l.b16 %v4407
  %v5082 = vunpack.c.h.b16 %v4407
  %v5083 = vunpack.c.l.b16 %v4408
  %v5084 = vunpack.c.h.b16 %v4408
  %v5085 = vunpack.c.l.b16 %v4409
  %v5086 = vunpack.c.h.b16 %v4409
  %v5087 = vunpack.c.l.b16 %v4410
  %v5088 = vunpack.c.h.b16 %v4410
  %v5089 = vunpack.c.l.b16 %v4411
  %v5090 = vunpack.c.h.b16 %v4411
  %v5091 = vunpack.c.l.b16 %v4412
  %v5092 = vunpack.c.h.b16 %v4412
  %v5093 = vunpack.c.l.b16 %v4413
  %v5094 = vunpack.c.h.b16 %v4413
  %v5095 = vunpack.c.l.b16 %v4414
  %v5096 = vunpack.c.h.b16 %v4414
  %v5097 = vunpack.c.l.b16 %v4415
  %v5098 = vunpack.c.h.b16 %v4415
  %v5099 = vunpack.c.l.b16 %v4416
  %v5100 = vunpack.c.h.b16 %v4416
  %v5101 = vunpack.c.l.b16 %v4417
  %v5102 = vunpack.c.h.b16 %v4417
  %v5103 = vunpack.c.l.b16 %v4418
  %v5104 = vunpack.c.h.b16 %v4418
  %v5105 = vunpack.c.l.b16 %v4419
  %v5106 = vunpack.c.h.b16 %v4419
  %v5107 = vunpack.c.l.b16 %v4420
  %v5108 = vunpack.c.h.b16 %v4420
  %v5109 = vunpack.c.l.b16 %v4421
  %v5110 = vunpack.c.h.b16 %v4421
  %v5111 = vunpack.c.l.b16 %v4422
  %v5112 = vunpack.c.h.b16 %v4422
  %v5113 = vunpack.c.l.b16 %v4423
  %v5114 = vunpack.c.h.b16 %v4423
  %v5115 = vunpack.c.l.b16 %v4424
  %v5116 = vunpack.c.h.b16 %v4424
  %v5117 = vunpack.c.l.b16 %v4425
  %v5118 = vunpack.c.h.b16 %v4425
  %v5119 = vunpack.c.l.b16 %v4426
  %v5120 = vunpack.c.h.b16 %v4426
  %v5121 = vunpack.c.l.b16 %v4427
  %v5122 = vunpack.c.h.b16 %v4427
  %v5123 = vunpack.c.l.b16 %v4428
  %v5124 = vunpack.c.h.b16 %v4428
  %v5125 = vunpack.c.l.b16 %v4429
  %v5126 = vunpack.c.h.b16 %v4429
  %v5127 = vunpack.c.l.b16 %v4430
  %v5128 = vunpack.c.h.b16 %v4430
  %v5129 = vunpack.c.l.b16 %v4431
  %v5130 = vunpack.c.h.b16 %v4431
  %v5131 = vunpack.c.l.b16 %v4432
  %v5132 = vunpack.c.h.b16 %v4432
  %v5133 = vunpack.c.l.b16 %v4433
  %v5134 = vunpack.c.h.b16 %v4433
  %v5135 = vunpack.c.l.b16 %v4434
  %v5136 = vunpack.c.h.b16 %v4434
  %v5137 = vunpack.c.l.b16 %v4435
  %v5138 = vunpack.c.h.b16 %v4435
  %v5139 = vunpack.c.l.b16 %v4436
  %v5140 = vunpack.c.h.b16 %v4436
  %v5141 = vunpack.c.l.b16 %v4437
  %v5142 = vunpack.c.h.b16 %v4437
  %v5143 = vunpack.c.l.b16 %v4438
  %v5144 = vunpack.c.h.b16 %v4438
  %v5145 = vunpack.c.l.b16 %v4439
  %v5146 = vunpack.c.h.b16 %v4439
  %v5147 = vunpack.c.l.b16 %v4440
  %v5148 = vunpack.c.h.b16 %v4440
  %v5149 = vunpack.c.l.b16 %v4441
  %v5150 = vunpack.c.h.b16 %v4441
  %v5151 = vunpack.c.l.b16 %v4442
  %v5152 = vunpack.c.h.b16 %v4442
  %v5153 = vunpack.c.l.b16 %v4443
  %v5154 = vunpack.c.h.b16 %v4443
  %v5155 = vunpack.c.l.b16 %v4444
  %v5156 = vunpack.c.h.b16 %v4444
  %v5157 = vunpack.c.l.b16 %v4445
  %v5158 = vunpack.c.h.b16 %v4445
  %v5159 = vunpack.c.l.b16 %v4446
  %v5160 = vunpack.c.h.b16 %v4446
  %v5161 = vunpack.c.l.b16 %v4447
  %v5162 = vunpack.c.h.b16 %v4447
  %v5163 = vunpack.c.l.b16 %v4448
  %v5164 = vunpack.c.h.b16 %v4448
  %v5165 = vunpack.c.l.b16 %v4449
  %v5166 = vunpack.c.h.b16 %v4449
  %v5167 = vunpack.c.l.b16 %v4450
  %v5168 = vunpack.c.h.b16 %v4450
  %v5169 = vunpack.c.l.b16 %v4451
  %v5170 = vunpack.c.h.b16 %v4451
  %v5171 = vunpack.c.l.b16 %v4452
  %v5172 = vunpack.c.h.b16 %v4452
  %v5173 = vunpack.c.l.b16 %v4453
  %v5174 = vunpack.c.h.b16 %v4453
  %v5175 = vunpack.c.l.b16 %v4454
  %v5176 = vunpack.c.h.b16 %v4454
  %v5177 = vunpack.c.l.b16 %v4455
  %v5178 = vunpack.c.h.b16 %v4455
  %v5179 = vunpack.c.l.b16 %v4456
  %v5180 = vunpack.c.h.b16 %v4456
  %v5181 = vunpack.c.l.b16 %v4457
  %v5182 = vunpack.c.h.b16 %v4457
  %v5183 = vunpack.c.l.b16 %v4458
  %v5184 = vunpack.c.h.b16 %v4458
  %v5185 = vunpack.c.l.b16 %v4459
  %v5186 = vunpack.c.h.b16 %v4459
  %v5187 = vunpack.c.l.b16 %v4460
  %v5188 = vunpack.c.h.b16 %v4460
  %v5189 = vunpack.c.l.b16 %v4461
  %v5190 = vunpack.c.h.b16 %v4461
  %v5191 = vunpack.c.l.b16 %v4462
  %v5192 = vunpack.c.h.b16 %v4462
  %v5193 = vunpack.c.l.b16 %v4463
  %v5194 = vunpack.c.h.b16 %v4463
  %v5195 = vunpack.c.l.b16 %v4464
  %v5196 = vunpack.c.h.b16 %v4464
  %v5197 = vunpack.c.l.b16 %v4465
  %v5198 = vunpack.c.h.b16 %v4465
  %v5199 = vunpack.c.l.b16 %v4466
  %v5200 = vunpack.c.h.b16 %v4466
  %v5201 = vunpack.c.l.b16 %v4467
  %v5202 = vunpack.c.h.b16 %v4467
  %v5203 = vunpack.c.l.b16 %v4468
  %v5204 = vunpack.c.h.b16 %v4468
  %v5205 = vunpack.c.l.b16 %v4469
  %v5206 = vunpack.c.h.b16 %v4469
  %v5207 = vunpack.c.l.b16 %v4470
  %v5208 = vunpack.c.h.b16 %v4470
  %v5209 = vunpack.c.l.b16 %v4471
  %v5210 = vunpack.c.h.b16 %v4471
  %v5211 = vunpack.c.l.b16 %v4472
  %v5212 = vunpack.c.h.b16 %v4472
  %v5213 = vunpack.c.l.b16 %v4473
  %v5214 = vunpack.c.h.b16 %v4473
  %v5215 = vunpack.c.l.b16 %v4474
  %v5216 = vunpack.c.h.b16 %v4474
  %v5217 = vunpack.c.l.b16 %v4475
  %v5218 = vunpack.c.h.b16 %v4475
  %v5219 = vunpack.c.l.b16 %v4476
  %v5220 = vunpack.c.h.b16 %v4476
  %v5221 = vunpack.c.l.b16 %v4477
  %v5222 = vunpack.c.h.b16 %v4477
  %v5223 = vunpack.c.l.b16 %v4478
  %v5224 = vunpack.c.h.b16 %v4478
  %v5225 = vunpack.c.l.b16 %v4479
  %v5226 = vunpack.c.h.b16 %v4479
  %v5227 = vunpack.c.l.b16 %v4480
  %v5228 = vunpack.c.h.b16 %v4480
  %v5229 = vunpack.c.l.b16 %v4481
  %v5230 = vunpack.c.h.b16 %v4481
  %v5231 = vunpack.c.l.b16 %v4482
  %v5232 = vunpack.c.h.b16 %v4482
  %v5233 = vunpack.c.l.b16 %v4483
  %v5234 = vunpack.c.h.b16 %v4483
  %v5235 = vunpack.c.l.b16 %v4484
  %v5236 = vunpack.c.h.b16 %v4484
  %v5237 = vunpack.c.l.b16 %v4485
  %v5238 = vunpack.c.h.b16 %v4485
  %v5239 = vunpack.c.l.b16 %v4486
  %v5240 = vunpack.c.h.b16 %v4486
  %v5241 = vunpack.c.l.b16 %v4487
  %v5242 = vunpack.c.h.b16 %v4487
  %v5243 = vunpack.c.l.b16 %v4488
  %v5244 = vunpack.c.h.b16 %v4488
  %v5245 = vunpack.c.l.b16 %v4489
  %v5246 = vunpack.c.h.b16 %v4489
  %v5247 = vunpack.c.l.b16 %v4490
  %v5248 = vunpack.c.h.b16 %v4490
  %v5249 = vunpack.c.l.b16 %v4491
  %v5250 = vunpack.c.h.b16 %v4491
  %v5251 = vunpack.c.l.b16 %v4492
  %v5252 = vunpack.c.h.b16 %v4492
  %v5253 = vunpack.c.l.b16 %v4493
  %v5254 = vunpack.c.h.b16 %v4493
  %v5255 = vunpack.c.l.b16 %v4494
  %v5256 = vunpack.c.h.b16 %v4494
  %v5257 = vunpack.c.l.b16 %v4495
  %v5258 = vunpack.c.h.b16 %v4495
  %v5259 = vunpack.c.l.b16 %v4496
  %v5260 = vunpack.c.h.b16 %v4496
  %v5261 = vunpack.c.l.b16 %v4497
  %v5262 = vunpack.c.h.b16 %v4497
  %v5263 = vunpack.c.l.b16 %v4498
  %v5264 = vunpack.c.h.b16 %v4498
  %v5265 = vunpack.c.l.b16 %v4499
  %v5266 = vunpack.c.h.b16 %v4499
  %v5267 = vunpack.c.l.b16 %v4500
  %v5268 = vunpack.c.h.b16 %v4500
  %v5269 = vunpack.c.l.b16 %v4501
  %v5270 = vunpack.c.h.b16 %v4501
  %v5271 = vunpack.c.l.b16 %v4502
  %v5272 = vunpack.c.h.b16 %v4502
  %v5273 = vunpack.c.l.b16 %v4503
  %v5274 = vunpack.c.h.b16 %v4503
  %v5275 = vunpack.c.l.b16 %v4504
  %v5276 = vunpack.c.h.b16 %v4504
  %v5277 = vunpack.c.l.b16 %v4505
  %v5278 = vunpack.c.h.b16 %v4505
  %v5279 = vunpack.c.l.b16 %v4506
  %v5280 = vunpack.c.h.b16 %v4506
  %v5281 = vunpack.c.l.b16 %v4507
  %v5282 = vunpack.c.h.b16 %v4507
  %v5283 = vunpack.c.l.b16 %v4508
  %v5284 = vunpack.c.h.b16 %v4508
  %v5285 = vunpack.c.l.b16 %v4509
  %v5286 = vunpack.c.h.b16 %v4509
  %v5287 = vunpack.c.l.b16 %v4510
  %v5288 = vunpack.c.h.b16 %v4510
  %v5289 = vunpack.c.l.b16 %v4511
  %v5290 = vunpack.c.h.b16 %v4511
  %v5291 = vunpack.c.l.b16 %v4512
  %v5292 = vunpack.c.h.b16 %v4512
  %v5293 = vunpack.c.l.b16 %v4513
  %v5294 = vunpack.c.h.b16 %v4513
  %v5295 = vunpack.c.l.b16 %v4514
  %v5296 = vunpack.c.h.b16 %v4514
  %v5297 = vunpack.c.l.b16 %v4515
  %v5298 = vunpack.c.h.b16 %v4515
  %v5299 = vunpack.c.l.b16 %v4516
  %v5300 = vunpack.c.h.b16 %v4516
  %v5301 = vunpack.c.l.b16 %v4517
  %v5302 = vunpack.c.h.b16 %v4517
  %v5303 = vunpack.c.l.b16 %v4518
  %v5304 = vunpack.c.h.b16 %v4518
  %v5305 = vunpack.c.l.b16 %v4519
  %v5306 = vunpack.c.h.b16 %v4519
  %v5307 = vunpack.c.l.b16 %v4520
  %v5308 = vunpack.c.h.b16 %v4520
  %v5309 = vunpack.c.l.b16 %v4521
  %v5310 = vunpack.c.h.b16 %v4521
  %v5311 = vunpack.c.l.b16 %v4522
  %v5312 = vunpack.c.h.b16 %v4522
  %v5313 = vpack.c.b16 %v4805, %v4801
  %v5314 = vpack.c.b16 %v4806, %v4802
  %v5315 = vpack.c.b16 %v4807, %v4803
  %v5316 = vpack.c.b16 %v4808, %v4804
  %v5317 = vpack.c.b16 %v4813, %v4809
  %v5318 = vpack.c.b16 %v4814, %v4810
  %v5319 = vpack.c.b16 %v4815, %v4811
  %v5320 = vpack.c.b16 %v4816, %v4812
  %v5321 = vpack.c.b16 %v4821, %v4817
  %v5322 = vpack.c.b16 %v4822, %v4818
  %v5323 = vpack.c.b16 %v4823, %v4819
  %v5324 = vpack.c.b16 %v4824, %v4820
  %v5325 = vpack.c.b16 %v4829, %v4825
  %v5326 = vpack.c.b16 %v4830, %v4826
  %v5327 = vpack.c.b16 %v4831, %v4827
  %v5328 = vpack.c.b16 %v4832, %v4828
  %v5329 = vpack.c.b16 %v4837, %v4833
  %v5330 = vpack.c.b16 %v4838, %v4834
  %v5331 = vpack.c.b16 %v4839, %v4835
  %v5332 = vpack.c.b16 %v4840, %v4836
  %v5333 = vpack.c.b16 %v4845, %v4841
  %v5334 = vpack.c.b16 %v4846, %v4842
  %v5335 = vpack.c.b16 %v4847, %v4843
  %v5336 = vpack.c.b16 %v4848, %v4844
  %v5337 = vpack.c.b16 %v4853, %v4849
  %v5338 = vpack.c.b16 %v4854, %v4850
  %v5339 = vpack.c.b16 %v4855, %v4851
  %v5340 = vpack.c.b16 %v4856, %v4852
  %v5341 = vpack.c.b16 %v4861, %v4857
  %v5342 = vpack.c.b16 %v4862, %v4858
  %v5343 = vpack.c.b16 %v4863, %v4859
  %v5344 = vpack.c.b16 %v4864, %v4860
  %v5345 = vpack.c.b16 %v4869, %v4865
  %v5346 = vpack.c.b16 %v4870, %v4866
  %v5347 = vpack.c.b16 %v4871, %v4867
  %v5348 = vpack.c.b16 %v4872, %v4868
  %v5349 = vpack.c.b16 %v4877, %v4873
  %v5350 = vpack.c.b16 %v4878, %v4874
  %v5351 = vpack.c.b16 %v4879, %v4875
  %v5352 = vpack.c.b16 %v4880, %v4876
  %v5353 = vpack.c.b16 %v4885, %v4881
  %v5354 = vpack.c.b16 %v4886, %v4882
  %v5355 = vpack.c.b16 %v4887, %v4883
  %v5356 = vpack.c.b16 %v4888, %v4884
  %v5357 = vpack.c.b16 %v4893, %v4889
  %v5358 = vpack.c.b16 %v4894, %v4890
  %v5359 = vpack.c.b16 %v4895, %v4891
  %v5360 = vpack.c.b16 %v4896, %v4892
  %v5361 = vpack.c.b16 %v4901, %v4897
  %v5362 = vpack.c.b16 %v4902, %v4898
  %v5363 = vpack.c.b16 %v4903, %v4899
  %v5364 = vpack.c.b16 %v4904, %v4900
  %v5365 = vpack.c.b16 %v4909, %v4905
  %v5366 = vpack.c.b16 %v4910, %v4906
  %v5367 = vpack.c.b16 %v4911, %v4907
  %v5368 = vpack.c.b16 %v4912, %v4908
  %v5369 = vpack.c.b16 %v4917, %v4913
  %v5370 = vpack.c.b16 %v4918, %v4914
  %v5371 = vpack.c.b16 %v4919, %v4915
  %v5372 = vpack.c.b16 %v4920, %v4916
  %v5373 = vpack.c.b16 %v4925, %v4921
  %v5374 = vpack.c.b16 %v4926, %v4922
  %v5375 = vpack.c.b16 %v4927, %v4923
  %v5376 = vpack.c.b16 %v4928, %v4924
  %v5377 = vpack.c.b16 %v4933, %v4929
  %v5378 = vpack.c.b16 %v4934, %v4930
  %v5379 = vpack.c.b16 %v4935, %v4931
  %v5380 = vpack.c.b16 %v4936, %v4932
  %v5381 = vpack.c.b16 %v4941, %v4937
  %v5382 = vpack.c.b16 %v4942, %v4938
  %v5383 = vpack.c.b16 %v4943, %v4939
  %v5384 = vpack.c.b16 %v4944, %v4940
  %v5385 = vpack.c.b16 %v4949, %v4945
  %v5386 = vpack.c.b16 %v4950, %v4946
  %v5387 = vpack.c.b16 %v4951, %v4947
  %v5388 = vpack.c.b16 %v4952, %v4948
  %v5389 = vpack.c.b16 %v4957, %v4953
  %v5390 = vpack.c.b16 %v4958, %v4954
  %v5391 = vpack.c.b16 %v4959, %v4955
  %v5392 = vpack.c.b16 %v4960, %v4956
  %v5393 = vpack.c.b16 %v4965, %v4961
  %v5394 = vpack.c.b16 %v4966, %v4962
  %v5395 = vpack.c.b16 %v4967, %v4963
  %v5396 = vpack.c.b16 %v4968, %v4964
  %v5397 = vpack.c.b16 %v4973, %v4969
  %v5398 = vpack.c.b16 %v4974, %v4970
  %v5399 = vpack.c.b16 %v4975, %v4971
  %v5400 = vpack.c.b16 %v4976, %v4972
  %v5401 = vpack.c.b16 %v4981, %v4977
  %v5402 = vpack.c.b16 %v4982, %v4978
  %v5403 = vpack.c.b16 %v4983, %v4979
  %v5404 = vpack.c.b16 %v4984, %v4980
  %v5405 = vpack.c.b16 %v4989, %v4985
  %v5406 = vpack.c.b16 %v4990, %v4986
  %v5407 = vpack.c.b16 %v4991, %v4987
  %v5408 = vpack.c.b16 %v4992, %v4988
  %v5409 = vpack.c.b16 %v4997, %v4993
  %v5410 = vpack.c.b16 %v4998, %v4994
  %v5411 = vpack.c.b16 %v4999, %v4995
  %v5412 = vpack.c.b16 %v5000, %v4996
  %v5413 = vpack.c.b16 %v5005, %v5001
  %v5414 = vpack.c.b16 %v5006, %v5002
  %v5415 = vpack.c.b16 %v5007, %v5003
  %v5416 = vpack.c.b16 %v5008, %v5004
  %v5417 = vpack.c.b16 %v5013, %v5009
  %v5418 = vpack.c.b16 %v5014, %v5010
  %v5419 = vpack.c.b16 %v5015, %v5011
  %v5420 = vpack.c.b16 %v5016, %v5012
  %v5421 = vpack.c.b16 %v5021, %v5017
  %v5422 = vpack.c.b16 %v5022, %v5018
  %v5423 = vpack.c.b16 %v5023, %v5019
  %v5424 = vpack.c.b16 %v5024, %v5020
  %v5425 = vpack.c.b16 %v5029, %v5025
  %v5426 = vpack.c.b16 %v5030, %v5026
  %v5427 = vpack.c.b16 %v5031, %v5027
  %v5428 = vpack.c.b16 %v5032, %v5028
  %v5429 = vpack.c.b16 %v5037, %v5033
  %v5430 = vpack.c.b16 %v5038, %v5034
  %v5431 = vpack.c.b16 %v5039, %v5035
  %v5432 = vpack.c.b16 %v5040, %v5036
  %v5433 = vpack.c.b16 %v5045, %v5041
  %v5434 = vpack.c.b16 %v5046, %v5042
  %v5435 = vpack.c.b16 %v5047, %v5043
  %v5436 = vpack.c.b16 %v5048, %v5044
  %v5437 = vpack.c.b16 %v5053, %v5049
  %v5438 = vpack.c.b16 %v5054, %v5050
  %v5439 = vpack.c.b16 %v5055, %v5051
  %v5440 = vpack.c.b16 %v5056, %v5052
  %v5441 = vpack.c.b16 %v5061, %v5057
  %v5442 = vpack.c.b16 %v5062, %v5058
  %v5443 = vpack.c.b16 %v5063, %v5059
  %v5444 = vpack.c.b16 %v5064, %v5060
  %v5445 = vpack.c.b16 %v5069, %v5065
  %v5446 = vpack.c.b16 %v5070, %v5066
  %v5447 = vpack.c.b16 %v5071, %v5067
  %v5448 = vpack.c.b16 %v5072, %v5068
  %v5449 = vpack.c.b16 %v5077, %v5073
  %v5450 = vpack.c.b16 %v5078, %v5074
  %v5451 = vpack.c.b16 %v5079, %v5075
  %v5452 = vpack.c.b16 %v5080, %v5076
  %v5453 = vpack.c.b16 %v5085, %v5081
  %v5454 = vpack.c.b16 %v5086, %v5082
  %v5455 = vpack.c.b16 %v5087, %v5083
  %v5456 = vpack.c.b16 %v5088, %v5084
  %v5457 = vpack.c.b16 %v5093, %v5089
  %v5458 = vpack.c.b16 %v5094, %v5090
  %v5459 = vpack.c.b16 %v5095, %v5091
  %v5460 = vpack.c.b16 %v5096, %v5092
  %v5461 = vpack.c.b16 %v5101, %v5097
  %v5462 = vpack.c.b16 %v5102, %v5098
  %v5463 = vpack.c.b16 %v5103, %v5099
  %v5464 = vpack.c.b16 %v5104, %v5100
  %v5465 = vpack.c.b16 %v5109, %v5105
  %v5466 = vpack.c.b16 %v5110, %v5106
  %v5467 = vpack.c.b16 %v5111, %v5107
  %v5468 = vpack.c.b16 %v5112, %v5108
  %v5469 = vpack.c.b16 %v5117, %v5113
  %v5470 = vpack.c.b16 %v5118, %v5114
  %v5471 = vpack.c.b16 %v5119, %v5115
  %v5472 = vpack.c.b16 %v5120, %v5116
  %v5473 = vpack.c.b16 %v5125, %v5121
  %v5474 = vpack.c.b16 %v5126, %v5122
  %v5475 = vpack.c.b16 %v5127, %v5123
  %v5476 = vpack.c.b16 %v5128, %v5124
  %v5477 = vpack.c.b16 %v5133, %v5129
  %v5478 = vpack.c.b16 %v5134, %v5130
  %v5479 = vpack.c.b16 %v5135, %v5131
  %v5480 = vpack.c.b16 %v5136, %v5132
  %v5481 = vpack.c.b16 %v5141, %v5137
  %v5482 = vpack.c.b16 %v5142, %v5138
  %v5483 = vpack.c.b16 %v5143, %v5139
  %v5484 = vpack.c.b16 %v5144, %v5140
  %v5485 = vpack.c.b16 %v5149, %v5145
  %v5486 = vpack.c.b16 %v5150, %v5146
  %v5487 = vpack.c.b16 %v5151, %v5147
  %v5488 = vpack.c.b16 %v5152, %v5148
  %v5489 = vpack.c.b16 %v5157, %v5153
  %v5490 = vpack.c.b16 %v5158, %v5154
  %v5491 = vpack.c.b16 %v5159, %v5155
  %v5492 = vpack.c.b16 %v5160, %v5156
  %v5493 = vpack.c.b16 %v5165, %v5161
  %v5494 = vpack.c.b16 %v5166, %v5162
  %v5495 = vpack.c.b16 %v5167, %v5163
  %v5496 = vpack.c.b16 %v5168, %v5164
  %v5497 = vpack.c.b16 %v5173, %v5169
  %v5498 = vpack.c.b16 %v5174, %v5170
  %v5499 = vpack.c.b16 %v5175, %v5171
  %v5500 = vpack.c.b16 %v5176, %v5172
  %v5501 = vpack.c.b16 %v5181, %v5177
  %v5502 = vpack.c.b16 %v5182, %v5178
  %v5503 = vpack.c.b16 %v5183, %v5179
  %v5504 = vpack.c.b16 %v5184, %v5180
  %v5505 = vpack.c.b16 %v5189, %v5185
  %v5506 = vpack.c.b16 %v5190, %v5186
  %v5507 = vpack.c.b16 %v5191, %v5187
  %v5508 = vpack.c.b16 %v5192, %v5188
  %v5509 = vpack.c.b16 %v5197, %v5193
  %v5510 = vpack.c.b16 %v5198, %v5194
  %v5511 = vpack.c.b16 %v5199, %v5195
  %v5512 = vpack.c.b16 %v5200, %v5196
  %v5513 = vpack.c.b16 %v5205, %v5201
  %v5514 = vpack.c.b16 %v5206, %v5202
  %v5515 = vpack.c.b16 %v5207, %v5203
  %v5516 = vpack.c.b16 %v5208, %v5204
  %v5517 = vpack.c.b16 %v5213, %v5209
  %v5518 = vpack.c.b16 %v5214, %v5210
  %v5519 = vpack.c.b16 %v5215, %v5211
  %v5520 = vpack.c.b16 %v5216, %v5212
  %v5521 = vpack.c.b16 %v5221, %v5217
  %v5522 = vpack.c.b16 %v5222, %v5218
  %v5523 = vpack.c.b16 %v5223, %v5219
  %v5524 = vpack.c.b16 %v5224, %v5220
  %v5525 = vpack.c.b16 %v5229, %v5225
  %v5526 = vpack.c.b16 %v5230, %v5226
  %v5527 = vpack.c.b16 %v5231, %v5227
  %v5528 = vpack.c.b16 %v5232, %v5228
  %v5529 = vpack.c.b16 %v5237, %v5233
  %v5530 = vpack.c.b16 %v5238, %v5234
  %v5531 = vpack.c.b16 %v5239, %v5235
  %v5532 = vpack.c.b16 %v5240, %v5236
  %v5533 = vpack.c.b16 %v5245, %v5241
  %v5534 = vpack.c.b16 %v5246, %v5242
  %v5535 = vpack.c.b16 %v5247, %v5243
  %v5536 = vpack.c.b16 %v5248, %v5244
  %v5537 = vpack.c.b16 %v5253, %v5249
  %v5538 = vpack.c.b16 %v5254, %v5250
  %v5539 = vpack.c.b16 %v5255, %v5251
  %v5540 = vpack.c.b16 %v5256, %v5252
  %v5541 = vpack.c.b16 %v5261, %v5257
  %v5542 = vpack.c.b16 %v5262, %v5258
  %v5543 = vpack.c.b16 %v5263, %v5259
  %v5544 = vpack.c.b16 %v5264, %v5260
  %v5545 = vpack.c.b16 %v5269, %v5265
  %v5546 = vpack.c.b16 %v5270, %v5266
  %v5547 = vpack.c.b16 %v5271, %v5267
  %v5548 = vpack.c.b16 %v5272, %v5268
  %v5549 = vpack.c.b16 %v5277, %v5273
  %v5550 = vpack.c.b16 %v5278, %v5274
  %v5551 = vpack.c.b16 %v5279, %v5275
  %v5552 = vpack.c.b16 %v5280, %v5276
  %v5553 = vpack.c.b16 %v5285, %v5281
  %v5554 = vpack.c.b16 %v5286, %v5282
  %v5555 = vpack.c.b16 %v5287, %v5283
  %v5556 = vpack.c.b16 %v5288, %v5284
  %v5557 = vpack.c.b16 %v5293, %v5289
  %v5558 = vpack.c.b16 %v5294, %v5290
  %v5559 = vpack.c.b16 %v5295, %v5291
  %v5560 = vpack.c.b16 %v5296, %v5292
  %v5561 = vpack.c.b16 %v5301, %v5297
  %v5562 = vpack.c.b16 %v5302, %v5298
  %v5563 = vpack.c.b16 %v5303, %v5299
  %v5564 = vpack.c.b16 %v5304, %v5300
  %v5565 = vpack.c.b16 %v5309, %v5305
  %v5566 = vpack.c.b16 %v5310, %v5306
  %v5567 = vpack.c.b16 %v5311, %v5307
  %v5568 = vpack.c.b16 %v5312, %v5308
  %5825 = vmatprep.subr.bf16.mxu0 %v5342
  %5826 = vmatpush1.bf16.msra.mxu0 %v5341
  %5827 = vmatprep.subr.bf16.mxu0 %v5338
  %5828 = vmatpush1.bf16.msra.mxu0 %v5337
  %5829 = vmatprep.subr.bf16.mxu0 %v5334
  %5830 = vmatpush1.bf16.msra.mxu0 %v5333
  %5831 = vmatprep.subr.bf16.mxu0 %v5330
  %5832 = vmatpush1.bf16.msra.mxu0 %v5329
  %5833 = vmatprep.subr.bf16.mxu0 %v5326
  %5834 = vmatpush1.bf16.msra.mxu0 %v5325
  %5835 = vmatprep.subr.bf16.mxu0 %v5322
  %5836 = vmatpush1.bf16.msra.mxu0 %v5321
  %5837 = vmatprep.subr.bf16.mxu0 %v5318
  %5838 = vmatpush1.bf16.msra.mxu0 %v5317
  %5839 = vmatprep.subr.bf16.mxu0 %v5314
  %5840 = vmatpush1.bf16.msra.mxu0 %v5313
  %5841 = vmatprep.subr.bf16.mxu0 %v5374
  %5842 = vmatpush2.bf16.msra.mxu0 %v5373
  %5843 = vmatprep.subr.bf16.mxu0 %v5370
  %5844 = vmatpush2.bf16.msra.mxu0 %v5369
  %5845 = vmatprep.subr.bf16.mxu0 %v5366
  %5846 = vmatpush2.bf16.msra.mxu0 %v5365
  %5847 = vmatprep.subr.bf16.mxu0 %v5362
  %5848 = vmatpush2.bf16.msra.mxu0 %v5361
  %5849 = vmatprep.subr.bf16.mxu0 %v5358
  %5850 = vmatpush2.bf16.msra.mxu0 %v5357
  %5851 = vmatprep.subr.bf16.mxu0 %v5354
  %5852 = vmatpush2.bf16.msra.mxu0 %v5353
  %5853 = vmatprep.subr.bf16.mxu0 %v5350
  %5854 = vmatpush2.bf16.msra.mxu0 %v5349
  %5855 = vmatprep.subr.bf16.mxu0 %v5346
  %5856 = vmatpush2.bf16.msra.mxu0 %v5345
  %5857 = vmatprep.mubr.bf16.mxu0 %v4252
  %5858 = vmatmul.mubr.bf16.gmra.mxu0 %v4251
  %v5859 = vpop.f32.mrf.mxu0
  %v5860 = vadd.f32 %v4528, %v5859
  %v5861 = vpop.f32.mrf.mxu0
  %v5862 = vadd.f32 %v4532, %v5861
  %v5863 = vpop.f32.mrf.mxu0
  %v5864 = vpop.f32.mrf.mxu0
  %5865 = vdwg.mxu0
  %5866 = vmatprep.subr.bf16.mxu0 %v5406
  %5867 = vmatpush1.bf16.msra.mxu0 %v5405
  %5868 = vmatprep.subr.bf16.mxu0 %v5402
  %5869 = vmatpush1.bf16.msra.mxu0 %v5401
  %5870 = vmatprep.subr.bf16.mxu0 %v5398
  %5871 = vmatpush1.bf16.msra.mxu0 %v5397
  %5872 = vmatprep.subr.bf16.mxu0 %v5394
  %5873 = vmatpush1.bf16.msra.mxu0 %v5393
  %5874 = vmatprep.subr.bf16.mxu0 %v5390
  %5875 = vmatpush1.bf16.msra.mxu0 %v5389
  %5876 = vmatprep.subr.bf16.mxu0 %v5386
  %5877 = vmatpush1.bf16.msra.mxu0 %v5385
  %5878 = vmatprep.subr.bf16.mxu0 %v5382
  %5879 = vmatpush1.bf16.msra.mxu0 %v5381
  %5880 = vmatprep.subr.bf16.mxu0 %v5378
  %5881 = vmatpush1.bf16.msra.mxu0 %v5377
  %5882 = vmatprep.subr.bf16.mxu0 %v5438
  %5883 = vmatpush2.bf16.msra.mxu0 %v5437
  %5884 = vmatprep.subr.bf16.mxu0 %v5434
  %5885 = vmatpush2.bf16.msra.mxu0 %v5433
  %5886 = vmatprep.subr.bf16.mxu0 %v5430
  %5887 = vmatpush2.bf16.msra.mxu0 %v5429
  %5888 = vmatprep.subr.bf16.mxu0 %v5426
  %5889 = vmatpush2.bf16.msra.mxu0 %v5425
  %5890 = vmatprep.subr.bf16.mxu0 %v5422
  %5891 = vmatpush2.bf16.msra.mxu0 %v5421
  %5892 = vmatprep.subr.bf16.mxu0 %v5418
  %5893 = vmatpush2.bf16.msra.mxu0 %v5417
  %5894 = vmatprep.subr.bf16.mxu0 %v5414
  %5895 = vmatpush2.bf16.msra.mxu0 %v5413
  %5896 = vmatprep.subr.bf16.mxu0 %v5410
  %5897 = vmatpush2.bf16.msra.mxu0 %v5409
  %5898 = vmatprep.mubr.bf16.mxu0 %v4258
  %5899 = vmatmul.mubr.bf16.gmra.mxu0 %v4257
  %v5900 = vpop.f32.mrf.mxu0
  %v5901 = vadd.f32 %v5860, %v5900
  %v5902 = vpop.f32.mrf.mxu0
  %v5903 = vadd.f32 %v5862, %v5902
  %v5904 = vpop.f32.mrf.mxu0
  %v5905 = vpop.f32.mrf.mxu0
  %5906 = vdwg.mxu0
  %5907 = vmatprep.subr.bf16.mxu0 %v5470
  %5908 = vmatpush1.bf16.msra.mxu0 %v5469
  %5909 = vmatprep.subr.bf16.mxu0 %v5466
  %5910 = vmatpush1.bf16.msra.mxu0 %v5465
  %5911 = vmatprep.subr.bf16.mxu0 %v5462
  %5912 = vmatpush1.bf16.msra.mxu0 %v5461
  %5913 = vmatprep.subr.bf16.mxu0 %v5458
  %5914 = vmatpush1.bf16.msra.mxu0 %v5457
  %5915 = vmatprep.subr.bf16.mxu0 %v5454
  %5916 = vmatpush1.bf16.msra.mxu0 %v5453
  %5917 = vmatprep.subr.bf16.mxu0 %v5450
  %5918 = vmatpush1.bf16.msra.mxu0 %v5449
  %5919 = vmatprep.subr.bf16.mxu0 %v5446
  %5920 = vmatpush1.bf16.msra.mxu0 %v5445
  %5921 = vmatprep.subr.bf16.mxu0 %v5442
  %5922 = vmatpush1.bf16.msra.mxu0 %v5441
  %5923 = vmatprep.subr.bf16.mxu0 %v5502
  %5924 = vmatpush2.bf16.msra.mxu0 %v5501
  %5925 = vmatprep.subr.bf16.mxu0 %v5498
  %5926 = vmatpush2.bf16.msra.mxu0 %v5497
  %5927 = vmatprep.subr.bf16.mxu0 %v5494
  %5928 = vmatpush2.bf16.msra.mxu0 %v5493
  %5929 = vmatprep.subr.bf16.mxu0 %v5490
  %5930 = vmatpush2.bf16.msra.mxu0 %v5489
  %5931 = vmatprep.subr.bf16.mxu0 %v5486
  %5932 = vmatpush2.bf16.msra.mxu0 %v5485
  %5933 = vmatprep.subr.bf16.mxu0 %v5482
  %5934 = vmatpush2.bf16.msra.mxu0 %v5481
  %5935 = vmatprep.subr.bf16.mxu0 %v5478
  %5936 = vmatpush2.bf16.msra.mxu0 %v5477
  %5937 = vmatprep.subr.bf16.mxu0 %v5474
  %5938 = vmatpush2.bf16.msra.mxu0 %v5473
  %5939 = vmatprep.mubr.bf16.mxu0 %v4254
  %5940 = vmatmul.mubr.bf16.gmra.mxu0 %v4253
  %v5941 = vpop.f32.mrf.mxu0
  %v5942 = vadd.f32 %v5901, %v5941
  %v5943 = vpop.f32.mrf.mxu0
  %v5944 = vadd.f32 %v5903, %v5943
  %v5945 = vpop.f32.mrf.mxu0
  %v5946 = vpop.f32.mrf.mxu0
  %5947 = vdwg.mxu0
  %5948 = vmatprep.subr.bf16.mxu0 %v5534
  %5949 = vmatpush1.bf16.msra.mxu0 %v5533
  %5950 = vmatprep.subr.bf16.mxu0 %v5530
  %5951 = vmatpush1.bf16.msra.mxu0 %v5529
  %5952 = vmatprep.subr.bf16.mxu0 %v5526
  %5953 = vmatpush1.bf16.msra.mxu0 %v5525
  %5954 = vmatprep.subr.bf16.mxu0 %v5522
  %5955 = vmatpush1.bf16.msra.mxu0 %v5521
  %5956 = vmatprep.subr.bf16.mxu0 %v5518
  %5957 = vmatpush1.bf16.msra.mxu0 %v5517
  %5958 = vmatprep.subr.bf16.mxu0 %v5514
  %5959 = vmatpush1.bf16.msra.mxu0 %v5513
  %5960 = vmatprep.subr.bf16.mxu0 %v5510
  %5961 = vmatpush1.bf16.msra.mxu0 %v5509
  %5962 = vmatprep.subr.bf16.mxu0 %v5506
  %5963 = vmatpush1.bf16.msra.mxu0 %v5505
  %5964 = vmatprep.subr.bf16.mxu0 %v5566
  %5965 = vmatpush2.bf16.msra.mxu0 %v5565
  %5966 = vmatprep.subr.bf16.mxu0 %v5562
  %5967 = vmatpush2.bf16.msra.mxu0 %v5561
  %5968 = vmatprep.subr.bf16.mxu0 %v5558
  %5969 = vmatpush2.bf16.msra.mxu0 %v5557
  %5970 = vmatprep.subr.bf16.mxu0 %v5554
  %5971 = vmatpush2.bf16.msra.mxu0 %v5553
  %5972 = vmatprep.subr.bf16.mxu0 %v5550
  %5973 = vmatpush2.bf16.msra.mxu0 %v5549
  %5974 = vmatprep.subr.bf16.mxu0 %v5546
  %5975 = vmatpush2.bf16.msra.mxu0 %v5545
  %5976 = vmatprep.subr.bf16.mxu0 %v5542
  %5977 = vmatpush2.bf16.msra.mxu0 %v5541
  %5978 = vmatprep.subr.bf16.mxu0 %v5538
  %5979 = vmatpush2.bf16.msra.mxu0 %v5537
  %5980 = vmatprep.mubr.bf16.mxu0 %v4264
  %5981 = vmatmul.mubr.bf16.gmra.mxu0 %v4263
  %v5982 = vpop.f32.mrf.mxu0
  %v5983 = vadd.f32 %v5942, %v5982
  %v5984 = vpop.f32.mrf.mxu0
  %v5985 = vadd.f32 %v5944, %v5984
  %v5986 = vpop.f32.mrf.mxu0
  %v5987 = vpop.f32.mrf.mxu0
  %5988 = vdwg.mxu0
  %5989 = vmatprep.subr.bf16.mxu0 %v5344
  %5990 = vmatpush1.bf16.msra.mxu0 %v5343
  %5991 = vmatprep.subr.bf16.mxu0 %v5340
  %5992 = vmatpush1.bf16.msra.mxu0 %v5339
  %5993 = vmatprep.subr.bf16.mxu0 %v5336
  %5994 = vmatpush1.bf16.msra.mxu0 %v5335
  %5995 = vmatprep.subr.bf16.mxu0 %v5332
  %5996 = vmatpush1.bf16.msra.mxu0 %v5331
  %5997 = vmatprep.subr.bf16.mxu0 %v5328
  %5998 = vmatpush1.bf16.msra.mxu0 %v5327
  %5999 = vmatprep.subr.bf16.mxu0 %v5324
  %6000 = vmatpush1.bf16.msra.mxu0 %v5323
  %6001 = vmatprep.subr.bf16.mxu0 %v5320
  %6002 = vmatpush1.bf16.msra.mxu0 %v5319
  %6003 = vmatprep.subr.bf16.mxu0 %v5316
  %6004 = vmatpush1.bf16.msra.mxu0 %v5315
  %6005 = vmatprep.subr.bf16.mxu0 %v5376
  %6006 = vmatpush2.bf16.msra.mxu0 %v5375
  %6007 = vmatprep.subr.bf16.mxu0 %v5372
  %6008 = vmatpush2.bf16.msra.mxu0 %v5371
  %6009 = vmatprep.subr.bf16.mxu0 %v5368
  %6010 = vmatpush2.bf16.msra.mxu0 %v5367
  %6011 = vmatprep.subr.bf16.mxu0 %v5364
  %6012 = vmatpush2.bf16.msra.mxu0 %v5363
  %6013 = vmatprep.subr.bf16.mxu0 %v5360
  %6014 = vmatpush2.bf16.msra.mxu0 %v5359
  %6015 = vmatprep.subr.bf16.mxu0 %v5356
  %6016 = vmatpush2.bf16.msra.mxu0 %v5355
  %6017 = vmatprep.subr.bf16.mxu0 %v5352
  %6018 = vmatpush2.bf16.msra.mxu0 %v5351
  %6019 = vmatprep.subr.bf16.mxu0 %v5348
  %6020 = vmatpush2.bf16.msra.mxu0 %v5347
  %6021 = vmatprep.mubr.bf16.mxu0 %v4252
  %6022 = vmatmul.mubr.bf16.gmra.mxu0 %v4251
  %v6023 = vpop.f32.mrf.mxu0
  %v6024 = vadd.f32 %v4536, %v6023
  %v6025 = vpop.f32.mrf.mxu0
  %v6026 = vadd.f32 %v4540, %v6025
  %v6027 = vpop.f32.mrf.mxu0
  %v6028 = vpop.f32.mrf.mxu0
  %6029 = vdwg.mxu0
  %6030 = vmatprep.subr.bf16.mxu0 %v5408
  %6031 = vmatpush1.bf16.msra.mxu0 %v5407
  %6032 = vmatprep.subr.bf16.mxu0 %v5404
  %6033 = vmatpush1.bf16.msra.mxu0 %v5403
  %6034 = vmatprep.subr.bf16.mxu0 %v5400
  %6035 = vmatpush1.bf16.msra.mxu0 %v5399
  %6036 = vmatprep.subr.bf16.mxu0 %v5396
  %6037 = vmatpush1.bf16.msra.mxu0 %v5395
  %6038 = vmatprep.subr.bf16.mxu0 %v5392
  %6039 = vmatpush1.bf16.msra.mxu0 %v5391
  %6040 = vmatprep.subr.bf16.mxu0 %v5388
  %6041 = vmatpush1.bf16.msra.mxu0 %v5387
  %6042 = vmatprep.subr.bf16.mxu0 %v5384
  %6043 = vmatpush1.bf16.msra.mxu0 %v5383
  %6044 = vmatprep.subr.bf16.mxu0 %v5380
  %6045 = vmatpush1.bf16.msra.mxu0 %v5379
  %6046 = vmatprep.subr.bf16.mxu0 %v5440
  %6047 = vmatpush2.bf16.msra.mxu0 %v5439
  %6048 = vmatprep.subr.bf16.mxu0 %v5436
  %6049 = vmatpush2.bf16.msra.mxu0 %v5435
  %6050 = vmatprep.subr.bf16.mxu0 %v5432
  %6051 = vmatpush2.bf16.msra.mxu0 %v5431
  %6052 = vmatprep.subr.bf16.mxu0 %v5428
  %6053 = vmatpush2.bf16.msra.mxu0 %v5427
  %6054 = vmatprep.subr.bf16.mxu0 %v5424
  %6055 = vmatpush2.bf16.msra.mxu0 %v5423
  %6056 = vmatprep.subr.bf16.mxu0 %v5420
  %6057 = vmatpush2.bf16.msra.mxu0 %v5419
  %6058 = vmatprep.subr.bf16.mxu0 %v5416
  %6059 = vmatpush2.bf16.msra.mxu0 %v5415
  %6060 = vmatprep.subr.bf16.mxu0 %v5412
  %6061 = vmatpush2.bf16.msra.mxu0 %v5411
  %6062 = vmatprep.mubr.bf16.mxu0 %v4258
  %6063 = vmatmul.mubr.bf16.gmra.mxu0 %v4257
  %v6064 = vpop.f32.mrf.mxu0
  %v6065 = vadd.f32 %v6024, %v6064
  %v6066 = vpop.f32.mrf.mxu0
  %v6067 = vadd.f32 %v6026, %v6066
  %v6068 = vpop.f32.mrf.mxu0
  %v6069 = vpop.f32.mrf.mxu0
  %6070 = vdwg.mxu0
  %6071 = vmatprep.subr.bf16.mxu0 %v5472
  %6072 = vmatpush1.bf16.msra.mxu0 %v5471
  %6073 = vmatprep.subr.bf16.mxu0 %v5468
  %6074 = vmatpush1.bf16.msra.mxu0 %v5467
  %6075 = vmatprep.subr.bf16.mxu0 %v5464
  %6076 = vmatpush1.bf16.msra.mxu0 %v5463
  %6077 = vmatprep.subr.bf16.mxu0 %v5460
  %6078 = vmatpush1.bf16.msra.mxu0 %v5459
  %6079 = vmatprep.subr.bf16.mxu0 %v5456
  %6080 = vmatpush1.bf16.msra.mxu0 %v5455
  %6081 = vmatprep.subr.bf16.mxu0 %v5452
  %6082 = vmatpush1.bf16.msra.mxu0 %v5451
  %6083 = vmatprep.subr.bf16.mxu0 %v5448
  %6084 = vmatpush1.bf16.msra.mxu0 %v5447
  %6085 = vmatprep.subr.bf16.mxu0 %v5444
  %6086 = vmatpush1.bf16.msra.mxu0 %v5443
  %6087 = vmatprep.subr.bf16.mxu0 %v5504
  %6088 = vmatpush2.bf16.msra.mxu0 %v5503
  %6089 = vmatprep.subr.bf16.mxu0 %v5500
  %6090 = vmatpush2.bf16.msra.mxu0 %v5499
  %6091 = vmatprep.subr.bf16.mxu0 %v5496
  %6092 = vmatpush2.bf16.msra.mxu0 %v5495
  %6093 = vmatprep.subr.bf16.mxu0 %v5492
  %6094 = vmatpush2.bf16.msra.mxu0 %v5491
  %6095 = vmatprep.subr.bf16.mxu0 %v5488
  %6096 = vmatpush2.bf16.msra.mxu0 %v5487
  %6097 = vmatprep.subr.bf16.mxu0 %v5484
  %6098 = vmatpush2.bf16.msra.mxu0 %v5483
  %6099 = vmatprep.subr.bf16.mxu0 %v5480
  %6100 = vmatpush2.bf16.msra.mxu0 %v5479
  %6101 = vmatprep.subr.bf16.mxu0 %v5476
  %6102 = vmatpush2.bf16.msra.mxu0 %v5475
  %6103 = vmatprep.mubr.bf16.mxu0 %v4254
  %6104 = vmatmul.mubr.bf16.gmra.mxu0 %v4253
  %v6105 = vpop.f32.mrf.mxu0
  %v6106 = vadd.f32 %v6065, %v6105
  %v6107 = vpop.f32.mrf.mxu0
  %v6108 = vadd.f32 %v6067, %v6107
  %v6109 = vpop.f32.mrf.mxu0
  %v6110 = vpop.f32.mrf.mxu0
  %6111 = vdwg.mxu0
  %6112 = vmatprep.subr.bf16.mxu0 %v5536
  %6113 = vmatpush1.bf16.msra.mxu0 %v5535
  %6114 = vmatprep.subr.bf16.mxu0 %v5532
  %6115 = vmatpush1.bf16.msra.mxu0 %v5531
  %6116 = vmatprep.subr.bf16.mxu0 %v5528
  %6117 = vmatpush1.bf16.msra.mxu0 %v5527
  %6118 = vmatprep.subr.bf16.mxu0 %v5524
  %6119 = vmatpush1.bf16.msra.mxu0 %v5523
  %6120 = vmatprep.subr.bf16.mxu0 %v5520
  %6121 = vmatpush1.bf16.msra.mxu0 %v5519
  %6122 = vmatprep.subr.bf16.mxu0 %v5516
  %6123 = vmatpush1.bf16.msra.mxu0 %v5515
  %6124 = vmatprep.subr.bf16.mxu0 %v5512
  %6125 = vmatpush1.bf16.msra.mxu0 %v5511
  %6126 = vmatprep.subr.bf16.mxu0 %v5508
  %6127 = vmatpush1.bf16.msra.mxu0 %v5507
  %6128 = vmatprep.subr.bf16.mxu0 %v5568
  %6129 = vmatpush2.bf16.msra.mxu0 %v5567
  %6130 = vmatprep.subr.bf16.mxu0 %v5564
  %6131 = vmatpush2.bf16.msra.mxu0 %v5563
  %6132 = vmatprep.subr.bf16.mxu0 %v5560
  %6133 = vmatpush2.bf16.msra.mxu0 %v5559
  %6134 = vmatprep.subr.bf16.mxu0 %v5556
  %6135 = vmatpush2.bf16.msra.mxu0 %v5555
  %6136 = vmatprep.subr.bf16.mxu0 %v5552
  %6137 = vmatpush2.bf16.msra.mxu0 %v5551
  %6138 = vmatprep.subr.bf16.mxu0 %v5548
  %6139 = vmatpush2.bf16.msra.mxu0 %v5547
  %6140 = vmatprep.subr.bf16.mxu0 %v5544
  %6141 = vmatpush2.bf16.msra.mxu0 %v5543
  %6142 = vmatprep.subr.bf16.mxu0 %v5540
  %6143 = vmatpush2.bf16.msra.mxu0 %v5539
  %6144 = vmatprep.mubr.bf16.mxu0 %v4264
  %6145 = vmatmul.mubr.bf16.gmra.mxu0 %v4263
  %v6146 = vpop.f32.mrf.mxu0
  %v6147 = vadd.f32 %v6106, %v6146
  %v6148 = vpop.f32.mrf.mxu0
  %v6149 = vadd.f32 %v6108, %v6148
  %v6150 = vpop.f32.mrf.mxu0
  %v6151 = vpop.f32.mrf.mxu0
  %6152 = vdwg.mxu0
  %v6153 = vmax.f32 %v5983, 0.0
  %v6154 = vmax.f32 %v5985, 0.0
  %v6155 = vmax.f32 %v6147, 0.0
  %v6156 = vmax.f32 %v6149, 0.0
  %v6157 = vpack.c.bf16 %v6153, %v6153
  %v6158 = vpack.c.bf16 %v6154, %v6154
  %v6159 = vpack.c.bf16 %v6155, %v6155
  %v6160 = vpack.c.bf16 %v6156, %v6156
  %v6161 = vld [vmem:[%s7] sm:$0xf]
  %v6162 = vld [vmem:[%s7 + $0x4] sm:$0xf]
  %v6163 = vld [vmem:[%s7 + $0x8] sm:$0xf]
  %v6164 = vld [vmem:[%s7 + $0xc] sm:$0xf]
  %v6165 = vld [vmem:[%s7 + $0x10] sm:$0xf]
  %v6166 = vld [vmem:[%s7 + $0x14] sm:$0xf]
  %v6167 = vld [vmem:[%s7 + $0x18] sm:$0xf]
  %v6168 = vld [vmem:[%s7 + $0x1c] sm:$0xf]
  %v6169 = vld [vmem:[%s7 + $0x20] sm:$0xf]
  %v6170 = vld [vmem:[%s7 + $0x24] sm:$0xf]
  %v6171 = vld [vmem:[%s7 + $0x28] sm:$0xf]
  %v6172 = vld [vmem:[%s7 + $0x2c] sm:$0xf]
  %v6173 = vld [vmem:[%s7 + $0x30] sm:$0xf]
  %v6174 = vld [vmem:[%s7 + $0x34] sm:$0xf]
  %v6175 = vld [vmem:[%s7 + $0x38] sm:$0xf]
  %v6176 = vld [vmem:[%s7 + $0x3c] sm:$0xf]
  %v6177 = vld [vmem:[%s7 + $0x40] sm:$0xf]
  %v6178 = vld [vmem:[%s7 + $0x44] sm:$0xf]
  %v6179 = vld [vmem:[%s7 + $0x48] sm:$0xf]
  %v6180 = vld [vmem:[%s7 + $0x4c] sm:$0xf]
  %v6181 = vld [vmem:[%s7 + $0x50] sm:$0xf]
  %v6182 = vld [vmem:[%s7 + $0x54] sm:$0xf]
  %v6183 = vld [vmem:[%s7 + $0x58] sm:$0xf]
  %v6184 = vld [vmem:[%s7 + $0x5c] sm:$0xf]
  %v6185 = vld [vmem:[%s7 + $0x60] sm:$0xf]
  %v6186 = vld [vmem:[%s7 + $0x64] sm:$0xf]
  %v6187 = vld [vmem:[%s7 + $0x68] sm:$0xf]
  %v6188 = vld [vmem:[%s7 + $0x6c] sm:$0xf]
  %v6189 = vld [vmem:[%s7 + $0x70] sm:$0xf]
  %v6190 = vld [vmem:[%s7 + $0x74] sm:$0xf]
  %v6191 = vld [vmem:[%s7 + $0x78] sm:$0xf]
  %v6192 = vld [vmem:[%s7 + $0x7c] sm:$0xf]
  %v6193 = vld [vmem:[%s7 + $0x80] sm:$0xf]
  %v6194 = vld [vmem:[%s7 + $0x84] sm:$0xf]
  %v6195 = vld [vmem:[%s7 + $0x88] sm:$0xf]
  %v6196 = vld [vmem:[%s7 + $0x8c] sm:$0xf]
  %v6197 = vld [vmem:[%s7 + $0x90] sm:$0xf]
  %v6198 = vld [vmem:[%s7 + $0x94] sm:$0xf]
  %v6199 = vld [vmem:[%s7 + $0x98] sm:$0xf]
  %v6200 = vld [vmem:[%s7 + $0x9c] sm:$0xf]
  %v6201 = vld [vmem:[%s7 + $0xa0] sm:$0xf]
  %v6202 = vld [vmem:[%s7 + $0xa4] sm:$0xf]
  %v6203 = vld [vmem:[%s7 + $0xa8] sm:$0xf]
  %v6204 = vld [vmem:[%s7 + $0xac] sm:$0xf]
  %v6205 = vld [vmem:[%s7 + $0xb0] sm:$0xf]
  %v6206 = vld [vmem:[%s7 + $0xb4] sm:$0xf]
  %v6207 = vld [vmem:[%s7 + $0xb8] sm:$0xf]
  %v6208 = vld [vmem:[%s7 + $0xbc] sm:$0xf]
  %v6209 = vld [vmem:[%s7 + $0xc0] sm:$0xf]
  %v6210 = vld [vmem:[%s7 + $0xc4] sm:$0xf]
  %v6211 = vld [vmem:[%s7 + $0xc8] sm:$0xf]
  %v6212 = vld [vmem:[%s7 + $0xcc] sm:$0xf]
  %v6213 = vld [vmem:[%s7 + $0xd0] sm:$0xf]
  %v6214 = vld [vmem:[%s7 + $0xd4] sm:$0xf]
  %v6215 = vld [vmem:[%s7 + $0xd8] sm:$0xf]
  %v6216 = vld [vmem:[%s7 + $0xdc] sm:$0xf]
  %v6217 = vld [vmem:[%s7 + $0xe0] sm:$0xf]
  %v6218 = vld [vmem:[%s7 + $0xe4] sm:$0xf]
  %v6219 = vld [vmem:[%s7 + $0xe8] sm:$0xf]
  %v6220 = vld [vmem:[%s7 + $0xec] sm:$0xf]
  %v6221 = vld [vmem:[%s7 + $0xf0] sm:$0xf]
  %v6222 = vld [vmem:[%s7 + $0xf4] sm:$0xf]
  %v6223 = vld [vmem:[%s7 + $0xf8] sm:$0xf]
  %v6224 = vld [vmem:[%s7 + $0xfc] sm:$0xf]
  %v6225 = vld [vmem:[%s8] sm:$0x1]
  %v6227 = vlaneseq
  %v6228 = vshrl.u32 %v6227, 7
  %v6229 = vsub.s32 0, %v6228
  %v6230 = vrot.slane %v6225, %v6229
  %v6296 = vunpack.c.l.b16 %v6161
  %v6297 = vunpack.c.l.b16 %v6162
  %v6298 = vunpack.c.l.b16 %v6163
  %v6299 = vunpack.c.l.b16 %v6164
  %v6300 = vunpack.c.l.b16 %v6165
  %v6301 = vunpack.c.l.b16 %v6166
  %v6302 = vunpack.c.l.b16 %v6167
  %v6303 = vunpack.c.l.b16 %v6168
  %v6304 = vunpack.c.l.b16 %v6169
  %v6305 = vunpack.c.l.b16 %v6170
  %v6306 = vunpack.c.l.b16 %v6171
  %v6307 = vunpack.c.l.b16 %v6172
  %v6308 = vunpack.c.l.b16 %v6173
  %v6309 = vunpack.c.l.b16 %v6174
  %v6310 = vunpack.c.l.b16 %v6175
  %v6311 = vunpack.c.l.b16 %v6176
  %v6312 = vunpack.c.l.b16 %v6177
  %v6313 = vunpack.c.l.b16 %v6178
  %v6314 = vunpack.c.l.b16 %v6179
  %v6315 = vunpack.c.l.b16 %v6180
  %v6316 = vunpack.c.l.b16 %v6181
  %v6317 = vunpack.c.l.b16 %v6182
  %v6318 = vunpack.c.l.b16 %v6183
  %v6319 = vunpack.c.l.b16 %v6184
  %v6320 = vunpack.c.l.b16 %v6185
  %v6321 = vunpack.c.l.b16 %v6186
  %v6322 = vunpack.c.l.b16 %v6187
  %v6323 = vunpack.c.l.b16 %v6188
  %v6324 = vunpack.c.l.b16 %v6189
  %v6325 = vunpack.c.l.b16 %v6190
  %v6326 = vunpack.c.l.b16 %v6191
  %v6327 = vunpack.c.l.b16 %v6192
  %v6328 = vunpack.c.l.b16 %v6193
  %v6329 = vunpack.c.l.b16 %v6194
  %v6330 = vunpack.c.l.b16 %v6195
  %v6331 = vunpack.c.l.b16 %v6196
  %v6332 = vunpack.c.l.b16 %v6197
  %v6333 = vunpack.c.l.b16 %v6198
  %v6334 = vunpack.c.l.b16 %v6199
  %v6335 = vunpack.c.l.b16 %v6200
  %v6336 = vunpack.c.l.b16 %v6201
  %v6337 = vunpack.c.l.b16 %v6202
  %v6338 = vunpack.c.l.b16 %v6203
  %v6339 = vunpack.c.l.b16 %v6204
  %v6340 = vunpack.c.l.b16 %v6205
  %v6341 = vunpack.c.l.b16 %v6206
  %v6342 = vunpack.c.l.b16 %v6207
  %v6343 = vunpack.c.l.b16 %v6208
  %v6344 = vunpack.c.l.b16 %v6209
  %v6345 = vunpack.c.l.b16 %v6210
  %v6346 = vunpack.c.l.b16 %v6211
  %v6347 = vunpack.c.l.b16 %v6212
  %v6348 = vunpack.c.l.b16 %v6213
  %v6349 = vunpack.c.l.b16 %v6214
  %v6350 = vunpack.c.l.b16 %v6215
  %v6351 = vunpack.c.l.b16 %v6216
  %v6352 = vunpack.c.l.b16 %v6217
  %v6353 = vunpack.c.l.b16 %v6218
  %v6354 = vunpack.c.l.b16 %v6219
  %v6355 = vunpack.c.l.b16 %v6220
  %v6356 = vunpack.c.l.b16 %v6221
  %v6357 = vunpack.c.l.b16 %v6222
  %v6358 = vunpack.c.l.b16 %v6223
  %v6359 = vunpack.c.l.b16 %v6224
  %v6360 = vpack.c.b16 %v6297, %v6296
  %v6361 = vpack.c.b16 %v6299, %v6298
  %v6362 = vpack.c.b16 %v6301, %v6300
  %v6363 = vpack.c.b16 %v6303, %v6302
  %v6364 = vpack.c.b16 %v6305, %v6304
  %v6365 = vpack.c.b16 %v6307, %v6306
  %v6366 = vpack.c.b16 %v6309, %v6308
  %v6367 = vpack.c.b16 %v6311, %v6310
  %v6368 = vpack.c.b16 %v6313, %v6312
  %v6369 = vpack.c.b16 %v6315, %v6314
  %v6370 = vpack.c.b16 %v6317, %v6316
  %v6371 = vpack.c.b16 %v6319, %v6318
  %v6372 = vpack.c.b16 %v6321, %v6320
  %v6373 = vpack.c.b16 %v6323, %v6322
  %v6374 = vpack.c.b16 %v6325, %v6324
  %v6375 = vpack.c.b16 %v6327, %v6326
  %v6376 = vpack.c.b16 %v6329, %v6328
  %v6377 = vpack.c.b16 %v6331, %v6330
  %v6378 = vpack.c.b16 %v6333, %v6332
  %v6379 = vpack.c.b16 %v6335, %v6334
  %v6380 = vpack.c.b16 %v6337, %v6336
  %v6381 = vpack.c.b16 %v6339, %v6338
  %v6382 = vpack.c.b16 %v6341, %v6340
  %v6383 = vpack.c.b16 %v6343, %v6342
  %v6384 = vpack.c.b16 %v6345, %v6344
  %v6385 = vpack.c.b16 %v6347, %v6346
  %v6386 = vpack.c.b16 %v6349, %v6348
  %v6387 = vpack.c.b16 %v6351, %v6350
  %v6388 = vpack.c.b16 %v6353, %v6352
  %v6389 = vpack.c.b16 %v6355, %v6354
  %v6390 = vpack.c.b16 %v6357, %v6356
  %v6391 = vpack.c.b16 %v6359, %v6358
  %6424 = vmatprep.subr.bf16.mxu0 0
  %6425 = vmatpush1.bf16.msra.mxu0 %v6367
  %6426 = vmatprep.subr.bf16.mxu0 0
  %6427 = vmatpush1.bf16.msra.mxu0 %v6366
  %6428 = vmatprep.subr.bf16.mxu0 0
  %6429 = vmatpush1.bf16.msra.mxu0 %v6365
  %6430 = vmatprep.subr.bf16.mxu0 0
  %6431 = vmatpush1.bf16.msra.mxu0 %v6364
  %6432 = vmatprep.subr.bf16.mxu0 0
  %6433 = vmatpush1.bf16.msra.mxu0 %v6363
  %6434 = vmatprep.subr.bf16.mxu0 0
  %6435 = vmatpush1.bf16.msra.mxu0 %v6362
  %6436 = vmatprep.subr.bf16.mxu0 0
  %6437 = vmatpush1.bf16.msra.mxu0 %v6361
  %6438 = vmatprep.subr.bf16.mxu0 0
  %6439 = vmatpush1.bf16.msra.mxu0 %v6360
  %6440 = vmatprep.subr.bf16.mxu0 0
  %6441 = vmatpush2.bf16.msra.mxu0 %v6375
  %6442 = vmatprep.subr.bf16.mxu0 0
  %6443 = vmatpush2.bf16.msra.mxu0 %v6374
  %6444 = vmatprep.subr.bf16.mxu0 0
  %6445 = vmatpush2.bf16.msra.mxu0 %v6373
  %6446 = vmatprep.subr.bf16.mxu0 0
  %6447 = vmatpush2.bf16.msra.mxu0 %v6372
  %6448 = vmatprep.subr.bf16.mxu0 0
  %6449 = vmatpush2.bf16.msra.mxu0 %v6371
  %6450 = vmatprep.subr.bf16.mxu0 0
  %6451 = vmatpush2.bf16.msra.mxu0 %v6370
  %6452 = vmatprep.subr.bf16.mxu0 0
  %6453 = vmatpush2.bf16.msra.mxu0 %v6369
  %6454 = vmatprep.subr.bf16.mxu0 0
  %6455 = vmatpush2.bf16.msra.mxu0 %v6368
  %6456 = vmatprep.mubr.bf16.mxu0 %v6158
  %6457 = vmatmul.mubr.bf16.gmra.mxu0 %v6157
  %v6458 = vpop.f32.mrf.mxu0
  %v6459 = vadd.f32 %v6230, %v6458
  %v6460 = vpop.f32.mrf.mxu0
  %v6461 = vpop.f32.mrf.mxu0
  %v6462 = vpop.f32.mrf.mxu0
  %6463 = vdwg.mxu0
  %6464 = vmatprep.subr.bf16.mxu0 0
  %6465 = vmatpush1.bf16.msra.mxu0 %v6383
  %6466 = vmatprep.subr.bf16.mxu0 0
  %6467 = vmatpush1.bf16.msra.mxu0 %v6382
  %6468 = vmatprep.subr.bf16.mxu0 0
  %6469 = vmatpush1.bf16.msra.mxu0 %v6381
  %6470 = vmatprep.subr.bf16.mxu0 0
  %6471 = vmatpush1.bf16.msra.mxu0 %v6380
  %6472 = vmatprep.subr.bf16.mxu0 0
  %6473 = vmatpush1.bf16.msra.mxu0 %v6379
  %6474 = vmatprep.subr.bf16.mxu0 0
  %6475 = vmatpush1.bf16.msra.mxu0 %v6378
  %6476 = vmatprep.subr.bf16.mxu0 0
  %6477 = vmatpush1.bf16.msra.mxu0 %v6377
  %6478 = vmatprep.subr.bf16.mxu0 0
  %6479 = vmatpush1.bf16.msra.mxu0 %v6376
  %6480 = vmatprep.subr.bf16.mxu0 0
  %6481 = vmatpush2.bf16.msra.mxu0 %v6391
  %6482 = vmatprep.subr.bf16.mxu0 0
  %6483 = vmatpush2.bf16.msra.mxu0 %v6390
  %6484 = vmatprep.subr.bf16.mxu0 0
  %6485 = vmatpush2.bf16.msra.mxu0 %v6389
  %6486 = vmatprep.subr.bf16.mxu0 0
  %6487 = vmatpush2.bf16.msra.mxu0 %v6388
  %6488 = vmatprep.subr.bf16.mxu0 0
  %6489 = vmatpush2.bf16.msra.mxu0 %v6387
  %6490 = vmatprep.subr.bf16.mxu0 0
  %6491 = vmatpush2.bf16.msra.mxu0 %v6386
  %6492 = vmatprep.subr.bf16.mxu0 0
  %6493 = vmatpush2.bf16.msra.mxu0 %v6385
  %6494 = vmatprep.subr.bf16.mxu0 0
  %6495 = vmatpush2.bf16.msra.mxu0 %v6384
  %6496 = vmatprep.mubr.bf16.mxu0 %v6160
  %6497 = vmatmul.mubr.bf16.gmra.mxu0 %v6159
  %v6498 = vpop.f32.mrf.mxu0
  %v6499 = vadd.f32 %v6459, %v6498
  %v6500 = vpop.f32.mrf.mxu0
  %v6501 = vpop.f32.mrf.mxu0
  %v6502 = vpop.f32.mrf.mxu0
  %6503 = vdwg.mxu0
  %6504 = vst [vmem:[%s9] sm:$0xff] %v6499
  // Predicated region
  $region38: #{mnistnet2_forward.1} parent=0 // pred_check
    _
  $region39: #{mnistnet2_forward.1} parent=0 // pred_check_branch
    %6506 = sbr.rel (0) target = $region41
  $region40: #{mnistnet2_forward.1} parent=0 // pred_region
    _
  $region41: #{mnistnet2_forward.1} parent=0 // pred_fallthru
    _
  // Predicated region
  $region42: #{mnistnet2_forward.1} parent=0 // pred_check
    _
  $region43: #{mnistnet2_forward.1} parent=0 // pred_check_branch
    %6508 = sbr.rel (0) target = $region45
  $region44: #{mnistnet2_forward.1} parent=0 // pred_region
    _
  $region45: #{mnistnet2_forward.1} parent=0 // pred_fallthru
    _

</llo_original>
